<compile_context>
chip_gen: v7x
topology: tpu7x:2x2x1
jax: 0.10.0
libtpu: 0.0.40
codegen_flags: <defaults>
</compile_context>

<pallas_src>
import functools

import jax
import jax.numpy as jnp
from jax.experimental import pallas as pl
from jax.experimental.pallas import tpu as pltpu

# ----------------------------- configuration ------------------------------- #
B = 2          # batch
S_SRC = 8      # source sequence length
T_TGT = 8      # target sequence length (teacher-forced decode steps)
E_SRC = 32     # source embedding size
E_TGT = 32     # target embedding size
H = 32         # GRU hidden size
V_SRC = 50     # source vocab size
V_TGT = 60     # target vocab size
V_PAD = 128    # lane-dense padded vocab width for the output projection

_VMEM = pl.BlockSpec(memory_space=pltpu.MemorySpace.VMEM)


# ------------------------------- fused kernel ------------------------------- #
def seq2seq_kernel(src_ref, tgt_ref, mask_ref,
                   e_wih_ref, e_whh_ref, e_bih_ref, e_bhh_ref,
                   d_wih_ref, d_whh_ref, d_bih_ref, d_bhh_ref,
                   wa_t_ref, wc_h_ref, wc_c_ref, wo_ref, bo_ref,
                   logits_ref,
                   e_gi_ref, d_gi_ref, enc_ref, dec_ref):
    """Whole seq2seq forward: encoder GRU + decoder GRU + attention + vocab proj.

    src_ref  : [S*B, E_SRC]   time-major flattened source embeddings (row = t*B + b)
    tgt_ref  : [T*B, E_TGT]   time-major flattened target embeddings (teacher forcing)
    mask_ref : [B, S]         additive attention mask (0 valid / -1e9 pad)
    *_wih    : [in, 3H]       gate-fused GRU input weights   (columns: r | z | n)
    *_whh    : [H, 3H]        gate-fused GRU recurrent weights
    *_bih/bhh: [1, 3H]
    wa_t_ref : [H, H]         attention matrix, pre-transposed (Wa^T)
    wc_h/wc_c: [H, H]         combine projections;  wo/bo: [H, V_PAD] / [1, V_PAD]
    logits_ref (out): [B*T, V_PAD]   batch-major rows (row = b*T + t)
    scratch: e_gi [S*B,3H], d_gi [T*B,3H], enc [S,B,H], dec [T,B,H]
    """
    S, Bn, Hh = enc_ref.shape
    T = dec_ref.shape[0]
    H2 = 2 * Hh

    def mm(a, b):
        return jnp.dot(a, b, preferred_element_type=jnp.float32)

    # ---- batched, gate-fused input->hidden pre-pass: ONE MXU matmul per RNN ----
    e_gi_ref[...] = mm(src_ref[...], e_wih_ref[...]) + e_bih_ref[...]     # [S*B, 3H]
    d_gi_ref[...] = mm(tgt_ref[...], d_wih_ref[...]) + d_bih_ref[...]     # [T*B, 3H]

    # hoisted recurrent (hidden->hidden) weights -- single fused matrix per RNN
    e_whh = e_whh_ref[...]
    e_bhh = e_bhh_ref[...]
    d_whh = d_whh_ref[...]
    d_bhh = d_bhh_ref[...]

    def gru_step(h, gi, whh, bhh):
        # PyTorch GRUCell semantics; gates fused as columns [r | z | n].
        gh = mm(h, whh) + bhh                                  # [B, 3H] single MXU push
        rz = jax.nn.sigmoid(gi[:, :H2] + gh[:, :H2])           # one EUP pass for r and z
        r = rz[:, :Hh]
        z = rz[:, Hh:]
        n = jnp.tanh(gi[:, H2:] + r * gh[:, H2:])              # b_hn inside gh -> r*(Whn h + bhn)
        return (1.0 - z) * n + z * h

    # ---- encoder recurrence: only h @ W_hh sits on the serial critical path ----
    h = jnp.zeros((Bn, Hh), jnp.float32)
    for t in range(S):
        h = gru_step(h, e_gi_ref[pl.ds(t * Bn, Bn), :], e_whh, e_bhh)
        enc_ref[t] = h

    # ---- decoder recurrence (teacher forcing: all inputs known up front) ----
    for t in range(T):
        h = gru_step(h, d_gi_ref[pl.ds(t * Bn, Bn), :], d_whh, d_bhh)
        dec_ref[t] = h

    # ---- epilogue: per-b scores/softmax/context, then batched combine + vocab ----
    enc_all = enc_ref[...]                 # [S, B, H]
    dec_all = dec_ref[...]                 # [T, B, H]
    mask = mask_ref[...]                   # [B, S]
    wa_t = wa_t_ref[...]

    dec_bs = []
    ctx_bs = []
    for b in range(Bn):                    # B is tiny & static: plain 2D MXU matmuls
        dec_b = dec_all[:, b, :]           # [T, H]
        enc_b = enc_all[:, b, :]           # [S, H]
        encp_b = mm(enc_b, wa_t)           # attention keys (hoisted off the recurrence)
        # scores[t, s] = dec_b[t] . encp_b[s]   (MXU, A @ B^T)
        scores = jax.lax.dot_general(dec_b, encp_b, (((1,), (1,)), ((), ())),
                                     preferred_element_type=jnp.float32)   # [T, S]
        scores = scores + mask[b:b + 1, :]
        e = jnp.exp(scores - jnp.max(scores, axis=-1, keepdims=True))
        attn = e * pl.reciprocal(jnp.sum(e, axis=-1, keepdims=True), approx=True)
        ctx_bs.append(mm(attn, enc_b))                                      # [T, H]
        dec_bs.append(dec_b)

    dec_flat = jnp.concatenate(dec_bs, axis=0)                              # [B*T, H]
    ctx_flat = jnp.concatenate(ctx_bs, axis=0)                              # [B*T, H]
    attn_h = jnp.tanh(mm(dec_flat, wc_h_ref[...]) + mm(ctx_flat, wc_c_ref[...]))
    # single lane-dense [B*T, 128] store (unmasked vst)
    logits_ref[...] = (mm(attn_h, wo_ref[...]) + bo_ref[...]).astype(logits_ref.dtype)


# ------------------------------ parameters ---------------------------------- #
def init_params(key):
    def uni(k, shape):
        return jax.random.uniform(k, shape, jnp.float32, -0.08, 0.08)

    ks = jax.random.split(key, 16)
    return {
        # embeddings
        "emb_src": uni(ks[0], (V_SRC, E_SRC)),
        "emb_tgt": uni(ks[1], (V_TGT, E_TGT)),
        # encoder GRU, gate-fused layout (columns: r | z | n)
        "e_wih": uni(ks[2], (E_SRC, 3 * H)),
        "e_whh": uni(ks[3], (H, 3 * H)),
        "e_bih": uni(ks[4], (1, 3 * H)),
        "e_bhh": uni(ks[5], (1, 3 * H)),
        # decoder GRU
        "d_wih": uni(ks[6], (E_TGT, 3 * H)),
        "d_whh": uni(ks[7], (H, 3 * H)),
        "d_bih": uni(ks[8], (1, 3 * H)),
        "d_bhh": uni(ks[9], (1, 3 * H)),
        # attention + combine + output projection
        "wa":   uni(ks[10], (H, H)),
        "wc_h": uni(ks[11], (H, H)),
        "wc_c": uni(ks[12], (H, H)),
        "wo":   uni(ks[13], (H, V_TGT)),
        "bo":   uni(ks[14], (1, V_TGT)),
    }


# ------------------------------- forward ------------------------------------ #
@functools.partial(jax.jit, static_argnames=("teacher_forcing",))
def model_forward(params, src_batch, tgt_batch, len_src_batch, len_tgt_batch,
                  teacher_forcing=1.0):
    # one-time embedding gathers, time-major flatten (row = t * B + b)
    src_emb = jnp.take(params["emb_src"], src_batch.T, axis=0).reshape(S_SRC * B, E_SRC)
    tgt_emb = jnp.take(params["emb_tgt"], tgt_batch.T, axis=0).reshape(T_TGT * B, E_TGT)

    # additive attention mask from source lengths: 0 for valid, -1e9 for pad
    pos = jnp.arange(S_SRC)[None, :]
    mask = jnp.where(pos < len_src_batch[:, None], 0.0, -1e9).astype(jnp.float32)

    # lane-dense vocab projection (padded columns are sliced away before argmax)
    wo_pad = jnp.pad(params["wo"], ((0, 0), (0, V_PAD - V_TGT)))
    bo_pad = jnp.pad(params["bo"], ((0, 0), (0, V_PAD - V_TGT)))

    logits_pad = pl.pallas_call(
        seq2seq_kernel,
        out_shape=jax.ShapeDtypeStruct((B * T_TGT, V_PAD), jnp.float32),
        in_specs=[_VMEM] * 16,
        out_specs=_VMEM,
        scratch_shapes=[pltpu.VMEM((S_SRC * B, 3 * H), jnp.float32),   # encoder gate pre-acts
                        pltpu.VMEM((T_TGT * B, 3 * H), jnp.float32),   # decoder gate pre-acts
                        pltpu.VMEM((S_SRC, B, H), jnp.float32),        # encoder outputs
                        pltpu.VMEM((T_TGT, B, H), jnp.float32)],       # decoder hiddens
    )(src_emb, tgt_emb, mask,
      params["e_wih"], params["e_whh"], params["e_bih"], params["e_bhh"],
      params["d_wih"], params["d_whh"], params["d_bih"], params["d_bhh"],
      params["wa"].T, params["wc_h"], params["wc_c"], wo_pad, bo_pad)

    # [B*T, V_PAD] (batch-major rows) -> [T, B, V_TGT]
    dec_outputs = jnp.transpose(logits_pad.reshape(B, T_TGT, V_PAD), (1, 0, 2))[:, :, :V_TGT]
    dec_output_words = jnp.argmax(dec_outputs, axis=-1)               # [T, B]
    return dec_outputs, dec_output_words


# --------------------------------- main -------------------------------------- #
if __name__ == "__main__":
    key = jax.random.PRNGKey(0)
    k_params, k_src, k_tgt = jax.random.split(key, 3)

    params = init_params(k_params)
    src_batch = jax.random.randint(k_src, (B, S_SRC), 0, V_SRC, dtype=jnp.int32)
    tgt_batch = jax.random.randint(k_tgt, (B, T_TGT), 0, V_TGT, dtype=jnp.int32)
    len_src_batch = jnp.array([S_SRC, 5], dtype=jnp.int32)
    len_tgt_batch = jnp.array([T_TGT, 6], dtype=jnp.int32)

    dec_outputs, dec_output_words = model_forward(
        params, src_batch, tgt_batch, len_src_batch, len_tgt_batch, teacher_forcing=1.0)
    jax.block_until_ready((dec_outputs, dec_output_words))

    assert dec_outputs.shape == (T_TGT, B, V_TGT)
    assert dec_output_words.shape == (T_TGT, B)
    assert bool(jnp.all(jnp.isfinite(dec_outputs)))
    print("KERNEL_OK")
</pallas_src>

<mosaic_0001>
module attributes {stable_mosaic.version = 11 : i64} {
  func.func @seq2seq_kernel(%arg0: memref<16x32xf32, #tpu.memory_space<vmem>>, %arg1: memref<16x32xf32, #tpu.memory_space<vmem>>, %arg2: memref<2x8xf32, #tpu.memory_space<vmem>>, %arg3: memref<32x96xf32, #tpu.memory_space<vmem>>, %arg4: memref<32x96xf32, #tpu.memory_space<vmem>>, %arg5: memref<1x96xf32, #tpu.memory_space<vmem>>, %arg6: memref<1x96xf32, #tpu.memory_space<vmem>>, %arg7: memref<32x96xf32, #tpu.memory_space<vmem>>, %arg8: memref<32x96xf32, #tpu.memory_space<vmem>>, %arg9: memref<1x96xf32, #tpu.memory_space<vmem>>, %arg10: memref<1x96xf32, #tpu.memory_space<vmem>>, %arg11: memref<32x32xf32, #tpu.memory_space<vmem>>, %arg12: memref<32x32xf32, #tpu.memory_space<vmem>>, %arg13: memref<32x32xf32, #tpu.memory_space<vmem>>, %arg14: memref<32x128xf32, #tpu.memory_space<vmem>>, %arg15: memref<1x128xf32, #tpu.memory_space<vmem>>, %arg16: memref<16x128xf32, #tpu.memory_space<vmem>>, %arg17: memref<16x96xf32, #tpu.memory_space<vmem>>, %arg18: memref<16x96xf32, #tpu.memory_space<vmem>>, %arg19: memref<8x2x32xf32, #tpu.memory_space<vmem>>, %arg20: memref<8x2x32xf32, #tpu.memory_space<vmem>>) attributes {dimension_semantics = [], scalar_prefetch = 0 : i64, scratch_operands = 4 : i64, tpu.core_type = #tpu.core_type<tc>} {
    %c0 = arith.constant 0 : index
    %c0_0 = arith.constant 0 : index
    %0 = vector.load %arg0[%c0, %c0_0] : memref<16x32xf32, #tpu.memory_space<vmem>>, vector<16x32xf32>
    %c0_1 = arith.constant 0 : index
    %c0_2 = arith.constant 0 : index
    %1 = vector.load %arg3[%c0_1, %c0_2] : memref<32x96xf32, #tpu.memory_space<vmem>>, vector<32x96xf32>
    %cst = arith.constant dense<0.000000e+00> : vector<16x96xf32>
    %2 = tpu.matmul %0, %1, %cst {dimension_numbers = #tpu.dot_dimension_numbers<[1], [0], [0], [1], [0, 0, 1, 1], [], []>} : vector<16x32xf32>, vector<32x96xf32>, vector<16x96xf32> -> vector<16x96xf32>
    %c0_3 = arith.constant 0 : index
    %c0_4 = arith.constant 0 : index
    %3 = vector.load %arg5[%c0_3, %c0_4] : memref<1x96xf32, #tpu.memory_space<vmem>>, vector<1x96xf32>
    %4 = vector.broadcast %3 : vector<1x96xf32> to vector<16x96xf32>
    %5 = arith.addf %2, %4 : vector<16x96xf32>
    %c0_5 = arith.constant 0 : index
    %c0_6 = arith.constant 0 : index
    %6 = vector.load %arg17[%c0_5, %c0_6] : memref<16x96xf32, #tpu.memory_space<vmem>>, vector<16x96xf32>
    tpu.vector_store %arg17[%c0_5, %c0_6], %5 {strides = array<i32>} : memref<16x96xf32, #tpu.memory_space<vmem>>, vector<16x96xf32>,
    %c0_7 = arith.constant 0 : index
    %c0_8 = arith.constant 0 : index
    %7 = vector.load %arg1[%c0_7, %c0_8] : memref<16x32xf32, #tpu.memory_space<vmem>>, vector<16x32xf32>
    %c0_9 = arith.constant 0 : index
    %c0_10 = arith.constant 0 : index
    %8 = vector.load %arg7[%c0_9, %c0_10] : memref<32x96xf32, #tpu.memory_space<vmem>>, vector<32x96xf32>
    %cst_11 = arith.constant dense<0.000000e+00> : vector<16x96xf32>
    %9 = tpu.matmul %7, %8, %cst_11 {dimension_numbers = #tpu.dot_dimension_numbers<[1], [0], [0], [1], [0, 0, 1, 1], [], []>} : vector<16x32xf32>, vector<32x96xf32>, vector<16x96xf32> -> vector<16x96xf32>
    %c0_12 = arith.constant 0 : index
    %c0_13 = arith.constant 0 : index
    %10 = vector.load %arg9[%c0_12, %c0_13] : memref<1x96xf32, #tpu.memory_space<vmem>>, vector<1x96xf32>
    %11 = vector.broadcast %10 : vector<1x96xf32> to vector<16x96xf32>
    %12 = arith.addf %9, %11 : vector<16x96xf32>
    %c0_14 = arith.constant 0 : index
    %c0_15 = arith.constant 0 : index
    %13 = vector.load %arg18[%c0_14, %c0_15] : memref<16x96xf32, #tpu.memory_space<vmem>>, vector<16x96xf32>
    tpu.vector_store %arg18[%c0_14, %c0_15], %12 {strides = array<i32>} : memref<16x96xf32, #tpu.memory_space<vmem>>, vector<16x96xf32>,
    %c0_16 = arith.constant 0 : index
    %c0_17 = arith.constant 0 : index
    %14 = vector.load %arg4[%c0_16, %c0_17] : memref<32x96xf32, #tpu.memory_space<vmem>>, vector<32x96xf32>
    %c0_18 = arith.constant 0 : index
    %c0_19 = arith.constant 0 : index
    %15 = vector.load %arg6[%c0_18, %c0_19] : memref<1x96xf32, #tpu.memory_space<vmem>>, vector<1x96xf32>
    %c0_20 = arith.constant 0 : index
    %c0_21 = arith.constant 0 : index
    %16 = vector.load %arg8[%c0_20, %c0_21] : memref<32x96xf32, #tpu.memory_space<vmem>>, vector<32x96xf32>
    %c0_22 = arith.constant 0 : index
    %c0_23 = arith.constant 0 : index
    %17 = vector.load %arg10[%c0_22, %c0_23] : memref<1x96xf32, #tpu.memory_space<vmem>>, vector<1x96xf32>
    %cst_24 = arith.constant 0.000000e+00 : f32
    %18 = vector.broadcast %cst_24 : f32 to vector<2x32xf32>
    %c0_25 = arith.constant 0 : index
    %c0_26 = arith.constant 0 : index
    %19 = vector.load %arg17[%c0_25, %c0_26] : memref<16x96xf32, #tpu.memory_space<vmem>>, vector<2x96xf32>
    %cst_27 = arith.constant dense<0.000000e+00> : vector<2x96xf32>
    %20 = tpu.matmul %18, %14, %cst_27 {dimension_numbers = #tpu.dot_dimension_numbers<[1], [0], [0], [1], [0, 0, 1, 1], [], []>} : vector<2x32xf32>, vector<32x96xf32>, vector<2x96xf32> -> vector<2x96xf32>
    %21 = vector.broadcast %15 : vector<1x96xf32> to vector<2x96xf32>
    %22 = arith.addf %20, %21 : vector<2x96xf32>
    %23 = vector.extract_strided_slice %19 {offsets = [0, 0], sizes = [2, 64], strides = [1, 1]} : vector<2x96xf32> to vector<2x64xf32>
    %24 = vector.extract_strided_slice %22 {offsets = [0, 0], sizes = [2, 64], strides = [1, 1]} : vector<2x96xf32> to vector<2x64xf32>
    %25 = arith.addf %23, %24 : vector<2x64xf32>
    %26 = arith.negf %25 : vector<2x64xf32>
    %27 = math.exp %26 : vector<2x64xf32>
    %cst_28 = arith.constant 1.000000e+00 : f32
    %28 = vector.broadcast %cst_28 : f32 to vector<2x64xf32>
    %29 = arith.addf %28, %27 : vector<2x64xf32>
    %30 = arith.divf %28, %29 : vector<2x64xf32>
    %31 = vector.extract_strided_slice %30 {offsets = [0, 0], sizes = [2, 32], strides = [1, 1]} : vector<2x64xf32> to vector<2x32xf32>
    %32 = vector.extract_strided_slice %30 {offsets = [0, 32], sizes = [2, 32], strides = [1, 1]} : vector<2x64xf32> to vector<2x32xf32>
    %33 = vector.extract_strided_slice %19 {offsets = [0, 64], sizes = [2, 32], strides = [1, 1]} : vector<2x96xf32> to vector<2x32xf32>
    %34 = vector.extract_strided_slice %22 {offsets = [0, 64], sizes = [2, 32], strides = [1, 1]} : vector<2x96xf32> to vector<2x32xf32>
    %35 = arith.mulf %31, %34 : vector<2x32xf32>
    %36 = arith.addf %33, %35 : vector<2x32xf32>
    %37 = math.tanh %36 : vector<2x32xf32>
    %cst_29 = arith.constant 1.000000e+00 : f32
    %38 = vector.broadcast %cst_29 : f32 to vector<2x32xf32>
    %39 = arith.subf %38, %32 : vector<2x32xf32>
    %40 = arith.mulf %39, %37 : vector<2x32xf32>
    %41 = arith.mulf %32, %18 : vector<2x32xf32>
    %42 = arith.addf %40, %41 : vector<2x32xf32>
    %c0_30 = arith.constant 0 : index
    %c0_31 = arith.constant 0 : index
    %c0_32 = arith.constant 0 : index
    %43 = vector.load %arg19[%c0_30, %c0_31, %c0_32] : memref<8x2x32xf32, #tpu.memory_space<vmem>>, vector<1x2x32xf32>
    %44 = vector.shape_cast %43 : vector<1x2x32xf32> to vector<2x32xf32>
    %45 = vector.shape_cast %42 : vector<2x32xf32> to vector<1x2x32xf32>
    tpu.vector_store %arg19[%c0_30, %c0_31, %c0_32], %45 {strides = array<i32>} : memref<8x2x32xf32, #tpu.memory_space<vmem>>, vector<1x2x32xf32>,
    %c2 = arith.constant 2 : index
    %c0_33 = arith.constant 0 : index
    %46 = vector.load %arg17[%c2, %c0_33] : memref<16x96xf32, #tpu.memory_space<vmem>>, vector<2x96xf32>
    %cst_34 = arith.constant dense<0.000000e+00> : vector<2x96xf32>
    %47 = tpu.matmul %42, %14, %cst_34 {dimension_numbers = #tpu.dot_dimension_numbers<[1], [0], [0], [1], [0, 0, 1, 1], [], []>} : vector<2x32xf32>, vector<32x96xf32>, vector<2x96xf32> -> vector<2x96xf32>
    %48 = vector.broadcast %15 : vector<1x96xf32> to vector<2x96xf32>
    %49 = arith.addf %47, %48 : vector<2x96xf32>
    %50 = vector.extract_strided_slice %46 {offsets = [0, 0], sizes = [2, 64], strides = [1, 1]} : vector<2x96xf32> to vector<2x64xf32>
    %51 = vector.extract_strided_slice %49 {offsets = [0, 0], sizes = [2, 64], strides = [1, 1]} : vector<2x96xf32> to vector<2x64xf32>
    %52 = arith.addf %50, %51 : vector<2x64xf32>
    %53 = arith.negf %52 : vector<2x64xf32>
    %54 = math.exp %53 : vector<2x64xf32>
    %cst_35 = arith.constant 1.000000e+00 : f32
    %55 = vector.broadcast %cst_35 : f32 to vector<2x64xf32>
    %56 = arith.addf %55, %54 : vector<2x64xf32>
    %57 = arith.divf %55, %56 : vector<2x64xf32>
    %58 = vector.extract_strided_slice %57 {offsets = [0, 0], sizes = [2, 32], strides = [1, 1]} : vector<2x64xf32> to vector<2x32xf32>
    %59 = vector.extract_strided_slice %57 {offsets = [0, 32], sizes = [2, 32], strides = [1, 1]} : vector<2x64xf32> to vector<2x32xf32>
    %60 = vector.extract_strided_slice %46 {offsets = [0, 64], sizes = [2, 32], strides = [1, 1]} : vector<2x96xf32> to vector<2x32xf32>
    %61 = vector.extract_strided_slice %49 {offsets = [0, 64], sizes = [2, 32], strides = [1, 1]} : vector<2x96xf32> to vector<2x32xf32>
    %62 = arith.mulf %58, %61 : vector<2x32xf32>
    %63 = arith.addf %60, %62 : vector<2x32xf32>
    %64 = math.tanh %63 : vector<2x32xf32>
    %cst_36 = arith.constant 1.000000e+00 : f32
    %65 = vector.broadcast %cst_36 : f32 to vector<2x32xf32>
    %66 = arith.subf %65, %59 : vector<2x32xf32>
    %67 = arith.mulf %66, %64 : vector<2x32xf32>
    %68 = arith.mulf %59, %42 : vector<2x32xf32>
    %69 = arith.addf %67, %68 : vector<2x32xf32>
    %c1 = arith.constant 1 : index
    %c0_37 = arith.constant 0 : index
    %c0_38 = arith.constant 0 : index
    %70 = vector.load %arg19[%c1, %c0_37, %c0_38] : memref<8x2x32xf32, #tpu.memory_space<vmem>>, vector<1x2x32xf32>
    %71 = vector.shape_cast %70 : vector<1x2x32xf32> to vector<2x32xf32>
    %72 = vector.shape_cast %69 : vector<2x32xf32> to vector<1x2x32xf32>
    tpu.vector_store %arg19[%c1, %c0_37, %c0_38], %72 {strides = array<i32>} : memref<8x2x32xf32, #tpu.memory_space<vmem>>, vector<1x2x32xf32>,
    %c4 = arith.constant 4 : index
    %c0_39 = arith.constant 0 : index
    %73 = vector.load %arg17[%c4, %c0_39] : memref<16x96xf32, #tpu.memory_space<vmem>>, vector<2x96xf32>
    %cst_40 = arith.constant dense<0.000000e+00> : vector<2x96xf32>
    %74 = tpu.matmul %69, %14, %cst_40 {dimension_numbers = #tpu.dot_dimension_numbers<[1], [0], [0], [1], [0, 0, 1, 1], [], []>} : vector<2x32xf32>, vector<32x96xf32>, vector<2x96xf32> -> vector<2x96xf32>
    %75 = vector.broadcast %15 : vector<1x96xf32> to vector<2x96xf32>
    %76 = arith.addf %74, %75 : vector<2x96xf32>
    %77 = vector.extract_strided_slice %73 {offsets = [0, 0], sizes = [2, 64], strides = [1, 1]} : vector<2x96xf32> to vector<2x64xf32>
    %78 = vector.extract_strided_slice %76 {offsets = [0, 0], sizes = [2, 64], strides = [1, 1]} : vector<2x96xf32> to vector<2x64xf32>
    %79 = arith.addf %77, %78 : vector<2x64xf32>
    %80 = arith.negf %79 : vector<2x64xf32>
    %81 = math.exp %80 : vector<2x64xf32>
    %cst_41 = arith.constant 1.000000e+00 : f32
    %82 = vector.broadcast %cst_41 : f32 to vector<2x64xf32>
    %83 = arith.addf %82, %81 : vector<2x64xf32>
    %84 = arith.divf %82, %83 : vector<2x64xf32>
    %85 = vector.extract_strided_slice %84 {offsets = [0, 0], sizes = [2, 32], strides = [1, 1]} : vector<2x64xf32> to vector<2x32xf32>
    %86 = vector.extract_strided_slice %84 {offsets = [0, 32], sizes = [2, 32], strides = [1, 1]} : vector<2x64xf32> to vector<2x32xf32>
    %87 = vector.extract_strided_slice %73 {offsets = [0, 64], sizes = [2, 32], strides = [1, 1]} : vector<2x96xf32> to vector<2x32xf32>
    %88 = vector.extract_strided_slice %76 {offsets = [0, 64], sizes = [2, 32], strides = [1, 1]} : vector<2x96xf32> to vector<2x32xf32>
    %89 = arith.mulf %85, %88 : vector<2x32xf32>
    %90 = arith.addf %87, %89 : vector<2x32xf32>
    %91 = math.tanh %90 : vector<2x32xf32>
    %cst_42 = arith.constant 1.000000e+00 : f32
    %92 = vector.broadcast %cst_42 : f32 to vector<2x32xf32>
    %93 = arith.subf %92, %86 : vector<2x32xf32>
    %94 = arith.mulf %93, %91 : vector<2x32xf32>
    %95 = arith.mulf %86, %69 : vector<2x32xf32>
    %96 = arith.addf %94, %95 : vector<2x32xf32>
    %c2_43 = arith.constant 2 : index
    %c0_44 = arith.constant 0 : index
    %c0_45 = arith.constant 0 : index
    %97 = vector.load %arg19[%c2_43, %c0_44, %c0_45] : memref<8x2x32xf32, #tpu.memory_space<vmem>>, vector<1x2x32xf32>
    %98 = vector.shape_cast %97 : vector<1x2x32xf32> to vector<2x32xf32>
    %99 = vector.shape_cast %96 : vector<2x32xf32> to vector<1x2x32xf32>
    tpu.vector_store %arg19[%c2_43, %c0_44, %c0_45], %99 {strides = array<i32>} : memref<8x2x32xf32, #tpu.memory_space<vmem>>, vector<1x2x32xf32>,
    %c6 = arith.constant 6 : index
    %c0_46 = arith.constant 0 : index
    %100 = vector.load %arg17[%c6, %c0_46] : memref<16x96xf32, #tpu.memory_space<vmem>>, vector<2x96xf32>
    %cst_47 = arith.constant dense<0.000000e+00> : vector<2x96xf32>
    %101 = tpu.matmul %96, %14, %cst_47 {dimension_numbers = #tpu.dot_dimension_numbers<[1], [0], [0], [1], [0, 0, 1, 1], [], []>} : vector<2x32xf32>, vector<32x96xf32>, vector<2x96xf32> -> vector<2x96xf32>
    %102 = vector.broadcast %15 : vector<1x96xf32> to vector<2x96xf32>
    %103 = arith.addf %101, %102 : vector<2x96xf32>
    %104 = vector.extract_strided_slice %100 {offsets = [0, 0], sizes = [2, 64], strides = [1, 1]} : vector<2x96xf32> to vector<2x64xf32>
    %105 = vector.extract_strided_slice %103 {offsets = [0, 0], sizes = [2, 64], strides = [1, 1]} : vector<2x96xf32> to vector<2x64xf32>
    %106 = arith.addf %104, %105 : vector<2x64xf32>
    %107 = arith.negf %106 : vector<2x64xf32>
    %108 = math.exp %107 : vector<2x64xf32>
    %cst_48 = arith.constant 1.000000e+00 : f32
    %109 = vector.broadcast %cst_48 : f32 to vector<2x64xf32>
    %110 = arith.addf %109, %108 : vector<2x64xf32>
    %111 = arith.divf %109, %110 : vector<2x64xf32>
    %112 = vector.extract_strided_slice %111 {offsets = [0, 0], sizes = [2, 32], strides = [1, 1]} : vector<2x64xf32> to vector<2x32xf32>
    %113 = vector.extract_strided_slice %111 {offsets = [0, 32], sizes = [2, 32], strides = [1, 1]} : vector<2x64xf32> to vector<2x32xf32>
    %114 = vector.extract_strided_slice %100 {offsets = [0, 64], sizes = [2, 32], strides = [1, 1]} : vector<2x96xf32> to vector<2x32xf32>
    %115 = vector.extract_strided_slice %103 {offsets = [0, 64], sizes = [2, 32], strides = [1, 1]} : vector<2x96xf32> to vector<2x32xf32>
    %116 = arith.mulf %112, %115 : vector<2x32xf32>
    %117 = arith.addf %114, %116 : vector<2x32xf32>
    %118 = math.tanh %117 : vector<2x32xf32>
    %cst_49 = arith.constant 1.000000e+00 : f32
    %119 = vector.broadcast %cst_49 : f32 to vector<2x32xf32>
    %120 = arith.subf %119, %113 : vector<2x32xf32>
    %121 = arith.mulf %120, %118 : vector<2x32xf32>
    %122 = arith.mulf %113, %96 : vector<2x32xf32>
    %123 = arith.addf %121, %122 : vector<2x32xf32>
    %c3 = arith.constant 3 : index
    %c0_50 = arith.constant 0 : index
    %c0_51 = arith.constant 0 : index
    %124 = vector.load %arg19[%c3, %c0_50, %c0_51] : memref<8x2x32xf32, #tpu.memory_space<vmem>>, vector<1x2x32xf32>
    %125 = vector.shape_cast %124 : vector<1x2x32xf32> to vector<2x32xf32>
    %126 = vector.shape_cast %123 : vector<2x32xf32> to vector<1x2x32xf32>
    tpu.vector_store %arg19[%c3, %c0_50, %c0_51], %126 {strides = array<i32>} : memref<8x2x32xf32, #tpu.memory_space<vmem>>, vector<1x2x32xf32>,
    %c8 = arith.constant 8 : index
    %c0_52 = arith.constant 0 : index
    %127 = vector.load %arg17[%c8, %c0_52] : memref<16x96xf32, #tpu.memory_space<vmem>>, vector<2x96xf32>
    %cst_53 = arith.constant dense<0.000000e+00> : vector<2x96xf32>
    %128 = tpu.matmul %123, %14, %cst_53 {dimension_numbers = #tpu.dot_dimension_numbers<[1], [0], [0], [1], [0, 0, 1, 1], [], []>} : vector<2x32xf32>, vector<32x96xf32>, vector<2x96xf32> -> vector<2x96xf32>
    %129 = vector.broadcast %15 : vector<1x96xf32> to vector<2x96xf32>
    %130 = arith.addf %128, %129 : vector<2x96xf32>
    %131 = vector.extract_strided_slice %127 {offsets = [0, 0], sizes = [2, 64], strides = [1, 1]} : vector<2x96xf32> to vector<2x64xf32>
    %132 = vector.extract_strided_slice %130 {offsets = [0, 0], sizes = [2, 64], strides = [1, 1]} : vector<2x96xf32> to vector<2x64xf32>
    %133 = arith.addf %131, %132 : vector<2x64xf32>
    %134 = arith.negf %133 : vector<2x64xf32>
    %135 = math.exp %134 : vector<2x64xf32>
    %cst_54 = arith.constant 1.000000e+00 : f32
    %136 = vector.broadcast %cst_54 : f32 to vector<2x64xf32>
    %137 = arith.addf %136, %135 : vector<2x64xf32>
    %138 = arith.divf %136, %137 : vector<2x64xf32>
    %139 = vector.extract_strided_slice %138 {offsets = [0, 0], sizes = [2, 32], strides = [1, 1]} : vector<2x64xf32> to vector<2x32xf32>
    %140 = vector.extract_strided_slice %138 {offsets = [0, 32], sizes = [2, 32], strides = [1, 1]} : vector<2x64xf32> to vector<2x32xf32>
    %141 = vector.extract_strided_slice %127 {offsets = [0, 64], sizes = [2, 32], strides = [1, 1]} : vector<2x96xf32> to vector<2x32xf32>
    %142 = vector.extract_strided_slice %130 {offsets = [0, 64], sizes = [2, 32], strides = [1, 1]} : vector<2x96xf32> to vector<2x32xf32>
    %143 = arith.mulf %139, %142 : vector<2x32xf32>
    %144 = arith.addf %141, %143 : vector<2x32xf32>
    %145 = math.tanh %144 : vector<2x32xf32>
    %cst_55 = arith.constant 1.000000e+00 : f32
    %146 = vector.broadcast %cst_55 : f32 to vector<2x32xf32>
    %147 = arith.subf %146, %140 : vector<2x32xf32>
    %148 = arith.mulf %147, %145 : vector<2x32xf32>
    %149 = arith.mulf %140, %123 : vector<2x32xf32>
    %150 = arith.addf %148, %149 : vector<2x32xf32>
    %c4_56 = arith.constant 4 : index
    %c0_57 = arith.constant 0 : index
    %c0_58 = arith.constant 0 : index
    %151 = vector.load %arg19[%c4_56, %c0_57, %c0_58] : memref<8x2x32xf32, #tpu.memory_space<vmem>>, vector<1x2x32xf32>
    %152 = vector.shape_cast %151 : vector<1x2x32xf32> to vector<2x32xf32>
    %153 = vector.shape_cast %150 : vector<2x32xf32> to vector<1x2x32xf32>
    tpu.vector_store %arg19[%c4_56, %c0_57, %c0_58], %153 {strides = array<i32>} : memref<8x2x32xf32, #tpu.memory_space<vmem>>, vector<1x2x32xf32>,
    %c10 = arith.constant 10 : index
    %c0_59 = arith.constant 0 : index
    %154 = vector.load %arg17[%c10, %c0_59] : memref<16x96xf32, #tpu.memory_space<vmem>>, vector<2x96xf32>
    %cst_60 = arith.constant dense<0.000000e+00> : vector<2x96xf32>
    %155 = tpu.matmul %150, %14, %cst_60 {dimension_numbers = #tpu.dot_dimension_numbers<[1], [0], [0], [1], [0, 0, 1, 1], [], []>} : vector<2x32xf32>, vector<32x96xf32>, vector<2x96xf32> -> vector<2x96xf32>
    %156 = vector.broadcast %15 : vector<1x96xf32> to vector<2x96xf32>
    %157 = arith.addf %155, %156 : vector<2x96xf32>
    %158 = vector.extract_strided_slice %154 {offsets = [0, 0], sizes = [2, 64], strides = [1, 1]} : vector<2x96xf32> to vector<2x64xf32>
    %159 = vector.extract_strided_slice %157 {offsets = [0, 0], sizes = [2, 64], strides = [1, 1]} : vector<2x96xf32> to vector<2x64xf32>
    %160 = arith.addf %158, %159 : vector<2x64xf32>
    %161 = arith.negf %160 : vector<2x64xf32>
    %162 = math.exp %161 : vector<2x64xf32>
    %cst_61 = arith.constant 1.000000e+00 : f32
    %163 = vector.broadcast %cst_61 : f32 to vector<2x64xf32>
    %164 = arith.addf %163, %162 : vector<2x64xf32>
    %165 = arith.divf %163, %164 : vector<2x64xf32>
    %166 = vector.extract_strided_slice %165 {offsets = [0, 0], sizes = [2, 32], strides = [1, 1]} : vector<2x64xf32> to vector<2x32xf32>
    %167 = vector.extract_strided_slice %165 {offsets = [0, 32], sizes = [2, 32], strides = [1, 1]} : vector<2x64xf32> to vector<2x32xf32>
    %168 = vector.extract_strided_slice %154 {offsets = [0, 64], sizes = [2, 32], strides = [1, 1]} : vector<2x96xf32> to vector<2x32xf32>
    %169 = vector.extract_strided_slice %157 {offsets = [0, 64], sizes = [2, 32], strides = [1, 1]} : vector<2x96xf32> to vector<2x32xf32>
    %170 = arith.mulf %166, %169 : vector<2x32xf32>
    %171 = arith.addf %168, %170 : vector<2x32xf32>
    %172 = math.tanh %171 : vector<2x32xf32>
    %cst_62 = arith.constant 1.000000e+00 : f32
    %173 = vector.broadcast %cst_62 : f32 to vector<2x32xf32>
    %174 = arith.subf %173, %167 : vector<2x32xf32>
    %175 = arith.mulf %174, %172 : vector<2x32xf32>
    %176 = arith.mulf %167, %150 : vector<2x32xf32>
    %177 = arith.addf %175, %176 : vector<2x32xf32>
    %c5 = arith.constant 5 : index
    %c0_63 = arith.constant 0 : index
    %c0_64 = arith.constant 0 : index
    %178 = vector.load %arg19[%c5, %c0_63, %c0_64] : memref<8x2x32xf32, #tpu.memory_space<vmem>>, vector<1x2x32xf32>
    %179 = vector.shape_cast %178 : vector<1x2x32xf32> to vector<2x32xf32>
    %180 = vector.shape_cast %177 : vector<2x32xf32> to vector<1x2x32xf32>
    tpu.vector_store %arg19[%c5, %c0_63, %c0_64], %180 {strides = array<i32>} : memref<8x2x32xf32, #tpu.memory_space<vmem>>, vector<1x2x32xf32>,
    %c12 = arith.constant 12 : index
    %c0_65 = arith.constant 0 : index
    %181 = vector.load %arg17[%c12, %c0_65] : memref<16x96xf32, #tpu.memory_space<vmem>>, vector<2x96xf32>
    %cst_66 = arith.constant dense<0.000000e+00> : vector<2x96xf32>
    %182 = tpu.matmul %177, %14, %cst_66 {dimension_numbers = #tpu.dot_dimension_numbers<[1], [0], [0], [1], [0, 0, 1, 1], [], []>} : vector<2x32xf32>, vector<32x96xf32>, vector<2x96xf32> -> vector<2x96xf32>
    %183 = vector.broadcast %15 : vector<1x96xf32> to vector<2x96xf32>
    %184 = arith.addf %182, %183 : vector<2x96xf32>
    %185 = vector.extract_strided_slice %181 {offsets = [0, 0], sizes = [2, 64], strides = [1, 1]} : vector<2x96xf32> to vector<2x64xf32>
    %186 = vector.extract_strided_slice %184 {offsets = [0, 0], sizes = [2, 64], strides = [1, 1]} : vector<2x96xf32> to vector<2x64xf32>
    %187 = arith.addf %185, %186 : vector<2x64xf32>
    %188 = arith.negf %187 : vector<2x64xf32>
    %189 = math.exp %188 : vector<2x64xf32>
    %cst_67 = arith.constant 1.000000e+00 : f32
    %190 = vector.broadcast %cst_67 : f32 to vector<2x64xf32>
    %191 = arith.addf %190, %189 : vector<2x64xf32>
    %192 = arith.divf %190, %191 : vector<2x64xf32>
    %193 = vector.extract_strided_slice %192 {offsets = [0, 0], sizes = [2, 32], strides = [1, 1]} : vector<2x64xf32> to vector<2x32xf32>
    %194 = vector.extract_strided_slice %192 {offsets = [0, 32], sizes = [2, 32], strides = [1, 1]} : vector<2x64xf32> to vector<2x32xf32>
    %195 = vector.extract_strided_slice %181 {offsets = [0, 64], sizes = [2, 32], strides = [1, 1]} : vector<2x96xf32> to vector<2x32xf32>
    %196 = vector.extract_strided_slice %184 {offsets = [0, 64], sizes = [2, 32], strides = [1, 1]} : vector<2x96xf32> to vector<2x32xf32>
    %197 = arith.mulf %193, %196 : vector<2x32xf32>
    %198 = arith.addf %195, %197 : vector<2x32xf32>
    %199 = math.tanh %198 : vector<2x32xf32>
    %cst_68 = arith.constant 1.000000e+00 : f32
    %200 = vector.broadcast %cst_68 : f32 to vector<2x32xf32>
    %201 = arith.subf %200, %194 : vector<2x32xf32>
    %202 = arith.mulf %201, %199 : vector<2x32xf32>
    %203 = arith.mulf %194, %177 : vector<2x32xf32>
    %204 = arith.addf %202, %203 : vector<2x32xf32>
    %c6_69 = arith.constant 6 : index
    %c0_70 = arith.constant 0 : index
    %c0_71 = arith.constant 0 : index
    %205 = vector.load %arg19[%c6_69, %c0_70, %c0_71] : memref<8x2x32xf32, #tpu.memory_space<vmem>>, vector<1x2x32xf32>
    %206 = vector.shape_cast %205 : vector<1x2x32xf32> to vector<2x32xf32>
    %207 = vector.shape_cast %204 : vector<2x32xf32> to vector<1x2x32xf32>
    tpu.vector_store %arg19[%c6_69, %c0_70, %c0_71], %207 {strides = array<i32>} : memref<8x2x32xf32, #tpu.memory_space<vmem>>, vector<1x2x32xf32>,
    %c14 = arith.constant 14 : index
    %c0_72 = arith.constant 0 : index
    %208 = vector.load %arg17[%c14, %c0_72] : memref<16x96xf32, #tpu.memory_space<vmem>>, vector<2x96xf32>
    %cst_73 = arith.constant dense<0.000000e+00> : vector<2x96xf32>
    %209 = tpu.matmul %204, %14, %cst_73 {dimension_numbers = #tpu.dot_dimension_numbers<[1], [0], [0], [1], [0, 0, 1, 1], [], []>} : vector<2x32xf32>, vector<32x96xf32>, vector<2x96xf32> -> vector<2x96xf32>
    %210 = vector.broadcast %15 : vector<1x96xf32> to vector<2x96xf32>
    %211 = arith.addf %209, %210 : vector<2x96xf32>
    %212 = vector.extract_strided_slice %208 {offsets = [0, 0], sizes = [2, 64], strides = [1, 1]} : vector<2x96xf32> to vector<2x64xf32>
    %213 = vector.extract_strided_slice %211 {offsets = [0, 0], sizes = [2, 64], strides = [1, 1]} : vector<2x96xf32> to vector<2x64xf32>
    %214 = arith.addf %212, %213 : vector<2x64xf32>
    %215 = arith.negf %214 : vector<2x64xf32>
    %216 = math.exp %215 : vector<2x64xf32>
    %cst_74 = arith.constant 1.000000e+00 : f32
    %217 = vector.broadcast %cst_74 : f32 to vector<2x64xf32>
    %218 = arith.addf %217, %216 : vector<2x64xf32>
    %219 = arith.divf %217, %218 : vector<2x64xf32>
    %220 = vector.extract_strided_slice %219 {offsets = [0, 0], sizes = [2, 32], strides = [1, 1]} : vector<2x64xf32> to vector<2x32xf32>
    %221 = vector.extract_strided_slice %219 {offsets = [0, 32], sizes = [2, 32], strides = [1, 1]} : vector<2x64xf32> to vector<2x32xf32>
    %222 = vector.extract_strided_slice %208 {offsets = [0, 64], sizes = [2, 32], strides = [1, 1]} : vector<2x96xf32> to vector<2x32xf32>
    %223 = vector.extract_strided_slice %211 {offsets = [0, 64], sizes = [2, 32], strides = [1, 1]} : vector<2x96xf32> to vector<2x32xf32>
    %224 = arith.mulf %220, %223 : vector<2x32xf32>
    %225 = arith.addf %222, %224 : vector<2x32xf32>
    %226 = math.tanh %225 : vector<2x32xf32>
    %cst_75 = arith.constant 1.000000e+00 : f32
    %227 = vector.broadcast %cst_75 : f32 to vector<2x32xf32>
    %228 = arith.subf %227, %221 : vector<2x32xf32>
    %229 = arith.mulf %228, %226 : vector<2x32xf32>
    %230 = arith.mulf %221, %204 : vector<2x32xf32>
    %231 = arith.addf %229, %230 : vector<2x32xf32>
    %c7 = arith.constant 7 : index
    %c0_76 = arith.constant 0 : index
    %c0_77 = arith.constant 0 : index
    %232 = vector.load %arg19[%c7, %c0_76, %c0_77] : memref<8x2x32xf32, #tpu.memory_space<vmem>>, vector<1x2x32xf32>
    %233 = vector.shape_cast %232 : vector<1x2x32xf32> to vector<2x32xf32>
    %234 = vector.shape_cast %231 : vector<2x32xf32> to vector<1x2x32xf32>
    tpu.vector_store %arg19[%c7, %c0_76, %c0_77], %234 {strides = array<i32>} : memref<8x2x32xf32, #tpu.memory_space<vmem>>, vector<1x2x32xf32>,
    %c0_78 = arith.constant 0 : index
    %c0_79 = arith.constant 0 : index
    %235 = vector.load %arg18[%c0_78, %c0_79] : memref<16x96xf32, #tpu.memory_space<vmem>>, vector<2x96xf32>
    %cst_80 = arith.constant dense<0.000000e+00> : vector<2x96xf32>
    %236 = tpu.matmul %231, %16, %cst_80 {dimension_numbers = #tpu.dot_dimension_numbers<[1], [0], [0], [1], [0, 0, 1, 1], [], []>} : vector<2x32xf32>, vector<32x96xf32>, vector<2x96xf32> -> vector<2x96xf32>
    %237 = vector.broadcast %17 : vector<1x96xf32> to vector<2x96xf32>
    %238 = arith.addf %236, %237 : vector<2x96xf32>
    %239 = vector.extract_strided_slice %235 {offsets = [0, 0], sizes = [2, 64], strides = [1, 1]} : vector<2x96xf32> to vector<2x64xf32>
    %240 = vector.extract_strided_slice %238 {offsets = [0, 0], sizes = [2, 64], strides = [1, 1]} : vector<2x96xf32> to vector<2x64xf32>
    %241 = arith.addf %239, %240 : vector<2x64xf32>
    %242 = arith.negf %241 : vector<2x64xf32>
    %243 = math.exp %242 : vector<2x64xf32>
    %cst_81 = arith.constant 1.000000e+00 : f32
    %244 = vector.broadcast %cst_81 : f32 to vector<2x64xf32>
    %245 = arith.addf %244, %243 : vector<2x64xf32>
    %246 = arith.divf %244, %245 : vector<2x64xf32>
    %247 = vector.extract_strided_slice %246 {offsets = [0, 0], sizes = [2, 32], strides = [1, 1]} : vector<2x64xf32> to vector<2x32xf32>
    %248 = vector.extract_strided_slice %246 {offsets = [0, 32], sizes = [2, 32], strides = [1, 1]} : vector<2x64xf32> to vector<2x32xf32>
    %249 = vector.extract_strided_slice %235 {offsets = [0, 64], sizes = [2, 32], strides = [1, 1]} : vector<2x96xf32> to vector<2x32xf32>
    %250 = vector.extract_strided_slice %238 {offsets = [0, 64], sizes = [2, 32], strides = [1, 1]} : vector<2x96xf32> to vector<2x32xf32>
    %251 = arith.mulf %247, %250 : vector<2x32xf32>
    %252 = arith.addf %249, %251 : vector<2x32xf32>
    %253 = math.tanh %252 : vector<2x32xf32>
    %cst_82 = arith.constant 1.000000e+00 : f32
    %254 = vector.broadcast %cst_82 : f32 to vector<2x32xf32>
    %255 = arith.subf %254, %248 : vector<2x32xf32>
    %256 = arith.mulf %255, %253 : vector<2x32xf32>
    %257 = arith.mulf %248, %231 : vector<2x32xf32>
    %258 = arith.addf %256, %257 : vector<2x32xf32>
    %c0_83 = arith.constant 0 : index
    %c0_84 = arith.constant 0 : index
    %c0_85 = arith.constant 0 : index
    %259 = vector.load %arg20[%c0_83, %c0_84, %c0_85] : memref<8x2x32xf32, #tpu.memory_space<vmem>>, vector<1x2x32xf32>
    %260 = vector.shape_cast %259 : vector<1x2x32xf32> to vector<2x32xf32>
    %261 = vector.shape_cast %258 : vector<2x32xf32> to vector<1x2x32xf32>
    tpu.vector_store %arg20[%c0_83, %c0_84, %c0_85], %261 {strides = array<i32>} : memref<8x2x32xf32, #tpu.memory_space<vmem>>, vector<1x2x32xf32>,
    %c2_86 = arith.constant 2 : index
    %c0_87 = arith.constant 0 : index
    %262 = vector.load %arg18[%c2_86, %c0_87] : memref<16x96xf32, #tpu.memory_space<vmem>>, vector<2x96xf32>
    %cst_88 = arith.constant dense<0.000000e+00> : vector<2x96xf32>
    %263 = tpu.matmul %258, %16, %cst_88 {dimension_numbers = #tpu.dot_dimension_numbers<[1], [0], [0], [1], [0, 0, 1, 1], [], []>} : vector<2x32xf32>, vector<32x96xf32>, vector<2x96xf32> -> vector<2x96xf32>
    %264 = vector.broadcast %17 : vector<1x96xf32> to vector<2x96xf32>
    %265 = arith.addf %263, %264 : vector<2x96xf32>
    %266 = vector.extract_strided_slice %262 {offsets = [0, 0], sizes = [2, 64], strides = [1, 1]} : vector<2x96xf32> to vector<2x64xf32>
    %267 = vector.extract_strided_slice %265 {offsets = [0, 0], sizes = [2, 64], strides = [1, 1]} : vector<2x96xf32> to vector<2x64xf32>
    %268 = arith.addf %266, %267 : vector<2x64xf32>
    %269 = arith.negf %268 : vector<2x64xf32>
    %270 = math.exp %269 : vector<2x64xf32>
    %cst_89 = arith.constant 1.000000e+00 : f32
    %271 = vector.broadcast %cst_89 : f32 to vector<2x64xf32>
    %272 = arith.addf %271, %270 : vector<2x64xf32>
    %273 = arith.divf %271, %272 : vector<2x64xf32>
    %274 = vector.extract_strided_slice %273 {offsets = [0, 0], sizes = [2, 32], strides = [1, 1]} : vector<2x64xf32> to vector<2x32xf32>
    %275 = vector.extract_strided_slice %273 {offsets = [0, 32], sizes = [2, 32], strides = [1, 1]} : vector<2x64xf32> to vector<2x32xf32>
    %276 = vector.extract_strided_slice %262 {offsets = [0, 64], sizes = [2, 32], strides = [1, 1]} : vector<2x96xf32> to vector<2x32xf32>
    %277 = vector.extract_strided_slice %265 {offsets = [0, 64], sizes = [2, 32], strides = [1, 1]} : vector<2x96xf32> to vector<2x32xf32>
    %278 = arith.mulf %274, %277 : vector<2x32xf32>
    %279 = arith.addf %276, %278 : vector<2x32xf32>
    %280 = math.tanh %279 : vector<2x32xf32>
    %cst_90 = arith.constant 1.000000e+00 : f32
    %281 = vector.broadcast %cst_90 : f32 to vector<2x32xf32>
    %282 = arith.subf %281, %275 : vector<2x32xf32>
    %283 = arith.mulf %282, %280 : vector<2x32xf32>
    %284 = arith.mulf %275, %258 : vector<2x32xf32>
    %285 = arith.addf %283, %284 : vector<2x32xf32>
    %c1_91 = arith.constant 1 : index
    %c0_92 = arith.constant 0 : index
    %c0_93 = arith.constant 0 : index
    %286 = vector.load %arg20[%c1_91, %c0_92, %c0_93] : memref<8x2x32xf32, #tpu.memory_space<vmem>>, vector<1x2x32xf32>
    %287 = vector.shape_cast %286 : vector<1x2x32xf32> to vector<2x32xf32>
    %288 = vector.shape_cast %285 : vector<2x32xf32> to vector<1x2x32xf32>
    tpu.vector_store %arg20[%c1_91, %c0_92, %c0_93], %288 {strides = array<i32>} : memref<8x2x32xf32, #tpu.memory_space<vmem>>, vector<1x2x32xf32>,
    %c4_94 = arith.constant 4 : index
    %c0_95 = arith.constant 0 : index
    %289 = vector.load %arg18[%c4_94, %c0_95] : memref<16x96xf32, #tpu.memory_space<vmem>>, vector<2x96xf32>
    %cst_96 = arith.constant dense<0.000000e+00> : vector<2x96xf32>
    %290 = tpu.matmul %285, %16, %cst_96 {dimension_numbers = #tpu.dot_dimension_numbers<[1], [0], [0], [1], [0, 0, 1, 1], [], []>} : vector<2x32xf32>, vector<32x96xf32>, vector<2x96xf32> -> vector<2x96xf32>
    %291 = vector.broadcast %17 : vector<1x96xf32> to vector<2x96xf32>
    %292 = arith.addf %290, %291 : vector<2x96xf32>
    %293 = vector.extract_strided_slice %289 {offsets = [0, 0], sizes = [2, 64], strides = [1, 1]} : vector<2x96xf32> to vector<2x64xf32>
    %294 = vector.extract_strided_slice %292 {offsets = [0, 0], sizes = [2, 64], strides = [1, 1]} : vector<2x96xf32> to vector<2x64xf32>
    %295 = arith.addf %293, %294 : vector<2x64xf32>
    %296 = arith.negf %295 : vector<2x64xf32>
    %297 = math.exp %296 : vector<2x64xf32>
    %cst_97 = arith.constant 1.000000e+00 : f32
    %298 = vector.broadcast %cst_97 : f32 to vector<2x64xf32>
    %299 = arith.addf %298, %297 : vector<2x64xf32>
    %300 = arith.divf %298, %299 : vector<2x64xf32>
    %301 = vector.extract_strided_slice %300 {offsets = [0, 0], sizes = [2, 32], strides = [1, 1]} : vector<2x64xf32> to vector<2x32xf32>
    %302 = vector.extract_strided_slice %300 {offsets = [0, 32], sizes = [2, 32], strides = [1, 1]} : vector<2x64xf32> to vector<2x32xf32>
    %303 = vector.extract_strided_slice %289 {offsets = [0, 64], sizes = [2, 32], strides = [1, 1]} : vector<2x96xf32> to vector<2x32xf32>
    %304 = vector.extract_strided_slice %292 {offsets = [0, 64], sizes = [2, 32], strides = [1, 1]} : vector<2x96xf32> to vector<2x32xf32>
    %305 = arith.mulf %301, %304 : vector<2x32xf32>
    %306 = arith.addf %303, %305 : vector<2x32xf32>
    %307 = math.tanh %306 : vector<2x32xf32>
    %cst_98 = arith.constant 1.000000e+00 : f32
    %308 = vector.broadcast %cst_98 : f32 to vector<2x32xf32>
    %309 = arith.subf %308, %302 : vector<2x32xf32>
    %310 = arith.mulf %309, %307 : vector<2x32xf32>
    %311 = arith.mulf %302, %285 : vector<2x32xf32>
    %312 = arith.addf %310, %311 : vector<2x32xf32>
    %c2_99 = arith.constant 2 : index
    %c0_100 = arith.constant 0 : index
    %c0_101 = arith.constant 0 : index
    %313 = vector.load %arg20[%c2_99, %c0_100, %c0_101] : memref<8x2x32xf32, #tpu.memory_space<vmem>>, vector<1x2x32xf32>
    %314 = vector.shape_cast %313 : vector<1x2x32xf32> to vector<2x32xf32>
    %315 = vector.shape_cast %312 : vector<2x32xf32> to vector<1x2x32xf32>
    tpu.vector_store %arg20[%c2_99, %c0_100, %c0_101], %315 {strides = array<i32>} : memref<8x2x32xf32, #tpu.memory_space<vmem>>, vector<1x2x32xf32>,
    %c6_102 = arith.constant 6 : index
    %c0_103 = arith.constant 0 : index
    %316 = vector.load %arg18[%c6_102, %c0_103] : memref<16x96xf32, #tpu.memory_space<vmem>>, vector<2x96xf32>
    %cst_104 = arith.constant dense<0.000000e+00> : vector<2x96xf32>
    %317 = tpu.matmul %312, %16, %cst_104 {dimension_numbers = #tpu.dot_dimension_numbers<[1], [0], [0], [1], [0, 0, 1, 1], [], []>} : vector<2x32xf32>, vector<32x96xf32>, vector<2x96xf32> -> vector<2x96xf32>
    %318 = vector.broadcast %17 : vector<1x96xf32> to vector<2x96xf32>
    %319 = arith.addf %317, %318 : vector<2x96xf32>
    %320 = vector.extract_strided_slice %316 {offsets = [0, 0], sizes = [2, 64], strides = [1, 1]} : vector<2x96xf32> to vector<2x64xf32>
    %321 = vector.extract_strided_slice %319 {offsets = [0, 0], sizes = [2, 64], strides = [1, 1]} : vector<2x96xf32> to vector<2x64xf32>
    %322 = arith.addf %320, %321 : vector<2x64xf32>
    %323 = arith.negf %322 : vector<2x64xf32>
    %324 = math.exp %323 : vector<2x64xf32>
    %cst_105 = arith.constant 1.000000e+00 : f32
    %325 = vector.broadcast %cst_105 : f32 to vector<2x64xf32>
    %326 = arith.addf %325, %324 : vector<2x64xf32>
    %327 = arith.divf %325, %326 : vector<2x64xf32>
    %328 = vector.extract_strided_slice %327 {offsets = [0, 0], sizes = [2, 32], strides = [1, 1]} : vector<2x64xf32> to vector<2x32xf32>
    %329 = vector.extract_strided_slice %327 {offsets = [0, 32], sizes = [2, 32], strides = [1, 1]} : vector<2x64xf32> to vector<2x32xf32>
    %330 = vector.extract_strided_slice %316 {offsets = [0, 64], sizes = [2, 32], strides = [1, 1]} : vector<2x96xf32> to vector<2x32xf32>
    %331 = vector.extract_strided_slice %319 {offsets = [0, 64], sizes = [2, 32], strides = [1, 1]} : vector<2x96xf32> to vector<2x32xf32>
    %332 = arith.mulf %328, %331 : vector<2x32xf32>
    %333 = arith.addf %330, %332 : vector<2x32xf32>
    %334 = math.tanh %333 : vector<2x32xf32>
    %cst_106 = arith.constant 1.000000e+00 : f32
    %335 = vector.broadcast %cst_106 : f32 to vector<2x32xf32>
    %336 = arith.subf %335, %329 : vector<2x32xf32>
    %337 = arith.mulf %336, %334 : vector<2x32xf32>
    %338 = arith.mulf %329, %312 : vector<2x32xf32>
    %339 = arith.addf %337, %338 : vector<2x32xf32>
    %c3_107 = arith.constant 3 : index
    %c0_108 = arith.constant 0 : index
    %c0_109 = arith.constant 0 : index
    %340 = vector.load %arg20[%c3_107, %c0_108, %c0_109] : memref<8x2x32xf32, #tpu.memory_space<vmem>>, vector<1x2x32xf32>
    %341 = vector.shape_cast %340 : vector<1x2x32xf32> to vector<2x32xf32>
    %342 = vector.shape_cast %339 : vector<2x32xf32> to vector<1x2x32xf32>
    tpu.vector_store %arg20[%c3_107, %c0_108, %c0_109], %342 {strides = array<i32>} : memref<8x2x32xf32, #tpu.memory_space<vmem>>, vector<1x2x32xf32>,
    %c8_110 = arith.constant 8 : index
    %c0_111 = arith.constant 0 : index
    %343 = vector.load %arg18[%c8_110, %c0_111] : memref<16x96xf32, #tpu.memory_space<vmem>>, vector<2x96xf32>
    %cst_112 = arith.constant dense<0.000000e+00> : vector<2x96xf32>
    %344 = tpu.matmul %339, %16, %cst_112 {dimension_numbers = #tpu.dot_dimension_numbers<[1], [0], [0], [1], [0, 0, 1, 1], [], []>} : vector<2x32xf32>, vector<32x96xf32>, vector<2x96xf32> -> vector<2x96xf32>
    %345 = vector.broadcast %17 : vector<1x96xf32> to vector<2x96xf32>
    %346 = arith.addf %344, %345 : vector<2x96xf32>
    %347 = vector.extract_strided_slice %343 {offsets = [0, 0], sizes = [2, 64], strides = [1, 1]} : vector<2x96xf32> to vector<2x64xf32>
    %348 = vector.extract_strided_slice %346 {offsets = [0, 0], sizes = [2, 64], strides = [1, 1]} : vector<2x96xf32> to vector<2x64xf32>
    %349 = arith.addf %347, %348 : vector<2x64xf32>
    %350 = arith.negf %349 : vector<2x64xf32>
    %351 = math.exp %350 : vector<2x64xf32>
    %cst_113 = arith.constant 1.000000e+00 : f32
    %352 = vector.broadcast %cst_113 : f32 to vector<2x64xf32>
    %353 = arith.addf %352, %351 : vector<2x64xf32>
    %354 = arith.divf %352, %353 : vector<2x64xf32>
    %355 = vector.extract_strided_slice %354 {offsets = [0, 0], sizes = [2, 32], strides = [1, 1]} : vector<2x64xf32> to vector<2x32xf32>
    %356 = vector.extract_strided_slice %354 {offsets = [0, 32], sizes = [2, 32], strides = [1, 1]} : vector<2x64xf32> to vector<2x32xf32>
    %357 = vector.extract_strided_slice %343 {offsets = [0, 64], sizes = [2, 32], strides = [1, 1]} : vector<2x96xf32> to vector<2x32xf32>
    %358 = vector.extract_strided_slice %346 {offsets = [0, 64], sizes = [2, 32], strides = [1, 1]} : vector<2x96xf32> to vector<2x32xf32>
    %359 = arith.mulf %355, %358 : vector<2x32xf32>
    %360 = arith.addf %357, %359 : vector<2x32xf32>
    %361 = math.tanh %360 : vector<2x32xf32>
    %cst_114 = arith.constant 1.000000e+00 : f32
    %362 = vector.broadcast %cst_114 : f32 to vector<2x32xf32>
    %363 = arith.subf %362, %356 : vector<2x32xf32>
    %364 = arith.mulf %363, %361 : vector<2x32xf32>
    %365 = arith.mulf %356, %339 : vector<2x32xf32>
    %366 = arith.addf %364, %365 : vector<2x32xf32>
    %c4_115 = arith.constant 4 : index
    %c0_116 = arith.constant 0 : index
    %c0_117 = arith.constant 0 : index
    %367 = vector.load %arg20[%c4_115, %c0_116, %c0_117] : memref<8x2x32xf32, #tpu.memory_space<vmem>>, vector<1x2x32xf32>
    %368 = vector.shape_cast %367 : vector<1x2x32xf32> to vector<2x32xf32>
    %369 = vector.shape_cast %366 : vector<2x32xf32> to vector<1x2x32xf32>
    tpu.vector_store %arg20[%c4_115, %c0_116, %c0_117], %369 {strides = array<i32>} : memref<8x2x32xf32, #tpu.memory_space<vmem>>, vector<1x2x32xf32>,
    %c10_118 = arith.constant 10 : index
    %c0_119 = arith.constant 0 : index
    %370 = vector.load %arg18[%c10_118, %c0_119] : memref<16x96xf32, #tpu.memory_space<vmem>>, vector<2x96xf32>
    %cst_120 = arith.constant dense<0.000000e+00> : vector<2x96xf32>
    %371 = tpu.matmul %366, %16, %cst_120 {dimension_numbers = #tpu.dot_dimension_numbers<[1], [0], [0], [1], [0, 0, 1, 1], [], []>} : vector<2x32xf32>, vector<32x96xf32>, vector<2x96xf32> -> vector<2x96xf32>
    %372 = vector.broadcast %17 : vector<1x96xf32> to vector<2x96xf32>
    %373 = arith.addf %371, %372 : vector<2x96xf32>
    %374 = vector.extract_strided_slice %370 {offsets = [0, 0], sizes = [2, 64], strides = [1, 1]} : vector<2x96xf32> to vector<2x64xf32>
    %375 = vector.extract_strided_slice %373 {offsets = [0, 0], sizes = [2, 64], strides = [1, 1]} : vector<2x96xf32> to vector<2x64xf32>
    %376 = arith.addf %374, %375 : vector<2x64xf32>
    %377 = arith.negf %376 : vector<2x64xf32>
    %378 = math.exp %377 : vector<2x64xf32>
    %cst_121 = arith.constant 1.000000e+00 : f32
    %379 = vector.broadcast %cst_121 : f32 to vector<2x64xf32>
    %380 = arith.addf %379, %378 : vector<2x64xf32>
    %381 = arith.divf %379, %380 : vector<2x64xf32>
    %382 = vector.extract_strided_slice %381 {offsets = [0, 0], sizes = [2, 32], strides = [1, 1]} : vector<2x64xf32> to vector<2x32xf32>
    %383 = vector.extract_strided_slice %381 {offsets = [0, 32], sizes = [2, 32], strides = [1, 1]} : vector<2x64xf32> to vector<2x32xf32>
    %384 = vector.extract_strided_slice %370 {offsets = [0, 64], sizes = [2, 32], strides = [1, 1]} : vector<2x96xf32> to vector<2x32xf32>
    %385 = vector.extract_strided_slice %373 {offsets = [0, 64], sizes = [2, 32], strides = [1, 1]} : vector<2x96xf32> to vector<2x32xf32>
    %386 = arith.mulf %382, %385 : vector<2x32xf32>
    %387 = arith.addf %384, %386 : vector<2x32xf32>
    %388 = math.tanh %387 : vector<2x32xf32>
    %cst_122 = arith.constant 1.000000e+00 : f32
    %389 = vector.broadcast %cst_122 : f32 to vector<2x32xf32>
    %390 = arith.subf %389, %383 : vector<2x32xf32>
    %391 = arith.mulf %390, %388 : vector<2x32xf32>
    %392 = arith.mulf %383, %366 : vector<2x32xf32>
    %393 = arith.addf %391, %392 : vector<2x32xf32>
    %c5_123 = arith.constant 5 : index
    %c0_124 = arith.constant 0 : index
    %c0_125 = arith.constant 0 : index
    %394 = vector.load %arg20[%c5_123, %c0_124, %c0_125] : memref<8x2x32xf32, #tpu.memory_space<vmem>>, vector<1x2x32xf32>
    %395 = vector.shape_cast %394 : vector<1x2x32xf32> to vector<2x32xf32>
    %396 = vector.shape_cast %393 : vector<2x32xf32> to vector<1x2x32xf32>
    tpu.vector_store %arg20[%c5_123, %c0_124, %c0_125], %396 {strides = array<i32>} : memref<8x2x32xf32, #tpu.memory_space<vmem>>, vector<1x2x32xf32>,
    %c12_126 = arith.constant 12 : index
    %c0_127 = arith.constant 0 : index
    %397 = vector.load %arg18[%c12_126, %c0_127] : memref<16x96xf32, #tpu.memory_space<vmem>>, vector<2x96xf32>
    %cst_128 = arith.constant dense<0.000000e+00> : vector<2x96xf32>
    %398 = tpu.matmul %393, %16, %cst_128 {dimension_numbers = #tpu.dot_dimension_numbers<[1], [0], [0], [1], [0, 0, 1, 1], [], []>} : vector<2x32xf32>, vector<32x96xf32>, vector<2x96xf32> -> vector<2x96xf32>
    %399 = vector.broadcast %17 : vector<1x96xf32> to vector<2x96xf32>
    %400 = arith.addf %398, %399 : vector<2x96xf32>
    %401 = vector.extract_strided_slice %397 {offsets = [0, 0], sizes = [2, 64], strides = [1, 1]} : vector<2x96xf32> to vector<2x64xf32>
    %402 = vector.extract_strided_slice %400 {offsets = [0, 0], sizes = [2, 64], strides = [1, 1]} : vector<2x96xf32> to vector<2x64xf32>
    %403 = arith.addf %401, %402 : vector<2x64xf32>
    %404 = arith.negf %403 : vector<2x64xf32>
    %405 = math.exp %404 : vector<2x64xf32>
    %cst_129 = arith.constant 1.000000e+00 : f32
    %406 = vector.broadcast %cst_129 : f32 to vector<2x64xf32>
    %407 = arith.addf %406, %405 : vector<2x64xf32>
    %408 = arith.divf %406, %407 : vector<2x64xf32>
    %409 = vector.extract_strided_slice %408 {offsets = [0, 0], sizes = [2, 32], strides = [1, 1]} : vector<2x64xf32> to vector<2x32xf32>
    %410 = vector.extract_strided_slice %408 {offsets = [0, 32], sizes = [2, 32], strides = [1, 1]} : vector<2x64xf32> to vector<2x32xf32>
    %411 = vector.extract_strided_slice %397 {offsets = [0, 64], sizes = [2, 32], strides = [1, 1]} : vector<2x96xf32> to vector<2x32xf32>
    %412 = vector.extract_strided_slice %400 {offsets = [0, 64], sizes = [2, 32], strides = [1, 1]} : vector<2x96xf32> to vector<2x32xf32>
    %413 = arith.mulf %409, %412 : vector<2x32xf32>
    %414 = arith.addf %411, %413 : vector<2x32xf32>
    %415 = math.tanh %414 : vector<2x32xf32>
    %cst_130 = arith.constant 1.000000e+00 : f32
    %416 = vector.broadcast %cst_130 : f32 to vector<2x32xf32>
    %417 = arith.subf %416, %410 : vector<2x32xf32>
    %418 = arith.mulf %417, %415 : vector<2x32xf32>
    %419 = arith.mulf %410, %393 : vector<2x32xf32>
    %420 = arith.addf %418, %419 : vector<2x32xf32>
    %c6_131 = arith.constant 6 : index
    %c0_132 = arith.constant 0 : index
    %c0_133 = arith.constant 0 : index
    %421 = vector.load %arg20[%c6_131, %c0_132, %c0_133] : memref<8x2x32xf32, #tpu.memory_space<vmem>>, vector<1x2x32xf32>
    %422 = vector.shape_cast %421 : vector<1x2x32xf32> to vector<2x32xf32>
    %423 = vector.shape_cast %420 : vector<2x32xf32> to vector<1x2x32xf32>
    tpu.vector_store %arg20[%c6_131, %c0_132, %c0_133], %423 {strides = array<i32>} : memref<8x2x32xf32, #tpu.memory_space<vmem>>, vector<1x2x32xf32>,
    %c14_134 = arith.constant 14 : index
    %c0_135 = arith.constant 0 : index
    %424 = vector.load %arg18[%c14_134, %c0_135] : memref<16x96xf32, #tpu.memory_space<vmem>>, vector<2x96xf32>
    %cst_136 = arith.constant dense<0.000000e+00> : vector<2x96xf32>
    %425 = tpu.matmul %420, %16, %cst_136 {dimension_numbers = #tpu.dot_dimension_numbers<[1], [0], [0], [1], [0, 0, 1, 1], [], []>} : vector<2x32xf32>, vector<32x96xf32>, vector<2x96xf32> -> vector<2x96xf32>
    %426 = vector.broadcast %17 : vector<1x96xf32> to vector<2x96xf32>
    %427 = arith.addf %425, %426 : vector<2x96xf32>
    %428 = vector.extract_strided_slice %424 {offsets = [0, 0], sizes = [2, 64], strides = [1, 1]} : vector<2x96xf32> to vector<2x64xf32>
    %429 = vector.extract_strided_slice %427 {offsets = [0, 0], sizes = [2, 64], strides = [1, 1]} : vector<2x96xf32> to vector<2x64xf32>
    %430 = arith.addf %428, %429 : vector<2x64xf32>
    %431 = arith.negf %430 : vector<2x64xf32>
    %432 = math.exp %431 : vector<2x64xf32>
    %cst_137 = arith.constant 1.000000e+00 : f32
    %433 = vector.broadcast %cst_137 : f32 to vector<2x64xf32>
    %434 = arith.addf %433, %432 : vector<2x64xf32>
    %435 = arith.divf %433, %434 : vector<2x64xf32>
    %436 = vector.extract_strided_slice %435 {offsets = [0, 0], sizes = [2, 32], strides = [1, 1]} : vector<2x64xf32> to vector<2x32xf32>
    %437 = vector.extract_strided_slice %435 {offsets = [0, 32], sizes = [2, 32], strides = [1, 1]} : vector<2x64xf32> to vector<2x32xf32>
    %438 = vector.extract_strided_slice %424 {offsets = [0, 64], sizes = [2, 32], strides = [1, 1]} : vector<2x96xf32> to vector<2x32xf32>
    %439 = vector.extract_strided_slice %427 {offsets = [0, 64], sizes = [2, 32], strides = [1, 1]} : vector<2x96xf32> to vector<2x32xf32>
    %440 = arith.mulf %436, %439 : vector<2x32xf32>
    %441 = arith.addf %438, %440 : vector<2x32xf32>
    %442 = math.tanh %441 : vector<2x32xf32>
    %cst_138 = arith.constant 1.000000e+00 : f32
    %443 = vector.broadcast %cst_138 : f32 to vector<2x32xf32>
    %444 = arith.subf %443, %437 : vector<2x32xf32>
    %445 = arith.mulf %444, %442 : vector<2x32xf32>
    %446 = arith.mulf %437, %420 : vector<2x32xf32>
    %447 = arith.addf %445, %446 : vector<2x32xf32>
    %c7_139 = arith.constant 7 : index
    %c0_140 = arith.constant 0 : index
    %c0_141 = arith.constant 0 : index
    %448 = vector.load %arg20[%c7_139, %c0_140, %c0_141] : memref<8x2x32xf32, #tpu.memory_space<vmem>>, vector<1x2x32xf32>
    %449 = vector.shape_cast %448 : vector<1x2x32xf32> to vector<2x32xf32>
    %450 = vector.shape_cast %447 : vector<2x32xf32> to vector<1x2x32xf32>
    tpu.vector_store %arg20[%c7_139, %c0_140, %c0_141], %450 {strides = array<i32>} : memref<8x2x32xf32, #tpu.memory_space<vmem>>, vector<1x2x32xf32>,
    %c0_142 = arith.constant 0 : index
    %c0_143 = arith.constant 0 : index
    %c0_144 = arith.constant 0 : index
    %451 = vector.load %arg19[%c0_142, %c0_143, %c0_144] : memref<8x2x32xf32, #tpu.memory_space<vmem>>, vector<8x2x32xf32>
    %c0_145 = arith.constant 0 : index
    %c0_146 = arith.constant 0 : index
    %c0_147 = arith.constant 0 : index
    %452 = vector.load %arg20[%c0_145, %c0_146, %c0_147] : memref<8x2x32xf32, #tpu.memory_space<vmem>>, vector<8x2x32xf32>
    %c0_148 = arith.constant 0 : index
    %c0_149 = arith.constant 0 : index
    %453 = vector.load %arg2[%c0_148, %c0_149] : memref<2x8xf32, #tpu.memory_space<vmem>>, vector<2x8xf32>
    %c0_150 = arith.constant 0 : index
    %c0_151 = arith.constant 0 : index
    %454 = vector.load %arg11[%c0_150, %c0_151] : memref<32x32xf32, #tpu.memory_space<vmem>>, vector<32x32xf32>
    %455 = vector.extract_strided_slice %452 {offsets = [0, 0, 0], sizes = [8, 1, 32], strides = [1, 1, 1]} : vector<8x2x32xf32> to vector<8x1x32xf32>
    %456 = vector.shape_cast %455 : vector<8x1x32xf32> to vector<8x32xf32>
    %457 = vector.extract_strided_slice %451 {offsets = [0, 0, 0], sizes = [8, 1, 32], strides = [1, 1, 1]} : vector<8x2x32xf32> to vector<8x1x32xf32>
    %458 = vector.shape_cast %457 : vector<8x1x32xf32> to vector<8x32xf32>
    %cst_152 = arith.constant dense<0.000000e+00> : vector<8x32xf32>
    %459 = tpu.matmul %458, %454, %cst_152 {dimension_numbers = #tpu.dot_dimension_numbers<[1], [0], [0], [1], [0, 0, 1, 1], [], []>} : vector<8x32xf32>, vector<32x32xf32>, vector<8x32xf32> -> vector<8x32xf32>
    %cst_153 = arith.constant dense<0.000000e+00> : vector<8x8xf32>
    %460 = tpu.matmul %456, %459, %cst_153 {dimension_numbers = #tpu.dot_dimension_numbers<[1], [1], [0], [0], [0, 0, 1, 0], [], []>} : vector<8x32xf32>, vector<8x32xf32>, vector<8x8xf32> -> vector<8x8xf32>
    %461 = vector.extract_strided_slice %453 {offsets = [0, 0], sizes = [1, 8], strides = [1, 1]} : vector<2x8xf32> to vector<1x8xf32>
    %462 = vector.broadcast %461 : vector<1x8xf32> to vector<8x8xf32>
    %463 = arith.addf %460, %462 : vector<8x8xf32>
    %cst_154 = arith.constant dense<0xFF800000> : vector<8xf32>
    %464 = vector.multi_reduction <maximumf>, %463, %cst_154 [1] : vector<8x8xf32> to vector<8xf32>
    %465 = vector.shape_cast %464 : vector<8xf32> to vector<8x1xf32>
    %466 = vector.broadcast %465 : vector<8x1xf32> to vector<8x8xf32>
    %467 = arith.subf %463, %466 : vector<8x8xf32>
    %468 = math.exp %467 : vector<8x8xf32>
    %cst_155 = arith.constant dense<0.000000e+00> : vector<8xf32>
    %469 = vector.multi_reduction <add>, %468, %cst_155 [1] : vector<8x8xf32> to vector<8xf32>
    %470 = vector.shape_cast %469 : vector<8xf32> to vector<8x1xf32>
    %471 = tpu.reciprocal %470 {approx = true} : vector<8x1xf32> -> vector<8x1xf32>
    %472 = vector.broadcast %471 : vector<8x1xf32> to vector<8x8xf32>
    %473 = arith.mulf %468, %472 : vector<8x8xf32>
    %cst_156 = arith.constant dense<0.000000e+00> : vector<8x32xf32>
    %474 = tpu.matmul %473, %458, %cst_156 {dimension_numbers = #tpu.dot_dimension_numbers<[1], [0], [0], [1], [0, 0, 1, 1], [], []>} : vector<8x8xf32>, vector<8x32xf32>, vector<8x32xf32> -> vector<8x32xf32>
    %475 = vector.extract_strided_slice %452 {offsets = [0, 1, 0], sizes = [8, 1, 32], strides = [1, 1, 1]} : vector<8x2x32xf32> to vector<8x1x32xf32>
    %476 = vector.shape_cast %475 : vector<8x1x32xf32> to vector<8x32xf32>
    %477 = vector.extract_strided_slice %451 {offsets = [0, 1, 0], sizes = [8, 1, 32], strides = [1, 1, 1]} : vector<8x2x32xf32> to vector<8x1x32xf32>
    %478 = vector.shape_cast %477 : vector<8x1x32xf32> to vector<8x32xf32>
    %cst_157 = arith.constant dense<0.000000e+00> : vector<8x32xf32>
    %479 = tpu.matmul %478, %454, %cst_157 {dimension_numbers = #tpu.dot_dimension_numbers<[1], [0], [0], [1], [0, 0, 1, 1], [], []>} : vector<8x32xf32>, vector<32x32xf32>, vector<8x32xf32> -> vector<8x32xf32>
    %cst_158 = arith.constant dense<0.000000e+00> : vector<8x8xf32>
    %480 = tpu.matmul %476, %479, %cst_158 {dimension_numbers = #tpu.dot_dimension_numbers<[1], [1], [0], [0], [0, 0, 1, 0], [], []>} : vector<8x32xf32>, vector<8x32xf32>, vector<8x8xf32> -> vector<8x8xf32>
    %481 = vector.extract_strided_slice %453 {offsets = [1, 0], sizes = [1, 8], strides = [1, 1]} : vector<2x8xf32> to vector<1x8xf32>
    %482 = vector.broadcast %481 : vector<1x8xf32> to vector<8x8xf32>
    %483 = arith.addf %480, %482 : vector<8x8xf32>
    %cst_159 = arith.constant dense<0xFF800000> : vector<8xf32>
    %484 = vector.multi_reduction <maximumf>, %483, %cst_159 [1] : vector<8x8xf32> to vector<8xf32>
    %485 = vector.shape_cast %484 : vector<8xf32> to vector<8x1xf32>
    %486 = vector.broadcast %485 : vector<8x1xf32> to vector<8x8xf32>
    %487 = arith.subf %483, %486 : vector<8x8xf32>
    %488 = math.exp %487 : vector<8x8xf32>
    %cst_160 = arith.constant dense<0.000000e+00> : vector<8xf32>
    %489 = vector.multi_reduction <add>, %488, %cst_160 [1] : vector<8x8xf32> to vector<8xf32>
    %490 = vector.shape_cast %489 : vector<8xf32> to vector<8x1xf32>
    %491 = tpu.reciprocal %490 {approx = true} : vector<8x1xf32> -> vector<8x1xf32>
    %492 = vector.broadcast %491 : vector<8x1xf32> to vector<8x8xf32>
    %493 = arith.mulf %488, %492 : vector<8x8xf32>
    %cst_161 = arith.constant dense<0.000000e+00> : vector<8x32xf32>
    %494 = tpu.matmul %493, %478, %cst_161 {dimension_numbers = #tpu.dot_dimension_numbers<[1], [0], [0], [1], [0, 0, 1, 1], [], []>} : vector<8x8xf32>, vector<8x32xf32>, vector<8x32xf32> -> vector<8x32xf32>
    %495 = tpu.concatenate %456, %476 in 0 : vector<8x32xf32>, vector<8x32xf32> -> vector<16x32xf32>
    %496 = tpu.concatenate %474, %494 in 0 : vector<8x32xf32>, vector<8x32xf32> -> vector<16x32xf32>
    %c0_162 = arith.constant 0 : index
    %c0_163 = arith.constant 0 : index
    %497 = vector.load %arg12[%c0_162, %c0_163] : memref<32x32xf32, #tpu.memory_space<vmem>>, vector<32x32xf32>
    %cst_164 = arith.constant dense<0.000000e+00> : vector<16x32xf32>
    %498 = tpu.matmul %495, %497, %cst_164 {dimension_numbers = #tpu.dot_dimension_numbers<[1], [0], [0], [1], [0, 0, 1, 1], [], []>} : vector<16x32xf32>, vector<32x32xf32>, vector<16x32xf32> -> vector<16x32xf32>
    %c0_165 = arith.constant 0 : index
    %c0_166 = arith.constant 0 : index
    %499 = vector.load %arg13[%c0_165, %c0_166] : memref<32x32xf32, #tpu.memory_space<vmem>>, vector<32x32xf32>
    %cst_167 = arith.constant dense<0.000000e+00> : vector<16x32xf32>
    %500 = tpu.matmul %496, %499, %cst_167 {dimension_numbers = #tpu.dot_dimension_numbers<[1], [0], [0], [1], [0, 0, 1, 1], [], []>} : vector<16x32xf32>, vector<32x32xf32>, vector<16x32xf32> -> vector<16x32xf32>
    %501 = arith.addf %498, %500 : vector<16x32xf32>
    %502 = math.tanh %501 : vector<16x32xf32>
    %c0_168 = arith.constant 0 : index
    %c0_169 = arith.constant 0 : index
    %503 = vector.load %arg14[%c0_168, %c0_169] : memref<32x128xf32, #tpu.memory_space<vmem>>, vector<32x128xf32>
    %cst_170 = arith.constant dense<0.000000e+00> : vector<16x128xf32>
    %504 = tpu.matmul %502, %503, %cst_170 {dimension_numbers = #tpu.dot_dimension_numbers<[1], [0], [0], [1], [0, 0, 1, 1], [], []>} : vector<16x32xf32>, vector<32x128xf32>, vector<16x128xf32> -> vector<16x128xf32>
    %c0_171 = arith.constant 0 : index
    %c0_172 = arith.constant 0 : index
    %505 = vector.load %arg15[%c0_171, %c0_172] : memref<1x128xf32, #tpu.memory_space<vmem>>, vector<1x128xf32>
    %506 = vector.broadcast %505 : vector<1x128xf32> to vector<16x128xf32>
    %507 = arith.addf %504, %506 : vector<16x128xf32>
    %c0_173 = arith.constant 0 : index
    %c0_174 = arith.constant 0 : index
    %508 = vector.load %arg16[%c0_173, %c0_174] : memref<16x128xf32, #tpu.memory_space<vmem>>, vector<16x128xf32>
    tpu.vector_store %arg16[%c0_173, %c0_174], %507 {strides = array<i32>} : memref<16x128xf32, #tpu.memory_space<vmem>>, vector<16x128xf32>,
    return
  }
}

</mosaic_0001>

<llo_original>
// kernel: model_forward.1
$region0: #{model_forward.1}
  #allocation0 [shape = 'u32[]', space=smem, size = 0x4, offset = 0x4, fixed_abs, tag = 'smem constant byte address 0x4 - core index']
  #allocation1 [shape = 'u32[144,128]{1,0:T(1,128)}', space=vmem, size = 0x12000, scoped, tag = 'internal scratch']
  #allocation2 [shape = 'f32[16,96]{1,0:T(8,128)}', space=vmem, size = 0x2000, scoped, tag = 'scratch operand']
  #allocation3 [shape = 'f32[16,96]{1,0:T(8,128)}', space=vmem, size = 0x2000, scoped, tag = 'scratch operand']
  #allocation4 [shape = 'f32[8,2,32]{2,1,0:T(2,128)}', space=vmem, size = 0x2000, scoped, tag = 'scratch operand']
  #allocation5 [shape = 'f32[8,2,32]{2,1,0:T(2,128)}', space=vmem, size = 0x2000, scoped, tag = 'scratch operand']
  %s0 = inlined_call_operand.vmem [shape: f32[16,32], index: 0, kind: input, shape index: {}]
  %s1 = inlined_call_operand.vmem [shape: f32[16,32], index: 1, kind: input, shape index: {}]
  %s2 = inlined_call_operand.vmem [shape: f32[2,8], index: 2, kind: input, shape index: {}]
  %s3 = inlined_call_operand.vmem [shape: f32[32,96], index: 3, kind: input, shape index: {}]
  %s4 = inlined_call_operand.vmem [shape: f32[32,96], index: 4, kind: input, shape index: {}]
  %s5 = inlined_call_operand.vmem [shape: f32[1,96], index: 5, kind: input, shape index: {}]
  %s6 = inlined_call_operand.vmem [shape: f32[1,96], index: 6, kind: input, shape index: {}]
  %s7 = inlined_call_operand.vmem [shape: f32[32,96], index: 7, kind: input, shape index: {}]
  %s8 = inlined_call_operand.vmem [shape: f32[32,96], index: 8, kind: input, shape index: {}]
  %s9 = inlined_call_operand.vmem [shape: f32[1,96], index: 9, kind: input, shape index: {}]
  %s10 = inlined_call_operand.vmem [shape: f32[1,96], index: 10, kind: input, shape index: {}]
  %s11 = inlined_call_operand.vmem [shape: f32[32,32], index: 11, kind: input, shape index: {}]
  %s12 = inlined_call_operand.vmem [shape: f32[32,32], index: 12, kind: input, shape index: {}]
  %s13 = inlined_call_operand.vmem [shape: f32[32,32], index: 13, kind: input, shape index: {}]
  %s14 = inlined_call_operand.vmem [shape: f32[32,128], index: 14, kind: input, shape index: {}]
  %s15 = inlined_call_operand.vmem [shape: f32[1,128], index: 15, kind: input, shape index: {}]
  %s16 = inlined_call_operand.vmem [shape: f32[16,128], index: 16, kind: output, shape index: {}]
  %s17 = sld [smem:[#allocation0]]
  $region74: #{model_forward.1} parent=0
    _
  %s19 = ssub.s32 1, %s17
  %s20 = scalar_select 0, %s19, %s17
  // Predicated region
  $region2: #{model_forward.1} parent=0 // pred_check
    _
  $region3: #{model_forward.1} parent=0 // pred_check_branch
    %22 = sbr.rel (0) target = $region5
  $region4: #{model_forward.1} parent=0 // pred_region
    _
  $region5: #{model_forward.1} parent=0 // pred_fallthru
    _
  // Predicated region
  $region6: #{model_forward.1} parent=0 // pred_check
    _
  $region7: #{model_forward.1} parent=0 // pred_check_branch
    %24 = sbr.rel (0) target = $region9
  $region8: #{model_forward.1} parent=0 // pred_region
    _
  $region9: #{model_forward.1} parent=0 // pred_fallthru
    _
  // Predicated region
  $region10: #{model_forward.1} parent=0 // pred_check
    _
  $region11: #{model_forward.1} parent=0 // pred_check_branch
    %26 = sbr.rel (0) target = $region13
  $region12: #{model_forward.1} parent=0 // pred_region
    _
  $region13: #{model_forward.1} parent=0 // pred_fallthru
    _
  // Predicated region
  $region14: #{model_forward.1} parent=0 // pred_check
    _
  $region15: #{model_forward.1} parent=0 // pred_check_branch
    %28 = sbr.rel (0) target = $region17
  $region16: #{model_forward.1} parent=0 // pred_region
    _
  $region17: #{model_forward.1} parent=0 // pred_fallthru
    _
  // Predicated region
  $region18: #{model_forward.1} parent=0 // pred_check
    _
  $region19: #{model_forward.1} parent=0 // pred_check_branch
    %30 = sbr.rel (0) target = $region21
  $region20: #{model_forward.1} parent=0 // pred_region
    _
  $region21: #{model_forward.1} parent=0 // pred_fallthru
    _
  // Predicated region
  $region22: #{model_forward.1} parent=0 // pred_check
    _
  $region23: #{model_forward.1} parent=0 // pred_check_branch
    %32 = sbr.rel (0) target = $region25
  $region24: #{model_forward.1} parent=0 // pred_region
    _
  $region25: #{model_forward.1} parent=0 // pred_fallthru
    _
  // Predicated region
  $region26: #{model_forward.1} parent=0 // pred_check
    _
  $region27: #{model_forward.1} parent=0 // pred_check_branch
    %34 = sbr.rel (0) target = $region29
  $region28: #{model_forward.1} parent=0 // pred_region
    _
  $region29: #{model_forward.1} parent=0 // pred_fallthru
    _
  // Predicated region
  $region30: #{model_forward.1} parent=0 // pred_check
    _
  $region31: #{model_forward.1} parent=0 // pred_check_branch
    %36 = sbr.rel (0) target = $region33
  $region32: #{model_forward.1} parent=0 // pred_region
    _
  $region33: #{model_forward.1} parent=0 // pred_fallthru
    _
  // Predicated region
  $region34: #{model_forward.1} parent=0 // pred_check
    _
  $region35: #{model_forward.1} parent=0 // pred_check_branch
    %38 = sbr.rel (0) target = $region37
  $region36: #{model_forward.1} parent=0 // pred_region
    _
  $region37: #{model_forward.1} parent=0 // pred_fallthru
    _
  // Predicated region
  $region38: #{model_forward.1} parent=0 // pred_check
    _
  $region39: #{model_forward.1} parent=0 // pred_check_branch
    %40 = sbr.rel (0) target = $region41
  $region40: #{model_forward.1} parent=0 // pred_region
    _
  $region41: #{model_forward.1} parent=0 // pred_fallthru
    _
  // Predicated region
  $region42: #{model_forward.1} parent=0 // pred_check
    _
  $region43: #{model_forward.1} parent=0 // pred_check_branch
    %42 = sbr.rel (0) target = $region45
  $region44: #{model_forward.1} parent=0 // pred_region
    _
  $region45: #{model_forward.1} parent=0 // pred_fallthru
    _
  // Predicated region
  $region46: #{model_forward.1} parent=0 // pred_check
    _
  $region47: #{model_forward.1} parent=0 // pred_check_branch
    %44 = sbr.rel (0) target = $region49
  $region48: #{model_forward.1} parent=0 // pred_region
    _
  $region49: #{model_forward.1} parent=0 // pred_fallthru
    _
  // Predicated region
  $region50: #{model_forward.1} parent=0 // pred_check
    _
  $region51: #{model_forward.1} parent=0 // pred_check_branch
    %46 = sbr.rel (0) target = $region53
  $region52: #{model_forward.1} parent=0 // pred_region
    _
  $region53: #{model_forward.1} parent=0 // pred_fallthru
    _
  // Predicated region
  $region54: #{model_forward.1} parent=0 // pred_check
    _
  $region55: #{model_forward.1} parent=0 // pred_check_branch
    %48 = sbr.rel (0) target = $region57
  $region56: #{model_forward.1} parent=0 // pred_region
    _
  $region57: #{model_forward.1} parent=0 // pred_fallthru
    _
  // Predicated region
  $region58: #{model_forward.1} parent=0 // pred_check
    _
  $region59: #{model_forward.1} parent=0 // pred_check_branch
    %50 = sbr.rel (0) target = $region61
  $region60: #{model_forward.1} parent=0 // pred_region
    _
  $region61: #{model_forward.1} parent=0 // pred_fallthru
    _
  // Predicated region
  $region62: #{model_forward.1} parent=0 // pred_check
    _
  $region63: #{model_forward.1} parent=0 // pred_check_branch
    %52 = sbr.rel (0) target = $region65
  $region64: #{model_forward.1} parent=0 // pred_region
    _
  $region65: #{model_forward.1} parent=0 // pred_fallthru
    _
  %v53 = vld [vmem:[%s0] sm:$0xff]
  %v54 = vld [vmem:[%s0 + $0x8] sm:$0xff]
  %v55 = vld [vmem:[%s3] sm:$0xff]
  %v56 = vld [vmem:[%s3 + $0x8] sm:$0xff]
  %v57 = vld [vmem:[%s3 + $0x10] sm:$0xff]
  %v58 = vld [vmem:[%s3 + $0x18] sm:$0xff]
  %v59 = vld [vmem:[%s5] sm:$0x1]
  %v61 = vlaneseq
  %v62 = vshrl.u32 %v61, 7
  %v63 = vsub.s32 0, %v62
  %v64 = vrot.slane %v59, %v63
  %vm66 = vcmask 261120
  %v68 = vsel %vm66, %v53, 0
  %v71 = vsel %vm66, %v54, 0
  %73 = vmatprep.subr.mxu0 0.0
  %74 = vmatpush1.msra.mxu0 %v55
  %75 = vmatprep.subr.mxu0 0.0
  %76 = vmatpush1.msra.mxu0 %v56
  %77 = vmatprep.subr.mxu0 0.0
  %78 = vmatpush1.msra.mxu0 %v57
  %79 = vmatprep.subr.mxu0 0.0
  %80 = vmatpush1.msra.mxu0 %v58
  %81 = vmatprep.subr.mxu0 0.0
  %82 = vmatpush1.msra.mxu0 0.0
  %83 = vmatprep.subr.mxu0 0.0
  %84 = vmatpush1.msra.mxu0 0.0
  %85 = vmatprep.subr.mxu0 0.0
  %86 = vmatpush1.msra.mxu0 0.0
  %87 = vmatprep.subr.mxu0 0.0
  %88 = vmatpush1.msra.mxu0 0.0
  %89 = vmatprep.subr.mxu0 0.0
  %90 = vmatpush1.msra.mxu0 0.0
  %91 = vmatprep.subr.mxu0 0.0
  %92 = vmatpush1.msra.mxu0 0.0
  %93 = vmatprep.subr.mxu0 0.0
  %94 = vmatpush1.msra.mxu0 0.0
  %95 = vmatprep.subr.mxu0 0.0
  %96 = vmatpush1.msra.mxu0 0.0
  %97 = vmatprep.subr.mxu0 0.0
  %98 = vmatpush1.msra.mxu0 0.0
  %99 = vmatprep.subr.mxu0 0.0
  %100 = vmatpush1.msra.mxu0 0.0
  %101 = vmatprep.subr.mxu0 0.0
  %102 = vmatpush1.msra.mxu0 0.0
  %103 = vmatprep.subr.mxu0 0.0
  %104 = vmatpush1.msra.mxu0 0.0
  %105 = vmatprep.subr.mxu0 0.0
  %106 = vmatpush1.msra.mxu0 0.0
  %107 = vmatprep.subr.mxu0 0.0
  %108 = vmatpush1.msra.mxu0 0.0
  %109 = vmatprep.subr.mxu0 0.0
  %110 = vmatpush1.msra.mxu0 0.0
  %111 = vmatprep.subr.mxu0 0.0
  %112 = vmatpush1.msra.mxu0 0.0
  %113 = vmatprep.subr.mxu0 0.0
  %114 = vmatpush1.msra.mxu0 0.0
  %115 = vmatprep.subr.mxu0 0.0
  %116 = vmatpush1.msra.mxu0 0.0
  %117 = vmatprep.subr.mxu0 0.0
  %118 = vmatpush1.msra.mxu0 0.0
  %119 = vmatprep.subr.mxu0 0.0
  %120 = vmatpush1.msra.mxu0 0.0
  %121 = vmatprep.subr.mxu0 0.0
  %122 = vmatpush1.msra.mxu0 0.0
  %123 = vmatprep.subr.mxu0 0.0
  %124 = vmatpush1.msra.mxu0 0.0
  %125 = vmatprep.subr.mxu0 0.0
  %126 = vmatpush1.msra.mxu0 0.0
  %127 = vmatprep.subr.mxu0 0.0
  %128 = vmatpush1.msra.mxu0 0.0
  %129 = vmatprep.subr.mxu0 0.0
  %130 = vmatpush1.msra.mxu0 0.0
  %131 = vmatprep.subr.mxu0 0.0
  %132 = vmatpush1.msra.mxu0 0.0
  %133 = vmatprep.subr.mxu0 0.0
  %134 = vmatpush1.msra.mxu0 0.0
  %135 = vmatprep.subr.mxu0 0.0
  %136 = vmatpush1.msra.mxu0 0.0
  %137 = vmatprep.mubr.f32.mxu0 0.0
  %138 = vmatmul.mubr.f32.gmra.mrb[0].mxu0 %v68
  %v139 = vpop.f32.mrb[0].mxu0
  %v140 = vadd.f32 %v64, %v139
  %v141 = vpop.f32.mrb[0].mxu0
  %142 = vmatprep.mubr.f32.mxu0 0.0
  %143 = vmatmul.mubr.f32.gmra.mrb[0].mxu0 %v71
  %v144 = vpop.f32.mrb[0].mxu0
  %v145 = vadd.f32 %v64, %v144
  %v146 = vpop.f32.mrb[0].mxu0
  %147 = vdwg.mxu0
  %vm148 = vcmask 785408
  %149 = vst.msk [vmem:[#allocation2] sm:$0xff] %vm148, %v140
  %150 = vst.msk [vmem:[#allocation2 + $0x8] sm:$0xff] %vm148, %v145
  %v151 = vld [vmem:[%s1] sm:$0xff]
  %v152 = vld [vmem:[%s1 + $0x8] sm:$0xff]
  %v153 = vld [vmem:[%s7] sm:$0xff]
  %v154 = vld [vmem:[%s7 + $0x8] sm:$0xff]
  %v155 = vld [vmem:[%s7 + $0x10] sm:$0xff]
  %v156 = vld [vmem:[%s7 + $0x18] sm:$0xff]
  %v157 = vld [vmem:[%s9] sm:$0x1]
  %v159 = vlaneseq
  %v160 = vshrl.u32 %v159, 7
  %v161 = vsub.s32 0, %v160
  %v162 = vrot.slane %v157, %v161
  %v165 = vsel %vm66, %v151, 0
  %v168 = vsel %vm66, %v152, 0
  %170 = vmatprep.subr.mxu0 0.0
  %171 = vmatpush1.msra.mxu0 %v153
  %172 = vmatprep.subr.mxu0 0.0
  %173 = vmatpush1.msra.mxu0 %v154
  %174 = vmatprep.subr.mxu0 0.0
  %175 = vmatpush1.msra.mxu0 %v155
  %176 = vmatprep.subr.mxu0 0.0
  %177 = vmatpush1.msra.mxu0 %v156
  %178 = vmatprep.subr.mxu0 0.0
  %179 = vmatpush1.msra.mxu0 0.0
  %180 = vmatprep.subr.mxu0 0.0
  %181 = vmatpush1.msra.mxu0 0.0
  %182 = vmatprep.subr.mxu0 0.0
  %183 = vmatpush1.msra.mxu0 0.0
  %184 = vmatprep.subr.mxu0 0.0
  %185 = vmatpush1.msra.mxu0 0.0
  %186 = vmatprep.subr.mxu0 0.0
  %187 = vmatpush1.msra.mxu0 0.0
  %188 = vmatprep.subr.mxu0 0.0
  %189 = vmatpush1.msra.mxu0 0.0
  %190 = vmatprep.subr.mxu0 0.0
  %191 = vmatpush1.msra.mxu0 0.0
  %192 = vmatprep.subr.mxu0 0.0
  %193 = vmatpush1.msra.mxu0 0.0
  %194 = vmatprep.subr.mxu0 0.0
  %195 = vmatpush1.msra.mxu0 0.0
  %196 = vmatprep.subr.mxu0 0.0
  %197 = vmatpush1.msra.mxu0 0.0
  %198 = vmatprep.subr.mxu0 0.0
  %199 = vmatpush1.msra.mxu0 0.0
  %200 = vmatprep.subr.mxu0 0.0
  %201 = vmatpush1.msra.mxu0 0.0
  %202 = vmatprep.subr.mxu0 0.0
  %203 = vmatpush1.msra.mxu0 0.0
  %204 = vmatprep.subr.mxu0 0.0
  %205 = vmatpush1.msra.mxu0 0.0
  %206 = vmatprep.subr.mxu0 0.0
  %207 = vmatpush1.msra.mxu0 0.0
  %208 = vmatprep.subr.mxu0 0.0
  %209 = vmatpush1.msra.mxu0 0.0
  %210 = vmatprep.subr.mxu0 0.0
  %211 = vmatpush1.msra.mxu0 0.0
  %212 = vmatprep.subr.mxu0 0.0
  %213 = vmatpush1.msra.mxu0 0.0
  %214 = vmatprep.subr.mxu0 0.0
  %215 = vmatpush1.msra.mxu0 0.0
  %216 = vmatprep.subr.mxu0 0.0
  %217 = vmatpush1.msra.mxu0 0.0
  %218 = vmatprep.subr.mxu0 0.0
  %219 = vmatpush1.msra.mxu0 0.0
  %220 = vmatprep.subr.mxu0 0.0
  %221 = vmatpush1.msra.mxu0 0.0
  %222 = vmatprep.subr.mxu0 0.0
  %223 = vmatpush1.msra.mxu0 0.0
  %224 = vmatprep.subr.mxu0 0.0
  %225 = vmatpush1.msra.mxu0 0.0
  %226 = vmatprep.subr.mxu0 0.0
  %227 = vmatpush1.msra.mxu0 0.0
  %228 = vmatprep.subr.mxu0 0.0
  %229 = vmatpush1.msra.mxu0 0.0
  %230 = vmatprep.subr.mxu0 0.0
  %231 = vmatpush1.msra.mxu0 0.0
  %232 = vmatprep.subr.mxu0 0.0
  %233 = vmatpush1.msra.mxu0 0.0
  %234 = vmatprep.mubr.f32.mxu0 0.0
  %235 = vmatmul.mubr.f32.gmra.mrb[0].mxu0 %v165
  %v236 = vpop.f32.mrb[0].mxu0
  %v237 = vadd.f32 %v162, %v236
  %v238 = vpop.f32.mrb[0].mxu0
  %239 = vmatprep.mubr.f32.mxu0 0.0
  %240 = vmatmul.mubr.f32.gmra.mrb[0].mxu0 %v168
  %v241 = vpop.f32.mrb[0].mxu0
  %v242 = vadd.f32 %v162, %v241
  %v243 = vpop.f32.mrb[0].mxu0
  %244 = vdwg.mxu0
  %245 = vst.msk [vmem:[#allocation3] sm:$0xff] %vm148, %v237
  %246 = vst.msk [vmem:[#allocation3 + $0x8] sm:$0xff] %vm148, %v242
  %v247 = vld [vmem:[%s4] sm:$0xff]
  %v248 = vld [vmem:[%s4 + $0x8] sm:$0xff]
  %v249 = vld [vmem:[%s4 + $0x10] sm:$0xff]
  %v250 = vld [vmem:[%s4 + $0x18] sm:$0xff]
  %v251 = vld [vmem:[%s6] sm:$0x1]
  %v252 = vld [vmem:[%s8] sm:$0xff]
  %v253 = vld [vmem:[%s8 + $0x8] sm:$0xff]
  %v254 = vld [vmem:[%s8 + $0x10] sm:$0xff]
  %v255 = vld [vmem:[%s8 + $0x18] sm:$0xff]
  %v256 = vld [vmem:[%s10] sm:$0x1]
  %v257 = vld [vmem:[#allocation2] sm:$0x3]
  %v259 = vlaneseq
  %v260 = vshrl.u32 %v259, 7
  %v261 = vsub.s32 0, %v260
  %v262 = vrot.slane %v251, %v261
  %v265 = vsel %vm66, 0.0, 0
  %267 = vmatprep.subr.mxu0 0.0
  %268 = vmatpush1.msra.mxu0 %v247
  %269 = vmatprep.subr.mxu0 0.0
  %270 = vmatpush1.msra.mxu0 %v248
  %271 = vmatprep.subr.mxu0 0.0
  %272 = vmatpush1.msra.mxu0 %v249
  %273 = vmatprep.subr.mxu0 0.0
  %274 = vmatpush1.msra.mxu0 %v250
  %275 = vmatprep.subr.mxu0 0.0
  %276 = vmatpush1.msra.mxu0 0.0
  %277 = vmatprep.subr.mxu0 0.0
  %278 = vmatpush1.msra.mxu0 0.0
  %279 = vmatprep.subr.mxu0 0.0
  %280 = vmatpush1.msra.mxu0 0.0
  %281 = vmatprep.subr.mxu0 0.0
  %282 = vmatpush1.msra.mxu0 0.0
  %283 = vmatprep.subr.mxu0 0.0
  %284 = vmatpush1.msra.mxu0 0.0
  %285 = vmatprep.subr.mxu0 0.0
  %286 = vmatpush1.msra.mxu0 0.0
  %287 = vmatprep.subr.mxu0 0.0
  %288 = vmatpush1.msra.mxu0 0.0
  %289 = vmatprep.subr.mxu0 0.0
  %290 = vmatpush1.msra.mxu0 0.0
  %291 = vmatprep.subr.mxu0 0.0
  %292 = vmatpush1.msra.mxu0 0.0
  %293 = vmatprep.subr.mxu0 0.0
  %294 = vmatpush1.msra.mxu0 0.0
  %295 = vmatprep.subr.mxu0 0.0
  %296 = vmatpush1.msra.mxu0 0.0
  %297 = vmatprep.subr.mxu0 0.0
  %298 = vmatpush1.msra.mxu0 0.0
  %299 = vmatprep.subr.mxu0 0.0
  %300 = vmatpush1.msra.mxu0 0.0
  %301 = vmatprep.subr.mxu0 0.0
  %302 = vmatpush1.msra.mxu0 0.0
  %303 = vmatprep.subr.mxu0 0.0
  %304 = vmatpush1.msra.mxu0 0.0
  %305 = vmatprep.subr.mxu0 0.0
  %306 = vmatpush1.msra.mxu0 0.0
  %307 = vmatprep.subr.mxu0 0.0
  %308 = vmatpush1.msra.mxu0 0.0
  %309 = vmatprep.subr.mxu0 0.0
  %310 = vmatpush1.msra.mxu0 0.0
  %311 = vmatprep.subr.mxu0 0.0
  %312 = vmatpush1.msra.mxu0 0.0
  %313 = vmatprep.subr.mxu0 0.0
  %314 = vmatpush1.msra.mxu0 0.0
  %315 = vmatprep.subr.mxu0 0.0
  %316 = vmatpush1.msra.mxu0 0.0
  %317 = vmatprep.subr.mxu0 0.0
  %318 = vmatpush1.msra.mxu0 0.0
  %319 = vmatprep.subr.mxu0 0.0
  %320 = vmatpush1.msra.mxu0 0.0
  %321 = vmatprep.subr.mxu0 0.0
  %322 = vmatpush1.msra.mxu0 0.0
  %323 = vmatprep.subr.mxu0 0.0
  %324 = vmatpush1.msra.mxu0 0.0
  %325 = vmatprep.subr.mxu0 0.0
  %326 = vmatpush1.msra.mxu0 0.0
  %327 = vmatprep.subr.mxu0 0.0
  %328 = vmatpush1.msra.mxu0 0.0
  %329 = vmatprep.subr.mxu0 0.0
  %330 = vmatpush1.msra.mxu0 0.0
  %331 = vmatprep.mubr.f32.mxu0 0.0
  %332 = vmatmul.mubr.f32.gmra.mrb[0].mxu0 %v265
  %v333 = vpop.f32.mrb[0].mxu0
  %v334 = vadd.f32 %v262, %v333
  %v335 = vpop.f32.mrb[0].mxu0
  %336 = vdwg.mxu0
  %v337 = vadd.f32 %v257, %v334
  %v338 = vxor.u32 %v337, 2147483648
  %v339 = vmul.f32 %v338, 1.442695
  %v340 = vpow.pop %v339
  %v341 = vadd.f32 %v340, 1.0
  %v342 = vrcp.pop %v341
  %v343 = vmul.f32 1.0, %v342
  %345 = vrot.lane.b32.xlu0 %v334, 64
  %v346 = vpop.permute.xlu0 %345
  %v348 = vmul.f32 %v343, %v346
  %350 = vrot.lane.b32.xlu0 %v348, 64
  %v351 = vpop.permute.xlu0 %350
  %v353 = vadd.f32 %v257, %v351
  %v354 = vtanh.pop %v353
  %v355 = vsub.f32 1.0, %v343
  %357 = vrot.lane.b32.xlu0 %v354, 96
  %v358 = vpop.permute.xlu0 %357
  %v360 = vmul.f32 %v355, %v358
  %v361 = vmul.f32 %v343, 0.0
  %v362 = vadd.f32 %v360, %v361
  %364 = vrot.lane.b32.xlu0 %v362, 96
  %v365 = vpop.permute.xlu0 %364
  %vm367 = vcmask 254976
  %368 = vst.msk [vmem:[#allocation4] sm:$0x3] %vm367, %v365
  %v369 = vld [vmem:[#allocation2 + $0x2] sm:$0x3]
  %v370 = vsel %vm66, %v365, 0
  %372 = vmatprep.subr.mxu0 0.0
  %373 = vmatpush1.msra.mxu0 %v247
  %374 = vmatprep.subr.mxu0 0.0
  %375 = vmatpush1.msra.mxu0 %v248
  %376 = vmatprep.subr.mxu0 0.0
  %377 = vmatpush1.msra.mxu0 %v249
  %378 = vmatprep.subr.mxu0 0.0
  %379 = vmatpush1.msra.mxu0 %v250
  %380 = vmatprep.subr.mxu0 0.0
  %381 = vmatpush1.msra.mxu0 0.0
  %382 = vmatprep.subr.mxu0 0.0
  %383 = vmatpush1.msra.mxu0 0.0
  %384 = vmatprep.subr.mxu0 0.0
  %385 = vmatpush1.msra.mxu0 0.0
  %386 = vmatprep.subr.mxu0 0.0
  %387 = vmatpush1.msra.mxu0 0.0
  %388 = vmatprep.subr.mxu0 0.0
  %389 = vmatpush1.msra.mxu0 0.0
  %390 = vmatprep.subr.mxu0 0.0
  %391 = vmatpush1.msra.mxu0 0.0
  %392 = vmatprep.subr.mxu0 0.0
  %393 = vmatpush1.msra.mxu0 0.0
  %394 = vmatprep.subr.mxu0 0.0
  %395 = vmatpush1.msra.mxu0 0.0
  %396 = vmatprep.subr.mxu0 0.0
  %397 = vmatpush1.msra.mxu0 0.0
  %398 = vmatprep.subr.mxu0 0.0
  %399 = vmatpush1.msra.mxu0 0.0
  %400 = vmatprep.subr.mxu0 0.0
  %401 = vmatpush1.msra.mxu0 0.0
  %402 = vmatprep.subr.mxu0 0.0
  %403 = vmatpush1.msra.mxu0 0.0
  %404 = vmatprep.subr.mxu0 0.0
  %405 = vmatpush1.msra.mxu0 0.0
  %406 = vmatprep.subr.mxu0 0.0
  %407 = vmatpush1.msra.mxu0 0.0
  %408 = vmatprep.subr.mxu0 0.0
  %409 = vmatpush1.msra.mxu0 0.0
  %410 = vmatprep.subr.mxu0 0.0
  %411 = vmatpush1.msra.mxu0 0.0
  %412 = vmatprep.subr.mxu0 0.0
  %413 = vmatpush1.msra.mxu0 0.0
  %414 = vmatprep.subr.mxu0 0.0
  %415 = vmatpush1.msra.mxu0 0.0
  %416 = vmatprep.subr.mxu0 0.0
  %417 = vmatpush1.msra.mxu0 0.0
  %418 = vmatprep.subr.mxu0 0.0
  %419 = vmatpush1.msra.mxu0 0.0
  %420 = vmatprep.subr.mxu0 0.0
  %421 = vmatpush1.msra.mxu0 0.0
  %422 = vmatprep.subr.mxu0 0.0
  %423 = vmatpush1.msra.mxu0 0.0
  %424 = vmatprep.subr.mxu0 0.0
  %425 = vmatpush1.msra.mxu0 0.0
  %426 = vmatprep.subr.mxu0 0.0
  %427 = vmatpush1.msra.mxu0 0.0
  %428 = vmatprep.subr.mxu0 0.0
  %429 = vmatpush1.msra.mxu0 0.0
  %430 = vmatprep.subr.mxu0 0.0
  %431 = vmatpush1.msra.mxu0 0.0
  %432 = vmatprep.subr.mxu0 0.0
  %433 = vmatpush1.msra.mxu0 0.0
  %434 = vmatprep.subr.mxu0 0.0
  %435 = vmatpush1.msra.mxu0 0.0
  %436 = vmatprep.mubr.f32.mxu0 0.0
  %437 = vmatmul.mubr.f32.gmra.mrb[0].mxu0 %v370
  %v438 = vpop.f32.mrb[0].mxu0
  %v439 = vadd.f32 %v262, %v438
  %v440 = vpop.f32.mrb[0].mxu0
  %441 = vdwg.mxu0
  %v442 = vadd.f32 %v369, %v439
  %v443 = vxor.u32 %v442, 2147483648
  %v444 = vmul.f32 %v443, 1.442695
  %v445 = vpow.pop %v444
  %v446 = vadd.f32 %v445, 1.0
  %v447 = vrcp.pop %v446
  %v448 = vmul.f32 1.0, %v447
  %450 = vrot.lane.b32.xlu0 %v439, 64
  %v451 = vpop.permute.xlu0 %450
  %v453 = vmul.f32 %v448, %v451
  %455 = vrot.lane.b32.xlu0 %v453, 64
  %v456 = vpop.permute.xlu0 %455
  %v458 = vadd.f32 %v369, %v456
  %v459 = vtanh.pop %v458
  %v460 = vsub.f32 1.0, %v448
  %462 = vrot.lane.b32.xlu0 %v459, 96
  %v463 = vpop.permute.xlu0 %462
  %v465 = vmul.f32 %v460, %v463
  %v466 = vmul.f32 %v448, %v362
  %v467 = vadd.f32 %v465, %v466
  %469 = vrot.lane.b32.xlu0 %v467, 96
  %v470 = vpop.permute.xlu0 %469
  %s472 = scalar_lea.vmem [#allocation4], 2
  %473 = vst.msk [vmem:[%s472] sm:$0x3] %vm367, %v470
  %v474 = vld [vmem:[#allocation2 + $0x4] sm:$0x3]
  %v475 = vsel %vm66, %v470, 0
  %477 = vmatprep.subr.mxu0 0.0
  %478 = vmatpush1.msra.mxu0 %v247
  %479 = vmatprep.subr.mxu0 0.0
  %480 = vmatpush1.msra.mxu0 %v248
  %481 = vmatprep.subr.mxu0 0.0
  %482 = vmatpush1.msra.mxu0 %v249
  %483 = vmatprep.subr.mxu0 0.0
  %484 = vmatpush1.msra.mxu0 %v250
  %485 = vmatprep.subr.mxu0 0.0
  %486 = vmatpush1.msra.mxu0 0.0
  %487 = vmatprep.subr.mxu0 0.0
  %488 = vmatpush1.msra.mxu0 0.0
  %489 = vmatprep.subr.mxu0 0.0
  %490 = vmatpush1.msra.mxu0 0.0
  %491 = vmatprep.subr.mxu0 0.0
  %492 = vmatpush1.msra.mxu0 0.0
  %493 = vmatprep.subr.mxu0 0.0
  %494 = vmatpush1.msra.mxu0 0.0
  %495 = vmatprep.subr.mxu0 0.0
  %496 = vmatpush1.msra.mxu0 0.0
  %497 = vmatprep.subr.mxu0 0.0
  %498 = vmatpush1.msra.mxu0 0.0
  %499 = vmatprep.subr.mxu0 0.0
  %500 = vmatpush1.msra.mxu0 0.0
  %501 = vmatprep.subr.mxu0 0.0
  %502 = vmatpush1.msra.mxu0 0.0
  %503 = vmatprep.subr.mxu0 0.0
  %504 = vmatpush1.msra.mxu0 0.0
  %505 = vmatprep.subr.mxu0 0.0
  %506 = vmatpush1.msra.mxu0 0.0
  %507 = vmatprep.subr.mxu0 0.0
  %508 = vmatpush1.msra.mxu0 0.0
  %509 = vmatprep.subr.mxu0 0.0
  %510 = vmatpush1.msra.mxu0 0.0
  %511 = vmatprep.subr.mxu0 0.0
  %512 = vmatpush1.msra.mxu0 0.0
  %513 = vmatprep.subr.mxu0 0.0
  %514 = vmatpush1.msra.mxu0 0.0
  %515 = vmatprep.subr.mxu0 0.0
  %516 = vmatpush1.msra.mxu0 0.0
  %517 = vmatprep.subr.mxu0 0.0
  %518 = vmatpush1.msra.mxu0 0.0
  %519 = vmatprep.subr.mxu0 0.0
  %520 = vmatpush1.msra.mxu0 0.0
  %521 = vmatprep.subr.mxu0 0.0
  %522 = vmatpush1.msra.mxu0 0.0
  %523 = vmatprep.subr.mxu0 0.0
  %524 = vmatpush1.msra.mxu0 0.0
  %525 = vmatprep.subr.mxu0 0.0
  %526 = vmatpush1.msra.mxu0 0.0
  %527 = vmatprep.subr.mxu0 0.0
  %528 = vmatpush1.msra.mxu0 0.0
  %529 = vmatprep.subr.mxu0 0.0
  %530 = vmatpush1.msra.mxu0 0.0
  %531 = vmatprep.subr.mxu0 0.0
  %532 = vmatpush1.msra.mxu0 0.0
  %533 = vmatprep.subr.mxu0 0.0
  %534 = vmatpush1.msra.mxu0 0.0
  %535 = vmatprep.subr.mxu0 0.0
  %536 = vmatpush1.msra.mxu0 0.0
  %537 = vmatprep.subr.mxu0 0.0
  %538 = vmatpush1.msra.mxu0 0.0
  %539 = vmatprep.subr.mxu0 0.0
  %540 = vmatpush1.msra.mxu0 0.0
  %541 = vmatprep.mubr.f32.mxu0 0.0
  %542 = vmatmul.mubr.f32.gmra.mrb[0].mxu0 %v475
  %v543 = vpop.f32.mrb[0].mxu0
  %v544 = vadd.f32 %v262, %v543
  %v545 = vpop.f32.mrb[0].mxu0
  %546 = vdwg.mxu0
  %v547 = vadd.f32 %v474, %v544
  %v548 = vxor.u32 %v547, 2147483648
  %v549 = vmul.f32 %v548, 1.442695
  %v550 = vpow.pop %v549
  %v551 = vadd.f32 %v550, 1.0
  %v552 = vrcp.pop %v551
  %v553 = vmul.f32 1.0, %v552
  %555 = vrot.lane.b32.xlu0 %v544, 64
  %v556 = vpop.permute.xlu0 %555
  %v558 = vmul.f32 %v553, %v556
  %560 = vrot.lane.b32.xlu0 %v558, 64
  %v561 = vpop.permute.xlu0 %560
  %v563 = vadd.f32 %v474, %v561
  %v564 = vtanh.pop %v563
  %v565 = vsub.f32 1.0, %v553
  %567 = vrot.lane.b32.xlu0 %v564, 96
  %v568 = vpop.permute.xlu0 %567
  %v570 = vmul.f32 %v565, %v568
  %v571 = vmul.f32 %v553, %v467
  %v572 = vadd.f32 %v570, %v571
  %574 = vrot.lane.b32.xlu0 %v572, 96
  %v575 = vpop.permute.xlu0 %574
  %s577 = scalar_lea.vmem [#allocation4], 4
  %578 = vst.msk [vmem:[%s577] sm:$0x3] %vm367, %v575
  %v579 = vld [vmem:[#allocation2 + $0x6] sm:$0x3]
  %v580 = vsel %vm66, %v575, 0
  %582 = vmatprep.subr.mxu0 0.0
  %583 = vmatpush1.msra.mxu0 %v247
  %584 = vmatprep.subr.mxu0 0.0
  %585 = vmatpush1.msra.mxu0 %v248
  %586 = vmatprep.subr.mxu0 0.0
  %587 = vmatpush1.msra.mxu0 %v249
  %588 = vmatprep.subr.mxu0 0.0
  %589 = vmatpush1.msra.mxu0 %v250
  %590 = vmatprep.subr.mxu0 0.0
  %591 = vmatpush1.msra.mxu0 0.0
  %592 = vmatprep.subr.mxu0 0.0
  %593 = vmatpush1.msra.mxu0 0.0
  %594 = vmatprep.subr.mxu0 0.0
  %595 = vmatpush1.msra.mxu0 0.0
  %596 = vmatprep.subr.mxu0 0.0
  %597 = vmatpush1.msra.mxu0 0.0
  %598 = vmatprep.subr.mxu0 0.0
  %599 = vmatpush1.msra.mxu0 0.0
  %600 = vmatprep.subr.mxu0 0.0
  %601 = vmatpush1.msra.mxu0 0.0
  %602 = vmatprep.subr.mxu0 0.0
  %603 = vmatpush1.msra.mxu0 0.0
  %604 = vmatprep.subr.mxu0 0.0
  %605 = vmatpush1.msra.mxu0 0.0
  %606 = vmatprep.subr.mxu0 0.0
  %607 = vmatpush1.msra.mxu0 0.0
  %608 = vmatprep.subr.mxu0 0.0
  %609 = vmatpush1.msra.mxu0 0.0
  %610 = vmatprep.subr.mxu0 0.0
  %611 = vmatpush1.msra.mxu0 0.0
  %612 = vmatprep.subr.mxu0 0.0
  %613 = vmatpush1.msra.mxu0 0.0
  %614 = vmatprep.subr.mxu0 0.0
  %615 = vmatpush1.msra.mxu0 0.0
  %616 = vmatprep.subr.mxu0 0.0
  %617 = vmatpush1.msra.mxu0 0.0
  %618 = vmatprep.subr.mxu0 0.0
  %619 = vmatpush1.msra.mxu0 0.0
  %620 = vmatprep.subr.mxu0 0.0
  %621 = vmatpush1.msra.mxu0 0.0
  %622 = vmatprep.subr.mxu0 0.0
  %623 = vmatpush1.msra.mxu0 0.0
  %624 = vmatprep.subr.mxu0 0.0
  %625 = vmatpush1.msra.mxu0 0.0
  %626 = vmatprep.subr.mxu0 0.0
  %627 = vmatpush1.msra.mxu0 0.0
  %628 = vmatprep.subr.mxu0 0.0
  %629 = vmatpush1.msra.mxu0 0.0
  %630 = vmatprep.subr.mxu0 0.0
  %631 = vmatpush1.msra.mxu0 0.0
  %632 = vmatprep.subr.mxu0 0.0
  %633 = vmatpush1.msra.mxu0 0.0
  %634 = vmatprep.subr.mxu0 0.0
  %635 = vmatpush1.msra.mxu0 0.0
  %636 = vmatprep.subr.mxu0 0.0
  %637 = vmatpush1.msra.mxu0 0.0
  %638 = vmatprep.subr.mxu0 0.0
  %639 = vmatpush1.msra.mxu0 0.0
  %640 = vmatprep.subr.mxu0 0.0
  %641 = vmatpush1.msra.mxu0 0.0
  %642 = vmatprep.subr.mxu0 0.0
  %643 = vmatpush1.msra.mxu0 0.0
  %644 = vmatprep.subr.mxu0 0.0
  %645 = vmatpush1.msra.mxu0 0.0
  %646 = vmatprep.mubr.f32.mxu0 0.0
  %647 = vmatmul.mubr.f32.gmra.mrb[0].mxu0 %v580
  %v648 = vpop.f32.mrb[0].mxu0
  %v649 = vadd.f32 %v262, %v648
  %v650 = vpop.f32.mrb[0].mxu0
  %651 = vdwg.mxu0
  %v652 = vadd.f32 %v579, %v649
  %v653 = vxor.u32 %v652, 2147483648
  %v654 = vmul.f32 %v653, 1.442695
  %v655 = vpow.pop %v654
  %v656 = vadd.f32 %v655, 1.0
  %v657 = vrcp.pop %v656
  %v658 = vmul.f32 1.0, %v657
  %660 = vrot.lane.b32.xlu0 %v649, 64
  %v661 = vpop.permute.xlu0 %660
  %v663 = vmul.f32 %v658, %v661
  %665 = vrot.lane.b32.xlu0 %v663, 64
  %v666 = vpop.permute.xlu0 %665
  %v668 = vadd.f32 %v579, %v666
  %v669 = vtanh.pop %v668
  %v670 = vsub.f32 1.0, %v658
  %672 = vrot.lane.b32.xlu0 %v669, 96
  %v673 = vpop.permute.xlu0 %672
  %v675 = vmul.f32 %v670, %v673
  %v676 = vmul.f32 %v658, %v572
  %v677 = vadd.f32 %v675, %v676
  %679 = vrot.lane.b32.xlu0 %v677, 96
  %v680 = vpop.permute.xlu0 %679
  %s682 = scalar_lea.vmem [#allocation4], 6
  %683 = vst.msk [vmem:[%s682] sm:$0x3] %vm367, %v680
  %v684 = vld [vmem:[#allocation2 + $0x8] sm:$0x3]
  %v685 = vsel %vm66, %v680, 0
  %687 = vmatprep.subr.mxu0 0.0
  %688 = vmatpush1.msra.mxu0 %v247
  %689 = vmatprep.subr.mxu0 0.0
  %690 = vmatpush1.msra.mxu0 %v248
  %691 = vmatprep.subr.mxu0 0.0
  %692 = vmatpush1.msra.mxu0 %v249
  %693 = vmatprep.subr.mxu0 0.0
  %694 = vmatpush1.msra.mxu0 %v250
  %695 = vmatprep.subr.mxu0 0.0
  %696 = vmatpush1.msra.mxu0 0.0
  %697 = vmatprep.subr.mxu0 0.0
  %698 = vmatpush1.msra.mxu0 0.0
  %699 = vmatprep.subr.mxu0 0.0
  %700 = vmatpush1.msra.mxu0 0.0
  %701 = vmatprep.subr.mxu0 0.0
  %702 = vmatpush1.msra.mxu0 0.0
  %703 = vmatprep.subr.mxu0 0.0
  %704 = vmatpush1.msra.mxu0 0.0
  %705 = vmatprep.subr.mxu0 0.0
  %706 = vmatpush1.msra.mxu0 0.0
  %707 = vmatprep.subr.mxu0 0.0
  %708 = vmatpush1.msra.mxu0 0.0
  %709 = vmatprep.subr.mxu0 0.0
  %710 = vmatpush1.msra.mxu0 0.0
  %711 = vmatprep.subr.mxu0 0.0
  %712 = vmatpush1.msra.mxu0 0.0
  %713 = vmatprep.subr.mxu0 0.0
  %714 = vmatpush1.msra.mxu0 0.0
  %715 = vmatprep.subr.mxu0 0.0
  %716 = vmatpush1.msra.mxu0 0.0
  %717 = vmatprep.subr.mxu0 0.0
  %718 = vmatpush1.msra.mxu0 0.0
  %719 = vmatprep.subr.mxu0 0.0
  %720 = vmatpush1.msra.mxu0 0.0
  %721 = vmatprep.subr.mxu0 0.0
  %722 = vmatpush1.msra.mxu0 0.0
  %723 = vmatprep.subr.mxu0 0.0
  %724 = vmatpush1.msra.mxu0 0.0
  %725 = vmatprep.subr.mxu0 0.0
  %726 = vmatpush1.msra.mxu0 0.0
  %727 = vmatprep.subr.mxu0 0.0
  %728 = vmatpush1.msra.mxu0 0.0
  %729 = vmatprep.subr.mxu0 0.0
  %730 = vmatpush1.msra.mxu0 0.0
  %731 = vmatprep.subr.mxu0 0.0
  %732 = vmatpush1.msra.mxu0 0.0
  %733 = vmatprep.subr.mxu0 0.0
  %734 = vmatpush1.msra.mxu0 0.0
  %735 = vmatprep.subr.mxu0 0.0
  %736 = vmatpush1.msra.mxu0 0.0
  %737 = vmatprep.subr.mxu0 0.0
  %738 = vmatpush1.msra.mxu0 0.0
  %739 = vmatprep.subr.mxu0 0.0
  %740 = vmatpush1.msra.mxu0 0.0
  %741 = vmatprep.subr.mxu0 0.0
  %742 = vmatpush1.msra.mxu0 0.0
  %743 = vmatprep.subr.mxu0 0.0
  %744 = vmatpush1.msra.mxu0 0.0
  %745 = vmatprep.subr.mxu0 0.0
  %746 = vmatpush1.msra.mxu0 0.0
  %747 = vmatprep.subr.mxu0 0.0
  %748 = vmatpush1.msra.mxu0 0.0
  %749 = vmatprep.subr.mxu0 0.0
  %750 = vmatpush1.msra.mxu0 0.0
  %751 = vmatprep.mubr.f32.mxu0 0.0
  %752 = vmatmul.mubr.f32.gmra.mrb[0].mxu0 %v685
  %v753 = vpop.f32.mrb[0].mxu0
  %v754 = vadd.f32 %v262, %v753
  %v755 = vpop.f32.mrb[0].mxu0
  %756 = vdwg.mxu0
  %v757 = vadd.f32 %v684, %v754
  %v758 = vxor.u32 %v757, 2147483648
  %v759 = vmul.f32 %v758, 1.442695
  %v760 = vpow.pop %v759
  %v761 = vadd.f32 %v760, 1.0
  %v762 = vrcp.pop %v761
  %v763 = vmul.f32 1.0, %v762
  %765 = vrot.lane.b32.xlu0 %v754, 64
  %v766 = vpop.permute.xlu0 %765
  %v768 = vmul.f32 %v763, %v766
  %770 = vrot.lane.b32.xlu0 %v768, 64
  %v771 = vpop.permute.xlu0 %770
  %v773 = vadd.f32 %v684, %v771
  %v774 = vtanh.pop %v773
  %v775 = vsub.f32 1.0, %v763
  %777 = vrot.lane.b32.xlu0 %v774, 96
  %v778 = vpop.permute.xlu0 %777
  %v780 = vmul.f32 %v775, %v778
  %v781 = vmul.f32 %v763, %v677
  %v782 = vadd.f32 %v780, %v781
  %784 = vrot.lane.b32.xlu0 %v782, 96
  %v785 = vpop.permute.xlu0 %784
  %s787 = scalar_lea.vmem [#allocation4], 8
  %788 = vst.msk [vmem:[%s787] sm:$0x3] %vm367, %v785
  %v789 = vld [vmem:[#allocation2 + $0xa] sm:$0x3]
  %v790 = vsel %vm66, %v785, 0
  %792 = vmatprep.subr.mxu0 0.0
  %793 = vmatpush1.msra.mxu0 %v247
  %794 = vmatprep.subr.mxu0 0.0
  %795 = vmatpush1.msra.mxu0 %v248
  %796 = vmatprep.subr.mxu0 0.0
  %797 = vmatpush1.msra.mxu0 %v249
  %798 = vmatprep.subr.mxu0 0.0
  %799 = vmatpush1.msra.mxu0 %v250
  %800 = vmatprep.subr.mxu0 0.0
  %801 = vmatpush1.msra.mxu0 0.0
  %802 = vmatprep.subr.mxu0 0.0
  %803 = vmatpush1.msra.mxu0 0.0
  %804 = vmatprep.subr.mxu0 0.0
  %805 = vmatpush1.msra.mxu0 0.0
  %806 = vmatprep.subr.mxu0 0.0
  %807 = vmatpush1.msra.mxu0 0.0
  %808 = vmatprep.subr.mxu0 0.0
  %809 = vmatpush1.msra.mxu0 0.0
  %810 = vmatprep.subr.mxu0 0.0
  %811 = vmatpush1.msra.mxu0 0.0
  %812 = vmatprep.subr.mxu0 0.0
  %813 = vmatpush1.msra.mxu0 0.0
  %814 = vmatprep.subr.mxu0 0.0
  %815 = vmatpush1.msra.mxu0 0.0
  %816 = vmatprep.subr.mxu0 0.0
  %817 = vmatpush1.msra.mxu0 0.0
  %818 = vmatprep.subr.mxu0 0.0
  %819 = vmatpush1.msra.mxu0 0.0
  %820 = vmatprep.subr.mxu0 0.0
  %821 = vmatpush1.msra.mxu0 0.0
  %822 = vmatprep.subr.mxu0 0.0
  %823 = vmatpush1.msra.mxu0 0.0
  %824 = vmatprep.subr.mxu0 0.0
  %825 = vmatpush1.msra.mxu0 0.0
  %826 = vmatprep.subr.mxu0 0.0
  %827 = vmatpush1.msra.mxu0 0.0
  %828 = vmatprep.subr.mxu0 0.0
  %829 = vmatpush1.msra.mxu0 0.0
  %830 = vmatprep.subr.mxu0 0.0
  %831 = vmatpush1.msra.mxu0 0.0
  %832 = vmatprep.subr.mxu0 0.0
  %833 = vmatpush1.msra.mxu0 0.0
  %834 = vmatprep.subr.mxu0 0.0
  %835 = vmatpush1.msra.mxu0 0.0
  %836 = vmatprep.subr.mxu0 0.0
  %837 = vmatpush1.msra.mxu0 0.0
  %838 = vmatprep.subr.mxu0 0.0
  %839 = vmatpush1.msra.mxu0 0.0
  %840 = vmatprep.subr.mxu0 0.0
  %841 = vmatpush1.msra.mxu0 0.0
  %842 = vmatprep.subr.mxu0 0.0
  %843 = vmatpush1.msra.mxu0 0.0
  %844 = vmatprep.subr.mxu0 0.0
  %845 = vmatpush1.msra.mxu0 0.0
  %846 = vmatprep.subr.mxu0 0.0
  %847 = vmatpush1.msra.mxu0 0.0
  %848 = vmatprep.subr.mxu0 0.0
  %849 = vmatpush1.msra.mxu0 0.0
  %850 = vmatprep.subr.mxu0 0.0
  %851 = vmatpush1.msra.mxu0 0.0
  %852 = vmatprep.subr.mxu0 0.0
  %853 = vmatpush1.msra.mxu0 0.0
  %854 = vmatprep.subr.mxu0 0.0
  %855 = vmatpush1.msra.mxu0 0.0
  %856 = vmatprep.mubr.f32.mxu0 0.0
  %857 = vmatmul.mubr.f32.gmra.mrb[0].mxu0 %v790
  %v858 = vpop.f32.mrb[0].mxu0
  %v859 = vadd.f32 %v262, %v858
  %v860 = vpop.f32.mrb[0].mxu0
  %861 = vdwg.mxu0
  %v862 = vadd.f32 %v789, %v859
  %v863 = vxor.u32 %v862, 2147483648
  %v864 = vmul.f32 %v863, 1.442695
  %v865 = vpow.pop %v864
  %v866 = vadd.f32 %v865, 1.0
  %v867 = vrcp.pop %v866
  %v868 = vmul.f32 1.0, %v867
  %870 = vrot.lane.b32.xlu0 %v859, 64
  %v871 = vpop.permute.xlu0 %870
  %v873 = vmul.f32 %v868, %v871
  %875 = vrot.lane.b32.xlu0 %v873, 64
  %v876 = vpop.permute.xlu0 %875
  %v878 = vadd.f32 %v789, %v876
  %v879 = vtanh.pop %v878
  %v880 = vsub.f32 1.0, %v868
  %882 = vrot.lane.b32.xlu0 %v879, 96
  %v883 = vpop.permute.xlu0 %882
  %v885 = vmul.f32 %v880, %v883
  %v886 = vmul.f32 %v868, %v782
  %v887 = vadd.f32 %v885, %v886
  %889 = vrot.lane.b32.xlu0 %v887, 96
  %v890 = vpop.permute.xlu0 %889
  %s892 = scalar_lea.vmem [#allocation4], 10
  %893 = vst.msk [vmem:[%s892] sm:$0x3] %vm367, %v890
  %v894 = vld [vmem:[#allocation2 + $0xc] sm:$0x3]
  %v895 = vsel %vm66, %v890, 0
  %897 = vmatprep.subr.mxu0 0.0
  %898 = vmatpush1.msra.mxu0 %v247
  %899 = vmatprep.subr.mxu0 0.0
  %900 = vmatpush1.msra.mxu0 %v248
  %901 = vmatprep.subr.mxu0 0.0
  %902 = vmatpush1.msra.mxu0 %v249
  %903 = vmatprep.subr.mxu0 0.0
  %904 = vmatpush1.msra.mxu0 %v250
  %905 = vmatprep.subr.mxu0 0.0
  %906 = vmatpush1.msra.mxu0 0.0
  %907 = vmatprep.subr.mxu0 0.0
  %908 = vmatpush1.msra.mxu0 0.0
  %909 = vmatprep.subr.mxu0 0.0
  %910 = vmatpush1.msra.mxu0 0.0
  %911 = vmatprep.subr.mxu0 0.0
  %912 = vmatpush1.msra.mxu0 0.0
  %913 = vmatprep.subr.mxu0 0.0
  %914 = vmatpush1.msra.mxu0 0.0
  %915 = vmatprep.subr.mxu0 0.0
  %916 = vmatpush1.msra.mxu0 0.0
  %917 = vmatprep.subr.mxu0 0.0
  %918 = vmatpush1.msra.mxu0 0.0
  %919 = vmatprep.subr.mxu0 0.0
  %920 = vmatpush1.msra.mxu0 0.0
  %921 = vmatprep.subr.mxu0 0.0
  %922 = vmatpush1.msra.mxu0 0.0
  %923 = vmatprep.subr.mxu0 0.0
  %924 = vmatpush1.msra.mxu0 0.0
  %925 = vmatprep.subr.mxu0 0.0
  %926 = vmatpush1.msra.mxu0 0.0
  %927 = vmatprep.subr.mxu0 0.0
  %928 = vmatpush1.msra.mxu0 0.0
  %929 = vmatprep.subr.mxu0 0.0
  %930 = vmatpush1.msra.mxu0 0.0
  %931 = vmatprep.subr.mxu0 0.0
  %932 = vmatpush1.msra.mxu0 0.0
  %933 = vmatprep.subr.mxu0 0.0
  %934 = vmatpush1.msra.mxu0 0.0
  %935 = vmatprep.subr.mxu0 0.0
  %936 = vmatpush1.msra.mxu0 0.0
  %937 = vmatprep.subr.mxu0 0.0
  %938 = vmatpush1.msra.mxu0 0.0
  %939 = vmatprep.subr.mxu0 0.0
  %940 = vmatpush1.msra.mxu0 0.0
  %941 = vmatprep.subr.mxu0 0.0
  %942 = vmatpush1.msra.mxu0 0.0
  %943 = vmatprep.subr.mxu0 0.0
  %944 = vmatpush1.msra.mxu0 0.0
  %945 = vmatprep.subr.mxu0 0.0
  %946 = vmatpush1.msra.mxu0 0.0
  %947 = vmatprep.subr.mxu0 0.0
  %948 = vmatpush1.msra.mxu0 0.0
  %949 = vmatprep.subr.mxu0 0.0
  %950 = vmatpush1.msra.mxu0 0.0
  %951 = vmatprep.subr.mxu0 0.0
  %952 = vmatpush1.msra.mxu0 0.0
  %953 = vmatprep.subr.mxu0 0.0
  %954 = vmatpush1.msra.mxu0 0.0
  %955 = vmatprep.subr.mxu0 0.0
  %956 = vmatpush1.msra.mxu0 0.0
  %957 = vmatprep.subr.mxu0 0.0
  %958 = vmatpush1.msra.mxu0 0.0
  %959 = vmatprep.subr.mxu0 0.0
  %960 = vmatpush1.msra.mxu0 0.0
  %961 = vmatprep.mubr.f32.mxu0 0.0
  %962 = vmatmul.mubr.f32.gmra.mrb[0].mxu0 %v895
  %v963 = vpop.f32.mrb[0].mxu0
  %v964 = vadd.f32 %v262, %v963
  %v965 = vpop.f32.mrb[0].mxu0
  %966 = vdwg.mxu0
  %v967 = vadd.f32 %v894, %v964
  %v968 = vxor.u32 %v967, 2147483648
  %v969 = vmul.f32 %v968, 1.442695
  %v970 = vpow.pop %v969
  %v971 = vadd.f32 %v970, 1.0
  %v972 = vrcp.pop %v971
  %v973 = vmul.f32 1.0, %v972
  %975 = vrot.lane.b32.xlu0 %v964, 64
  %v976 = vpop.permute.xlu0 %975
  %v978 = vmul.f32 %v973, %v976
  %980 = vrot.lane.b32.xlu0 %v978, 64
  %v981 = vpop.permute.xlu0 %980
  %v983 = vadd.f32 %v894, %v981
  %v984 = vtanh.pop %v983
  %v985 = vsub.f32 1.0, %v973
  %987 = vrot.lane.b32.xlu0 %v984, 96
  %v988 = vpop.permute.xlu0 %987
  %v990 = vmul.f32 %v985, %v988
  %v991 = vmul.f32 %v973, %v887
  %v992 = vadd.f32 %v990, %v991
  %994 = vrot.lane.b32.xlu0 %v992, 96
  %v995 = vpop.permute.xlu0 %994
  %s997 = scalar_lea.vmem [#allocation4], 12
  %998 = vst.msk [vmem:[%s997] sm:$0x3] %vm367, %v995
  %v999 = vld [vmem:[#allocation2 + $0xe] sm:$0x3]
  %v1000 = vsel %vm66, %v995, 0
  %1002 = vmatprep.subr.mxu0 0.0
  %1003 = vmatpush1.msra.mxu0 %v247
  %1004 = vmatprep.subr.mxu0 0.0
  %1005 = vmatpush1.msra.mxu0 %v248
  %1006 = vmatprep.subr.mxu0 0.0
  %1007 = vmatpush1.msra.mxu0 %v249
  %1008 = vmatprep.subr.mxu0 0.0
  %1009 = vmatpush1.msra.mxu0 %v250
  %1010 = vmatprep.subr.mxu0 0.0
  %1011 = vmatpush1.msra.mxu0 0.0
  %1012 = vmatprep.subr.mxu0 0.0
  %1013 = vmatpush1.msra.mxu0 0.0
  %1014 = vmatprep.subr.mxu0 0.0
  %1015 = vmatpush1.msra.mxu0 0.0
  %1016 = vmatprep.subr.mxu0 0.0
  %1017 = vmatpush1.msra.mxu0 0.0
  %1018 = vmatprep.subr.mxu0 0.0
  %1019 = vmatpush1.msra.mxu0 0.0
  %1020 = vmatprep.subr.mxu0 0.0
  %1021 = vmatpush1.msra.mxu0 0.0
  %1022 = vmatprep.subr.mxu0 0.0
  %1023 = vmatpush1.msra.mxu0 0.0
  %1024 = vmatprep.subr.mxu0 0.0
  %1025 = vmatpush1.msra.mxu0 0.0
  %1026 = vmatprep.subr.mxu0 0.0
  %1027 = vmatpush1.msra.mxu0 0.0
  %1028 = vmatprep.subr.mxu0 0.0
  %1029 = vmatpush1.msra.mxu0 0.0
  %1030 = vmatprep.subr.mxu0 0.0
  %1031 = vmatpush1.msra.mxu0 0.0
  %1032 = vmatprep.subr.mxu0 0.0
  %1033 = vmatpush1.msra.mxu0 0.0
  %1034 = vmatprep.subr.mxu0 0.0
  %1035 = vmatpush1.msra.mxu0 0.0
  %1036 = vmatprep.subr.mxu0 0.0
  %1037 = vmatpush1.msra.mxu0 0.0
  %1038 = vmatprep.subr.mxu0 0.0
  %1039 = vmatpush1.msra.mxu0 0.0
  %1040 = vmatprep.subr.mxu0 0.0
  %1041 = vmatpush1.msra.mxu0 0.0
  %1042 = vmatprep.subr.mxu0 0.0
  %1043 = vmatpush1.msra.mxu0 0.0
  %1044 = vmatprep.subr.mxu0 0.0
  %1045 = vmatpush1.msra.mxu0 0.0
  %1046 = vmatprep.subr.mxu0 0.0
  %1047 = vmatpush1.msra.mxu0 0.0
  %1048 = vmatprep.subr.mxu0 0.0
  %1049 = vmatpush1.msra.mxu0 0.0
  %1050 = vmatprep.subr.mxu0 0.0
  %1051 = vmatpush1.msra.mxu0 0.0
  %1052 = vmatprep.subr.mxu0 0.0
  %1053 = vmatpush1.msra.mxu0 0.0
  %1054 = vmatprep.subr.mxu0 0.0
  %1055 = vmatpush1.msra.mxu0 0.0
  %1056 = vmatprep.subr.mxu0 0.0
  %1057 = vmatpush1.msra.mxu0 0.0
  %1058 = vmatprep.subr.mxu0 0.0
  %1059 = vmatpush1.msra.mxu0 0.0
  %1060 = vmatprep.subr.mxu0 0.0
  %1061 = vmatpush1.msra.mxu0 0.0
  %1062 = vmatprep.subr.mxu0 0.0
  %1063 = vmatpush1.msra.mxu0 0.0
  %1064 = vmatprep.subr.mxu0 0.0
  %1065 = vmatpush1.msra.mxu0 0.0
  %1066 = vmatprep.mubr.f32.mxu0 0.0
  %1067 = vmatmul.mubr.f32.gmra.mrb[0].mxu0 %v1000
  %v1068 = vpop.f32.mrb[0].mxu0
  %v1069 = vadd.f32 %v262, %v1068
  %v1070 = vpop.f32.mrb[0].mxu0
  %1071 = vdwg.mxu0
  %v1072 = vadd.f32 %v999, %v1069
  %v1073 = vxor.u32 %v1072, 2147483648
  %v1074 = vmul.f32 %v1073, 1.442695
  %v1075 = vpow.pop %v1074
  %v1076 = vadd.f32 %v1075, 1.0
  %v1077 = vrcp.pop %v1076
  %v1078 = vmul.f32 1.0, %v1077
  %1080 = vrot.lane.b32.xlu0 %v1069, 64
  %v1081 = vpop.permute.xlu0 %1080
  %v1083 = vmul.f32 %v1078, %v1081
  %1085 = vrot.lane.b32.xlu0 %v1083, 64
  %v1086 = vpop.permute.xlu0 %1085
  %v1088 = vadd.f32 %v999, %v1086
  %v1089 = vtanh.pop %v1088
  %v1090 = vsub.f32 1.0, %v1078
  %1092 = vrot.lane.b32.xlu0 %v1089, 96
  %v1093 = vpop.permute.xlu0 %1092
  %v1095 = vmul.f32 %v1090, %v1093
  %v1096 = vmul.f32 %v1078, %v992
  %v1097 = vadd.f32 %v1095, %v1096
  %1099 = vrot.lane.b32.xlu0 %v1097, 96
  %v1100 = vpop.permute.xlu0 %1099
  %s1102 = scalar_lea.vmem [#allocation4], 14
  %1103 = vst.msk [vmem:[%s1102] sm:$0x3] %vm367, %v1100
  %v1104 = vld [vmem:[#allocation3] sm:$0x3]
  %v1106 = vlaneseq
  %v1107 = vshrl.u32 %v1106, 7
  %v1108 = vsub.s32 0, %v1107
  %v1109 = vrot.slane %v256, %v1108
  %v1111 = vsel %vm66, %v1100, 0
  %1113 = vmatprep.subr.mxu0 0.0
  %1114 = vmatpush1.msra.mxu0 %v252
  %1115 = vmatprep.subr.mxu0 0.0
  %1116 = vmatpush1.msra.mxu0 %v253
  %1117 = vmatprep.subr.mxu0 0.0
  %1118 = vmatpush1.msra.mxu0 %v254
  %1119 = vmatprep.subr.mxu0 0.0
  %1120 = vmatpush1.msra.mxu0 %v255
  %1121 = vmatprep.subr.mxu0 0.0
  %1122 = vmatpush1.msra.mxu0 0.0
  %1123 = vmatprep.subr.mxu0 0.0
  %1124 = vmatpush1.msra.mxu0 0.0
  %1125 = vmatprep.subr.mxu0 0.0
  %1126 = vmatpush1.msra.mxu0 0.0
  %1127 = vmatprep.subr.mxu0 0.0
  %1128 = vmatpush1.msra.mxu0 0.0
  %1129 = vmatprep.subr.mxu0 0.0
  %1130 = vmatpush1.msra.mxu0 0.0
  %1131 = vmatprep.subr.mxu0 0.0
  %1132 = vmatpush1.msra.mxu0 0.0
  %1133 = vmatprep.subr.mxu0 0.0
  %1134 = vmatpush1.msra.mxu0 0.0
  %1135 = vmatprep.subr.mxu0 0.0
  %1136 = vmatpush1.msra.mxu0 0.0
  %1137 = vmatprep.subr.mxu0 0.0
  %1138 = vmatpush1.msra.mxu0 0.0
  %1139 = vmatprep.subr.mxu0 0.0
  %1140 = vmatpush1.msra.mxu0 0.0
  %1141 = vmatprep.subr.mxu0 0.0
  %1142 = vmatpush1.msra.mxu0 0.0
  %1143 = vmatprep.subr.mxu0 0.0
  %1144 = vmatpush1.msra.mxu0 0.0
  %1145 = vmatprep.subr.mxu0 0.0
  %1146 = vmatpush1.msra.mxu0 0.0
  %1147 = vmatprep.subr.mxu0 0.0
  %1148 = vmatpush1.msra.mxu0 0.0
  %1149 = vmatprep.subr.mxu0 0.0
  %1150 = vmatpush1.msra.mxu0 0.0
  %1151 = vmatprep.subr.mxu0 0.0
  %1152 = vmatpush1.msra.mxu0 0.0
  %1153 = vmatprep.subr.mxu0 0.0
  %1154 = vmatpush1.msra.mxu0 0.0
  %1155 = vmatprep.subr.mxu0 0.0
  %1156 = vmatpush1.msra.mxu0 0.0
  %1157 = vmatprep.subr.mxu0 0.0
  %1158 = vmatpush1.msra.mxu0 0.0
  %1159 = vmatprep.subr.mxu0 0.0
  %1160 = vmatpush1.msra.mxu0 0.0
  %1161 = vmatprep.subr.mxu0 0.0
  %1162 = vmatpush1.msra.mxu0 0.0
  %1163 = vmatprep.subr.mxu0 0.0
  %1164 = vmatpush1.msra.mxu0 0.0
  %1165 = vmatprep.subr.mxu0 0.0
  %1166 = vmatpush1.msra.mxu0 0.0
  %1167 = vmatprep.subr.mxu0 0.0
  %1168 = vmatpush1.msra.mxu0 0.0
  %1169 = vmatprep.subr.mxu0 0.0
  %1170 = vmatpush1.msra.mxu0 0.0
  %1171 = vmatprep.subr.mxu0 0.0
  %1172 = vmatpush1.msra.mxu0 0.0
  %1173 = vmatprep.subr.mxu0 0.0
  %1174 = vmatpush1.msra.mxu0 0.0
  %1175 = vmatprep.subr.mxu0 0.0
  %1176 = vmatpush1.msra.mxu0 0.0
  %1177 = vmatprep.mubr.f32.mxu0 0.0
  %1178 = vmatmul.mubr.f32.gmra.mrb[0].mxu0 %v1111
  %v1179 = vpop.f32.mrb[0].mxu0
  %v1180 = vadd.f32 %v1109, %v1179
  %v1181 = vpop.f32.mrb[0].mxu0
  %1182 = vdwg.mxu0
  %v1183 = vadd.f32 %v1104, %v1180
  %v1184 = vxor.u32 %v1183, 2147483648
  %v1185 = vmul.f32 %v1184, 1.442695
  %v1186 = vpow.pop %v1185
  %v1187 = vadd.f32 %v1186, 1.0
  %v1188 = vrcp.pop %v1187
  %v1189 = vmul.f32 1.0, %v1188
  %1191 = vrot.lane.b32.xlu0 %v1180, 64
  %v1192 = vpop.permute.xlu0 %1191
  %v1194 = vmul.f32 %v1189, %v1192
  %1196 = vrot.lane.b32.xlu0 %v1194, 64
  %v1197 = vpop.permute.xlu0 %1196
  %v1199 = vadd.f32 %v1104, %v1197
  %v1200 = vtanh.pop %v1199
  %v1201 = vsub.f32 1.0, %v1189
  %1203 = vrot.lane.b32.xlu0 %v1200, 96
  %v1204 = vpop.permute.xlu0 %1203
  %v1206 = vmul.f32 %v1201, %v1204
  %v1207 = vmul.f32 %v1189, %v1097
  %v1208 = vadd.f32 %v1206, %v1207
  %1210 = vrot.lane.b32.xlu0 %v1208, 96
  %v1211 = vpop.permute.xlu0 %1210
  %1213 = vst.msk [vmem:[#allocation5] sm:$0x3] %vm367, %v1211
  %v1214 = vld [vmem:[#allocation3 + $0x2] sm:$0x3]
  %v1215 = vsel %vm66, %v1211, 0
  %1217 = vmatprep.subr.mxu0 0.0
  %1218 = vmatpush1.msra.mxu0 %v252
  %1219 = vmatprep.subr.mxu0 0.0
  %1220 = vmatpush1.msra.mxu0 %v253
  %1221 = vmatprep.subr.mxu0 0.0
  %1222 = vmatpush1.msra.mxu0 %v254
  %1223 = vmatprep.subr.mxu0 0.0
  %1224 = vmatpush1.msra.mxu0 %v255
  %1225 = vmatprep.subr.mxu0 0.0
  %1226 = vmatpush1.msra.mxu0 0.0
  %1227 = vmatprep.subr.mxu0 0.0
  %1228 = vmatpush1.msra.mxu0 0.0
  %1229 = vmatprep.subr.mxu0 0.0
  %1230 = vmatpush1.msra.mxu0 0.0
  %1231 = vmatprep.subr.mxu0 0.0
  %1232 = vmatpush1.msra.mxu0 0.0
  %1233 = vmatprep.subr.mxu0 0.0
  %1234 = vmatpush1.msra.mxu0 0.0
  %1235 = vmatprep.subr.mxu0 0.0
  %1236 = vmatpush1.msra.mxu0 0.0
  %1237 = vmatprep.subr.mxu0 0.0
  %1238 = vmatpush1.msra.mxu0 0.0
  %1239 = vmatprep.subr.mxu0 0.0
  %1240 = vmatpush1.msra.mxu0 0.0
  %1241 = vmatprep.subr.mxu0 0.0
  %1242 = vmatpush1.msra.mxu0 0.0
  %1243 = vmatprep.subr.mxu0 0.0
  %1244 = vmatpush1.msra.mxu0 0.0
  %1245 = vmatprep.subr.mxu0 0.0
  %1246 = vmatpush1.msra.mxu0 0.0
  %1247 = vmatprep.subr.mxu0 0.0
  %1248 = vmatpush1.msra.mxu0 0.0
  %1249 = vmatprep.subr.mxu0 0.0
  %1250 = vmatpush1.msra.mxu0 0.0
  %1251 = vmatprep.subr.mxu0 0.0
  %1252 = vmatpush1.msra.mxu0 0.0
  %1253 = vmatprep.subr.mxu0 0.0
  %1254 = vmatpush1.msra.mxu0 0.0
  %1255 = vmatprep.subr.mxu0 0.0
  %1256 = vmatpush1.msra.mxu0 0.0
  %1257 = vmatprep.subr.mxu0 0.0
  %1258 = vmatpush1.msra.mxu0 0.0
  %1259 = vmatprep.subr.mxu0 0.0
  %1260 = vmatpush1.msra.mxu0 0.0
  %1261 = vmatprep.subr.mxu0 0.0
  %1262 = vmatpush1.msra.mxu0 0.0
  %1263 = vmatprep.subr.mxu0 0.0
  %1264 = vmatpush1.msra.mxu0 0.0
  %1265 = vmatprep.subr.mxu0 0.0
  %1266 = vmatpush1.msra.mxu0 0.0
  %1267 = vmatprep.subr.mxu0 0.0
  %1268 = vmatpush1.msra.mxu0 0.0
  %1269 = vmatprep.subr.mxu0 0.0
  %1270 = vmatpush1.msra.mxu0 0.0
  %1271 = vmatprep.subr.mxu0 0.0
  %1272 = vmatpush1.msra.mxu0 0.0
  %1273 = vmatprep.subr.mxu0 0.0
  %1274 = vmatpush1.msra.mxu0 0.0
  %1275 = vmatprep.subr.mxu0 0.0
  %1276 = vmatpush1.msra.mxu0 0.0
  %1277 = vmatprep.subr.mxu0 0.0
  %1278 = vmatpush1.msra.mxu0 0.0
  %1279 = vmatprep.subr.mxu0 0.0
  %1280 = vmatpush1.msra.mxu0 0.0
  %1281 = vmatprep.mubr.f32.mxu0 0.0
  %1282 = vmatmul.mubr.f32.gmra.mrb[0].mxu0 %v1215
  %v1283 = vpop.f32.mrb[0].mxu0
  %v1284 = vadd.f32 %v1109, %v1283
  %v1285 = vpop.f32.mrb[0].mxu0
  %1286 = vdwg.mxu0
  %v1287 = vadd.f32 %v1214, %v1284
  %v1288 = vxor.u32 %v1287, 2147483648
  %v1289 = vmul.f32 %v1288, 1.442695
  %v1290 = vpow.pop %v1289
  %v1291 = vadd.f32 %v1290, 1.0
  %v1292 = vrcp.pop %v1291
  %v1293 = vmul.f32 1.0, %v1292
  %1295 = vrot.lane.b32.xlu0 %v1284, 64
  %v1296 = vpop.permute.xlu0 %1295
  %v1298 = vmul.f32 %v1293, %v1296
  %1300 = vrot.lane.b32.xlu0 %v1298, 64
  %v1301 = vpop.permute.xlu0 %1300
  %v1303 = vadd.f32 %v1214, %v1301
  %v1304 = vtanh.pop %v1303
  %v1305 = vsub.f32 1.0, %v1293
  %1307 = vrot.lane.b32.xlu0 %v1304, 96
  %v1308 = vpop.permute.xlu0 %1307
  %v1310 = vmul.f32 %v1305, %v1308
  %v1311 = vmul.f32 %v1293, %v1208
  %v1312 = vadd.f32 %v1310, %v1311
  %1314 = vrot.lane.b32.xlu0 %v1312, 96
  %v1315 = vpop.permute.xlu0 %1314
  %s1317 = scalar_lea.vmem [#allocation5], 2
  %1318 = vst.msk [vmem:[%s1317] sm:$0x3] %vm367, %v1315
  %v1319 = vld [vmem:[#allocation3 + $0x4] sm:$0x3]
  %v1320 = vsel %vm66, %v1315, 0
  %1322 = vmatprep.subr.mxu0 0.0
  %1323 = vmatpush1.msra.mxu0 %v252
  %1324 = vmatprep.subr.mxu0 0.0
  %1325 = vmatpush1.msra.mxu0 %v253
  %1326 = vmatprep.subr.mxu0 0.0
  %1327 = vmatpush1.msra.mxu0 %v254
  %1328 = vmatprep.subr.mxu0 0.0
  %1329 = vmatpush1.msra.mxu0 %v255
  %1330 = vmatprep.subr.mxu0 0.0
  %1331 = vmatpush1.msra.mxu0 0.0
  %1332 = vmatprep.subr.mxu0 0.0
  %1333 = vmatpush1.msra.mxu0 0.0
  %1334 = vmatprep.subr.mxu0 0.0
  %1335 = vmatpush1.msra.mxu0 0.0
  %1336 = vmatprep.subr.mxu0 0.0
  %1337 = vmatpush1.msra.mxu0 0.0
  %1338 = vmatprep.subr.mxu0 0.0
  %1339 = vmatpush1.msra.mxu0 0.0
  %1340 = vmatprep.subr.mxu0 0.0
  %1341 = vmatpush1.msra.mxu0 0.0
  %1342 = vmatprep.subr.mxu0 0.0
  %1343 = vmatpush1.msra.mxu0 0.0
  %1344 = vmatprep.subr.mxu0 0.0
  %1345 = vmatpush1.msra.mxu0 0.0
  %1346 = vmatprep.subr.mxu0 0.0
  %1347 = vmatpush1.msra.mxu0 0.0
  %1348 = vmatprep.subr.mxu0 0.0
  %1349 = vmatpush1.msra.mxu0 0.0
  %1350 = vmatprep.subr.mxu0 0.0
  %1351 = vmatpush1.msra.mxu0 0.0
  %1352 = vmatprep.subr.mxu0 0.0
  %1353 = vmatpush1.msra.mxu0 0.0
  %1354 = vmatprep.subr.mxu0 0.0
  %1355 = vmatpush1.msra.mxu0 0.0
  %1356 = vmatprep.subr.mxu0 0.0
  %1357 = vmatpush1.msra.mxu0 0.0
  %1358 = vmatprep.subr.mxu0 0.0
  %1359 = vmatpush1.msra.mxu0 0.0
  %1360 = vmatprep.subr.mxu0 0.0
  %1361 = vmatpush1.msra.mxu0 0.0
  %1362 = vmatprep.subr.mxu0 0.0
  %1363 = vmatpush1.msra.mxu0 0.0
  %1364 = vmatprep.subr.mxu0 0.0
  %1365 = vmatpush1.msra.mxu0 0.0
  %1366 = vmatprep.subr.mxu0 0.0
  %1367 = vmatpush1.msra.mxu0 0.0
  %1368 = vmatprep.subr.mxu0 0.0
  %1369 = vmatpush1.msra.mxu0 0.0
  %1370 = vmatprep.subr.mxu0 0.0
  %1371 = vmatpush1.msra.mxu0 0.0
  %1372 = vmatprep.subr.mxu0 0.0
  %1373 = vmatpush1.msra.mxu0 0.0
  %1374 = vmatprep.subr.mxu0 0.0
  %1375 = vmatpush1.msra.mxu0 0.0
  %1376 = vmatprep.subr.mxu0 0.0
  %1377 = vmatpush1.msra.mxu0 0.0
  %1378 = vmatprep.subr.mxu0 0.0
  %1379 = vmatpush1.msra.mxu0 0.0
  %1380 = vmatprep.subr.mxu0 0.0
  %1381 = vmatpush1.msra.mxu0 0.0
  %1382 = vmatprep.subr.mxu0 0.0
  %1383 = vmatpush1.msra.mxu0 0.0
  %1384 = vmatprep.subr.mxu0 0.0
  %1385 = vmatpush1.msra.mxu0 0.0
  %1386 = vmatprep.mubr.f32.mxu0 0.0
  %1387 = vmatmul.mubr.f32.gmra.mrb[0].mxu0 %v1320
  %v1388 = vpop.f32.mrb[0].mxu0
  %v1389 = vadd.f32 %v1109, %v1388
  %v1390 = vpop.f32.mrb[0].mxu0
  %1391 = vdwg.mxu0
  %v1392 = vadd.f32 %v1319, %v1389
  %v1393 = vxor.u32 %v1392, 2147483648
  %v1394 = vmul.f32 %v1393, 1.442695
  %v1395 = vpow.pop %v1394
  %v1396 = vadd.f32 %v1395, 1.0
  %v1397 = vrcp.pop %v1396
  %v1398 = vmul.f32 1.0, %v1397
  %1400 = vrot.lane.b32.xlu0 %v1389, 64
  %v1401 = vpop.permute.xlu0 %1400
  %v1403 = vmul.f32 %v1398, %v1401
  %1405 = vrot.lane.b32.xlu0 %v1403, 64
  %v1406 = vpop.permute.xlu0 %1405
  %v1408 = vadd.f32 %v1319, %v1406
  %v1409 = vtanh.pop %v1408
  %v1410 = vsub.f32 1.0, %v1398
  %1412 = vrot.lane.b32.xlu0 %v1409, 96
  %v1413 = vpop.permute.xlu0 %1412
  %v1415 = vmul.f32 %v1410, %v1413
  %v1416 = vmul.f32 %v1398, %v1312
  %v1417 = vadd.f32 %v1415, %v1416
  %1419 = vrot.lane.b32.xlu0 %v1417, 96
  %v1420 = vpop.permute.xlu0 %1419
  %s1422 = scalar_lea.vmem [#allocation5], 4
  %1423 = vst.msk [vmem:[%s1422] sm:$0x3] %vm367, %v1420
  %v1424 = vld [vmem:[#allocation3 + $0x6] sm:$0x3]
  %v1425 = vsel %vm66, %v1420, 0
  %1427 = vmatprep.subr.mxu0 0.0
  %1428 = vmatpush1.msra.mxu0 %v252
  %1429 = vmatprep.subr.mxu0 0.0
  %1430 = vmatpush1.msra.mxu0 %v253
  %1431 = vmatprep.subr.mxu0 0.0
  %1432 = vmatpush1.msra.mxu0 %v254
  %1433 = vmatprep.subr.mxu0 0.0
  %1434 = vmatpush1.msra.mxu0 %v255
  %1435 = vmatprep.subr.mxu0 0.0
  %1436 = vmatpush1.msra.mxu0 0.0
  %1437 = vmatprep.subr.mxu0 0.0
  %1438 = vmatpush1.msra.mxu0 0.0
  %1439 = vmatprep.subr.mxu0 0.0
  %1440 = vmatpush1.msra.mxu0 0.0
  %1441 = vmatprep.subr.mxu0 0.0
  %1442 = vmatpush1.msra.mxu0 0.0
  %1443 = vmatprep.subr.mxu0 0.0
  %1444 = vmatpush1.msra.mxu0 0.0
  %1445 = vmatprep.subr.mxu0 0.0
  %1446 = vmatpush1.msra.mxu0 0.0
  %1447 = vmatprep.subr.mxu0 0.0
  %1448 = vmatpush1.msra.mxu0 0.0
  %1449 = vmatprep.subr.mxu0 0.0
  %1450 = vmatpush1.msra.mxu0 0.0
  %1451 = vmatprep.subr.mxu0 0.0
  %1452 = vmatpush1.msra.mxu0 0.0
  %1453 = vmatprep.subr.mxu0 0.0
  %1454 = vmatpush1.msra.mxu0 0.0
  %1455 = vmatprep.subr.mxu0 0.0
  %1456 = vmatpush1.msra.mxu0 0.0
  %1457 = vmatprep.subr.mxu0 0.0
  %1458 = vmatpush1.msra.mxu0 0.0
  %1459 = vmatprep.subr.mxu0 0.0
  %1460 = vmatpush1.msra.mxu0 0.0
  %1461 = vmatprep.subr.mxu0 0.0
  %1462 = vmatpush1.msra.mxu0 0.0
  %1463 = vmatprep.subr.mxu0 0.0
  %1464 = vmatpush1.msra.mxu0 0.0
  %1465 = vmatprep.subr.mxu0 0.0
  %1466 = vmatpush1.msra.mxu0 0.0
  %1467 = vmatprep.subr.mxu0 0.0
  %1468 = vmatpush1.msra.mxu0 0.0
  %1469 = vmatprep.subr.mxu0 0.0
  %1470 = vmatpush1.msra.mxu0 0.0
  %1471 = vmatprep.subr.mxu0 0.0
  %1472 = vmatpush1.msra.mxu0 0.0
  %1473 = vmatprep.subr.mxu0 0.0
  %1474 = vmatpush1.msra.mxu0 0.0
  %1475 = vmatprep.subr.mxu0 0.0
  %1476 = vmatpush1.msra.mxu0 0.0
  %1477 = vmatprep.subr.mxu0 0.0
  %1478 = vmatpush1.msra.mxu0 0.0
  %1479 = vmatprep.subr.mxu0 0.0
  %1480 = vmatpush1.msra.mxu0 0.0
  %1481 = vmatprep.subr.mxu0 0.0
  %1482 = vmatpush1.msra.mxu0 0.0
  %1483 = vmatprep.subr.mxu0 0.0
  %1484 = vmatpush1.msra.mxu0 0.0
  %1485 = vmatprep.subr.mxu0 0.0
  %1486 = vmatpush1.msra.mxu0 0.0
  %1487 = vmatprep.subr.mxu0 0.0
  %1488 = vmatpush1.msra.mxu0 0.0
  %1489 = vmatprep.subr.mxu0 0.0
  %1490 = vmatpush1.msra.mxu0 0.0
  %1491 = vmatprep.mubr.f32.mxu0 0.0
  %1492 = vmatmul.mubr.f32.gmra.mrb[0].mxu0 %v1425
  %v1493 = vpop.f32.mrb[0].mxu0
  %v1494 = vadd.f32 %v1109, %v1493
  %v1495 = vpop.f32.mrb[0].mxu0
  %1496 = vdwg.mxu0
  %v1497 = vadd.f32 %v1424, %v1494
  %v1498 = vxor.u32 %v1497, 2147483648
  %v1499 = vmul.f32 %v1498, 1.442695
  %v1500 = vpow.pop %v1499
  %v1501 = vadd.f32 %v1500, 1.0
  %v1502 = vrcp.pop %v1501
  %v1503 = vmul.f32 1.0, %v1502
  %1505 = vrot.lane.b32.xlu0 %v1494, 64
  %v1506 = vpop.permute.xlu0 %1505
  %v1508 = vmul.f32 %v1503, %v1506
  %1510 = vrot.lane.b32.xlu0 %v1508, 64
  %v1511 = vpop.permute.xlu0 %1510
  %v1513 = vadd.f32 %v1424, %v1511
  %v1514 = vtanh.pop %v1513
  %v1515 = vsub.f32 1.0, %v1503
  %1517 = vrot.lane.b32.xlu0 %v1514, 96
  %v1518 = vpop.permute.xlu0 %1517
  %v1520 = vmul.f32 %v1515, %v1518
  %v1521 = vmul.f32 %v1503, %v1417
  %v1522 = vadd.f32 %v1520, %v1521
  %1524 = vrot.lane.b32.xlu0 %v1522, 96
  %v1525 = vpop.permute.xlu0 %1524
  %s1527 = scalar_lea.vmem [#allocation5], 6
  %1528 = vst.msk [vmem:[%s1527] sm:$0x3] %vm367, %v1525
  %v1529 = vld [vmem:[#allocation3 + $0x8] sm:$0x3]
  %v1530 = vsel %vm66, %v1525, 0
  %1532 = vmatprep.subr.mxu0 0.0
  %1533 = vmatpush1.msra.mxu0 %v252
  %1534 = vmatprep.subr.mxu0 0.0
  %1535 = vmatpush1.msra.mxu0 %v253
  %1536 = vmatprep.subr.mxu0 0.0
  %1537 = vmatpush1.msra.mxu0 %v254
  %1538 = vmatprep.subr.mxu0 0.0
  %1539 = vmatpush1.msra.mxu0 %v255
  %1540 = vmatprep.subr.mxu0 0.0
  %1541 = vmatpush1.msra.mxu0 0.0
  %1542 = vmatprep.subr.mxu0 0.0
  %1543 = vmatpush1.msra.mxu0 0.0
  %1544 = vmatprep.subr.mxu0 0.0
  %1545 = vmatpush1.msra.mxu0 0.0
  %1546 = vmatprep.subr.mxu0 0.0
  %1547 = vmatpush1.msra.mxu0 0.0
  %1548 = vmatprep.subr.mxu0 0.0
  %1549 = vmatpush1.msra.mxu0 0.0
  %1550 = vmatprep.subr.mxu0 0.0
  %1551 = vmatpush1.msra.mxu0 0.0
  %1552 = vmatprep.subr.mxu0 0.0
  %1553 = vmatpush1.msra.mxu0 0.0
  %1554 = vmatprep.subr.mxu0 0.0
  %1555 = vmatpush1.msra.mxu0 0.0
  %1556 = vmatprep.subr.mxu0 0.0
  %1557 = vmatpush1.msra.mxu0 0.0
  %1558 = vmatprep.subr.mxu0 0.0
  %1559 = vmatpush1.msra.mxu0 0.0
  %1560 = vmatprep.subr.mxu0 0.0
  %1561 = vmatpush1.msra.mxu0 0.0
  %1562 = vmatprep.subr.mxu0 0.0
  %1563 = vmatpush1.msra.mxu0 0.0
  %1564 = vmatprep.subr.mxu0 0.0
  %1565 = vmatpush1.msra.mxu0 0.0
  %1566 = vmatprep.subr.mxu0 0.0
  %1567 = vmatpush1.msra.mxu0 0.0
  %1568 = vmatprep.subr.mxu0 0.0
  %1569 = vmatpush1.msra.mxu0 0.0
  %1570 = vmatprep.subr.mxu0 0.0
  %1571 = vmatpush1.msra.mxu0 0.0
  %1572 = vmatprep.subr.mxu0 0.0
  %1573 = vmatpush1.msra.mxu0 0.0
  %1574 = vmatprep.subr.mxu0 0.0
  %1575 = vmatpush1.msra.mxu0 0.0
  %1576 = vmatprep.subr.mxu0 0.0
  %1577 = vmatpush1.msra.mxu0 0.0
  %1578 = vmatprep.subr.mxu0 0.0
  %1579 = vmatpush1.msra.mxu0 0.0
  %1580 = vmatprep.subr.mxu0 0.0
  %1581 = vmatpush1.msra.mxu0 0.0
  %1582 = vmatprep.subr.mxu0 0.0
  %1583 = vmatpush1.msra.mxu0 0.0
  %1584 = vmatprep.subr.mxu0 0.0
  %1585 = vmatpush1.msra.mxu0 0.0
  %1586 = vmatprep.subr.mxu0 0.0
  %1587 = vmatpush1.msra.mxu0 0.0
  %1588 = vmatprep.subr.mxu0 0.0
  %1589 = vmatpush1.msra.mxu0 0.0
  %1590 = vmatprep.subr.mxu0 0.0
  %1591 = vmatpush1.msra.mxu0 0.0
  %1592 = vmatprep.subr.mxu0 0.0
  %1593 = vmatpush1.msra.mxu0 0.0
  %1594 = vmatprep.subr.mxu0 0.0
  %1595 = vmatpush1.msra.mxu0 0.0
  %1596 = vmatprep.mubr.f32.mxu0 0.0
  %1597 = vmatmul.mubr.f32.gmra.mrb[0].mxu0 %v1530
  %v1598 = vpop.f32.mrb[0].mxu0
  %v1599 = vadd.f32 %v1109, %v1598
  %v1600 = vpop.f32.mrb[0].mxu0
  %1601 = vdwg.mxu0
  %v1602 = vadd.f32 %v1529, %v1599
  %v1603 = vxor.u32 %v1602, 2147483648
  %v1604 = vmul.f32 %v1603, 1.442695
  %v1605 = vpow.pop %v1604
  %v1606 = vadd.f32 %v1605, 1.0
  %v1607 = vrcp.pop %v1606
  %v1608 = vmul.f32 1.0, %v1607
  %1610 = vrot.lane.b32.xlu0 %v1599, 64
  %v1611 = vpop.permute.xlu0 %1610
  %v1613 = vmul.f32 %v1608, %v1611
  %1615 = vrot.lane.b32.xlu0 %v1613, 64
  %v1616 = vpop.permute.xlu0 %1615
  %v1618 = vadd.f32 %v1529, %v1616
  %v1619 = vtanh.pop %v1618
  %v1620 = vsub.f32 1.0, %v1608
  %1622 = vrot.lane.b32.xlu0 %v1619, 96
  %v1623 = vpop.permute.xlu0 %1622
  %v1625 = vmul.f32 %v1620, %v1623
  %v1626 = vmul.f32 %v1608, %v1522
  %v1627 = vadd.f32 %v1625, %v1626
  %1629 = vrot.lane.b32.xlu0 %v1627, 96
  %v1630 = vpop.permute.xlu0 %1629
  %s1632 = scalar_lea.vmem [#allocation5], 8
  %1633 = vst.msk [vmem:[%s1632] sm:$0x3] %vm367, %v1630
  %v1634 = vld [vmem:[#allocation3 + $0xa] sm:$0x3]
  %v1635 = vsel %vm66, %v1630, 0
  %1637 = vmatprep.subr.mxu0 0.0
  %1638 = vmatpush1.msra.mxu0 %v252
  %1639 = vmatprep.subr.mxu0 0.0
  %1640 = vmatpush1.msra.mxu0 %v253
  %1641 = vmatprep.subr.mxu0 0.0
  %1642 = vmatpush1.msra.mxu0 %v254
  %1643 = vmatprep.subr.mxu0 0.0
  %1644 = vmatpush1.msra.mxu0 %v255
  %1645 = vmatprep.subr.mxu0 0.0
  %1646 = vmatpush1.msra.mxu0 0.0
  %1647 = vmatprep.subr.mxu0 0.0
  %1648 = vmatpush1.msra.mxu0 0.0
  %1649 = vmatprep.subr.mxu0 0.0
  %1650 = vmatpush1.msra.mxu0 0.0
  %1651 = vmatprep.subr.mxu0 0.0
  %1652 = vmatpush1.msra.mxu0 0.0
  %1653 = vmatprep.subr.mxu0 0.0
  %1654 = vmatpush1.msra.mxu0 0.0
  %1655 = vmatprep.subr.mxu0 0.0
  %1656 = vmatpush1.msra.mxu0 0.0
  %1657 = vmatprep.subr.mxu0 0.0
  %1658 = vmatpush1.msra.mxu0 0.0
  %1659 = vmatprep.subr.mxu0 0.0
  %1660 = vmatpush1.msra.mxu0 0.0
  %1661 = vmatprep.subr.mxu0 0.0
  %1662 = vmatpush1.msra.mxu0 0.0
  %1663 = vmatprep.subr.mxu0 0.0
  %1664 = vmatpush1.msra.mxu0 0.0
  %1665 = vmatprep.subr.mxu0 0.0
  %1666 = vmatpush1.msra.mxu0 0.0
  %1667 = vmatprep.subr.mxu0 0.0
  %1668 = vmatpush1.msra.mxu0 0.0
  %1669 = vmatprep.subr.mxu0 0.0
  %1670 = vmatpush1.msra.mxu0 0.0
  %1671 = vmatprep.subr.mxu0 0.0
  %1672 = vmatpush1.msra.mxu0 0.0
  %1673 = vmatprep.subr.mxu0 0.0
  %1674 = vmatpush1.msra.mxu0 0.0
  %1675 = vmatprep.subr.mxu0 0.0
  %1676 = vmatpush1.msra.mxu0 0.0
  %1677 = vmatprep.subr.mxu0 0.0
  %1678 = vmatpush1.msra.mxu0 0.0
  %1679 = vmatprep.subr.mxu0 0.0
  %1680 = vmatpush1.msra.mxu0 0.0
  %1681 = vmatprep.subr.mxu0 0.0
  %1682 = vmatpush1.msra.mxu0 0.0
  %1683 = vmatprep.subr.mxu0 0.0
  %1684 = vmatpush1.msra.mxu0 0.0
  %1685 = vmatprep.subr.mxu0 0.0
  %1686 = vmatpush1.msra.mxu0 0.0
  %1687 = vmatprep.subr.mxu0 0.0
  %1688 = vmatpush1.msra.mxu0 0.0
  %1689 = vmatprep.subr.mxu0 0.0
  %1690 = vmatpush1.msra.mxu0 0.0
  %1691 = vmatprep.subr.mxu0 0.0
  %1692 = vmatpush1.msra.mxu0 0.0
  %1693 = vmatprep.subr.mxu0 0.0
  %1694 = vmatpush1.msra.mxu0 0.0
  %1695 = vmatprep.subr.mxu0 0.0
  %1696 = vmatpush1.msra.mxu0 0.0
  %1697 = vmatprep.subr.mxu0 0.0
  %1698 = vmatpush1.msra.mxu0 0.0
  %1699 = vmatprep.subr.mxu0 0.0
  %1700 = vmatpush1.msra.mxu0 0.0
  %1701 = vmatprep.mubr.f32.mxu0 0.0
  %1702 = vmatmul.mubr.f32.gmra.mrb[0].mxu0 %v1635
  %v1703 = vpop.f32.mrb[0].mxu0
  %v1704 = vadd.f32 %v1109, %v1703
  %v1705 = vpop.f32.mrb[0].mxu0
  %1706 = vdwg.mxu0
  %v1707 = vadd.f32 %v1634, %v1704
  %v1708 = vxor.u32 %v1707, 2147483648
  %v1709 = vmul.f32 %v1708, 1.442695
  %v1710 = vpow.pop %v1709
  %v1711 = vadd.f32 %v1710, 1.0
  %v1712 = vrcp.pop %v1711
  %v1713 = vmul.f32 1.0, %v1712
  %1715 = vrot.lane.b32.xlu0 %v1704, 64
  %v1716 = vpop.permute.xlu0 %1715
  %v1718 = vmul.f32 %v1713, %v1716
  %1720 = vrot.lane.b32.xlu0 %v1718, 64
  %v1721 = vpop.permute.xlu0 %1720
  %v1723 = vadd.f32 %v1634, %v1721
  %v1724 = vtanh.pop %v1723
  %v1725 = vsub.f32 1.0, %v1713
  %1727 = vrot.lane.b32.xlu0 %v1724, 96
  %v1728 = vpop.permute.xlu0 %1727
  %v1730 = vmul.f32 %v1725, %v1728
  %v1731 = vmul.f32 %v1713, %v1627
  %v1732 = vadd.f32 %v1730, %v1731
  %1734 = vrot.lane.b32.xlu0 %v1732, 96
  %v1735 = vpop.permute.xlu0 %1734
  %s1737 = scalar_lea.vmem [#allocation5], 10
  %1738 = vst.msk [vmem:[%s1737] sm:$0x3] %vm367, %v1735
  %v1739 = vld [vmem:[#allocation3 + $0xc] sm:$0x3]
  %v1740 = vsel %vm66, %v1735, 0
  %1742 = vmatprep.subr.mxu0 0.0
  %1743 = vmatpush1.msra.mxu0 %v252
  %1744 = vmatprep.subr.mxu0 0.0
  %1745 = vmatpush1.msra.mxu0 %v253
  %1746 = vmatprep.subr.mxu0 0.0
  %1747 = vmatpush1.msra.mxu0 %v254
  %1748 = vmatprep.subr.mxu0 0.0
  %1749 = vmatpush1.msra.mxu0 %v255
  %1750 = vmatprep.subr.mxu0 0.0
  %1751 = vmatpush1.msra.mxu0 0.0
  %1752 = vmatprep.subr.mxu0 0.0
  %1753 = vmatpush1.msra.mxu0 0.0
  %1754 = vmatprep.subr.mxu0 0.0
  %1755 = vmatpush1.msra.mxu0 0.0
  %1756 = vmatprep.subr.mxu0 0.0
  %1757 = vmatpush1.msra.mxu0 0.0
  %1758 = vmatprep.subr.mxu0 0.0
  %1759 = vmatpush1.msra.mxu0 0.0
  %1760 = vmatprep.subr.mxu0 0.0
  %1761 = vmatpush1.msra.mxu0 0.0
  %1762 = vmatprep.subr.mxu0 0.0
  %1763 = vmatpush1.msra.mxu0 0.0
  %1764 = vmatprep.subr.mxu0 0.0
  %1765 = vmatpush1.msra.mxu0 0.0
  %1766 = vmatprep.subr.mxu0 0.0
  %1767 = vmatpush1.msra.mxu0 0.0
  %1768 = vmatprep.subr.mxu0 0.0
  %1769 = vmatpush1.msra.mxu0 0.0
  %1770 = vmatprep.subr.mxu0 0.0
  %1771 = vmatpush1.msra.mxu0 0.0
  %1772 = vmatprep.subr.mxu0 0.0
  %1773 = vmatpush1.msra.mxu0 0.0
  %1774 = vmatprep.subr.mxu0 0.0
  %1775 = vmatpush1.msra.mxu0 0.0
  %1776 = vmatprep.subr.mxu0 0.0
  %1777 = vmatpush1.msra.mxu0 0.0
  %1778 = vmatprep.subr.mxu0 0.0
  %1779 = vmatpush1.msra.mxu0 0.0
  %1780 = vmatprep.subr.mxu0 0.0
  %1781 = vmatpush1.msra.mxu0 0.0
  %1782 = vmatprep.subr.mxu0 0.0
  %1783 = vmatpush1.msra.mxu0 0.0
  %1784 = vmatprep.subr.mxu0 0.0
  %1785 = vmatpush1.msra.mxu0 0.0
  %1786 = vmatprep.subr.mxu0 0.0
  %1787 = vmatpush1.msra.mxu0 0.0
  %1788 = vmatprep.subr.mxu0 0.0
  %1789 = vmatpush1.msra.mxu0 0.0
  %1790 = vmatprep.subr.mxu0 0.0
  %1791 = vmatpush1.msra.mxu0 0.0
  %1792 = vmatprep.subr.mxu0 0.0
  %1793 = vmatpush1.msra.mxu0 0.0
  %1794 = vmatprep.subr.mxu0 0.0
  %1795 = vmatpush1.msra.mxu0 0.0
  %1796 = vmatprep.subr.mxu0 0.0
  %1797 = vmatpush1.msra.mxu0 0.0
  %1798 = vmatprep.subr.mxu0 0.0
  %1799 = vmatpush1.msra.mxu0 0.0
  %1800 = vmatprep.subr.mxu0 0.0
  %1801 = vmatpush1.msra.mxu0 0.0
  %1802 = vmatprep.subr.mxu0 0.0
  %1803 = vmatpush1.msra.mxu0 0.0
  %1804 = vmatprep.subr.mxu0 0.0
  %1805 = vmatpush1.msra.mxu0 0.0
  %1806 = vmatprep.mubr.f32.mxu0 0.0
  %1807 = vmatmul.mubr.f32.gmra.mrb[0].mxu0 %v1740
  %v1808 = vpop.f32.mrb[0].mxu0
  %v1809 = vadd.f32 %v1109, %v1808
  %v1810 = vpop.f32.mrb[0].mxu0
  %1811 = vdwg.mxu0
  %v1812 = vadd.f32 %v1739, %v1809
  %v1813 = vxor.u32 %v1812, 2147483648
  %v1814 = vmul.f32 %v1813, 1.442695
  %v1815 = vpow.pop %v1814
  %v1816 = vadd.f32 %v1815, 1.0
  %v1817 = vrcp.pop %v1816
  %v1818 = vmul.f32 1.0, %v1817
  %1820 = vrot.lane.b32.xlu0 %v1809, 64
  %v1821 = vpop.permute.xlu0 %1820
  %v1823 = vmul.f32 %v1818, %v1821
  %1825 = vrot.lane.b32.xlu0 %v1823, 64
  %v1826 = vpop.permute.xlu0 %1825
  %v1828 = vadd.f32 %v1739, %v1826
  %v1829 = vtanh.pop %v1828
  %v1830 = vsub.f32 1.0, %v1818
  %1832 = vrot.lane.b32.xlu0 %v1829, 96
  %v1833 = vpop.permute.xlu0 %1832
  %v1835 = vmul.f32 %v1830, %v1833
  %v1836 = vmul.f32 %v1818, %v1732
  %v1837 = vadd.f32 %v1835, %v1836
  %1839 = vrot.lane.b32.xlu0 %v1837, 96
  %v1840 = vpop.permute.xlu0 %1839
  %s1842 = scalar_lea.vmem [#allocation5], 12
  %1843 = vst.msk [vmem:[%s1842] sm:$0x3] %vm367, %v1840
  %v1844 = vld [vmem:[#allocation3 + $0xe] sm:$0x3]
  %v1845 = vsel %vm66, %v1840, 0
  %1847 = vmatprep.subr.mxu0 0.0
  %1848 = vmatpush1.msra.mxu0 %v252
  %1849 = vmatprep.subr.mxu0 0.0
  %1850 = vmatpush1.msra.mxu0 %v253
  %1851 = vmatprep.subr.mxu0 0.0
  %1852 = vmatpush1.msra.mxu0 %v254
  %1853 = vmatprep.subr.mxu0 0.0
  %1854 = vmatpush1.msra.mxu0 %v255
  %1855 = vmatprep.subr.mxu0 0.0
  %1856 = vmatpush1.msra.mxu0 0.0
  %1857 = vmatprep.subr.mxu0 0.0
  %1858 = vmatpush1.msra.mxu0 0.0
  %1859 = vmatprep.subr.mxu0 0.0
  %1860 = vmatpush1.msra.mxu0 0.0
  %1861 = vmatprep.subr.mxu0 0.0
  %1862 = vmatpush1.msra.mxu0 0.0
  %1863 = vmatprep.subr.mxu0 0.0
  %1864 = vmatpush1.msra.mxu0 0.0
  %1865 = vmatprep.subr.mxu0 0.0
  %1866 = vmatpush1.msra.mxu0 0.0
  %1867 = vmatprep.subr.mxu0 0.0
  %1868 = vmatpush1.msra.mxu0 0.0
  %1869 = vmatprep.subr.mxu0 0.0
  %1870 = vmatpush1.msra.mxu0 0.0
  %1871 = vmatprep.subr.mxu0 0.0
  %1872 = vmatpush1.msra.mxu0 0.0
  %1873 = vmatprep.subr.mxu0 0.0
  %1874 = vmatpush1.msra.mxu0 0.0
  %1875 = vmatprep.subr.mxu0 0.0
  %1876 = vmatpush1.msra.mxu0 0.0
  %1877 = vmatprep.subr.mxu0 0.0
  %1878 = vmatpush1.msra.mxu0 0.0
  %1879 = vmatprep.subr.mxu0 0.0
  %1880 = vmatpush1.msra.mxu0 0.0
  %1881 = vmatprep.subr.mxu0 0.0
  %1882 = vmatpush1.msra.mxu0 0.0
  %1883 = vmatprep.subr.mxu0 0.0
  %1884 = vmatpush1.msra.mxu0 0.0
  %1885 = vmatprep.subr.mxu0 0.0
  %1886 = vmatpush1.msra.mxu0 0.0
  %1887 = vmatprep.subr.mxu0 0.0
  %1888 = vmatpush1.msra.mxu0 0.0
  %1889 = vmatprep.subr.mxu0 0.0
  %1890 = vmatpush1.msra.mxu0 0.0
  %1891 = vmatprep.subr.mxu0 0.0
  %1892 = vmatpush1.msra.mxu0 0.0
  %1893 = vmatprep.subr.mxu0 0.0
  %1894 = vmatpush1.msra.mxu0 0.0
  %1895 = vmatprep.subr.mxu0 0.0
  %1896 = vmatpush1.msra.mxu0 0.0
  %1897 = vmatprep.subr.mxu0 0.0
  %1898 = vmatpush1.msra.mxu0 0.0
  %1899 = vmatprep.subr.mxu0 0.0
  %1900 = vmatpush1.msra.mxu0 0.0
  %1901 = vmatprep.subr.mxu0 0.0
  %1902 = vmatpush1.msra.mxu0 0.0
  %1903 = vmatprep.subr.mxu0 0.0
  %1904 = vmatpush1.msra.mxu0 0.0
  %1905 = vmatprep.subr.mxu0 0.0
  %1906 = vmatpush1.msra.mxu0 0.0
  %1907 = vmatprep.subr.mxu0 0.0
  %1908 = vmatpush1.msra.mxu0 0.0
  %1909 = vmatprep.subr.mxu0 0.0
  %1910 = vmatpush1.msra.mxu0 0.0
  %1911 = vmatprep.mubr.f32.mxu0 0.0
  %1912 = vmatmul.mubr.f32.gmra.mrb[0].mxu0 %v1845
  %v1913 = vpop.f32.mrb[0].mxu0
  %v1914 = vadd.f32 %v1109, %v1913
  %v1915 = vpop.f32.mrb[0].mxu0
  %1916 = vdwg.mxu0
  %v1917 = vadd.f32 %v1844, %v1914
  %v1918 = vxor.u32 %v1917, 2147483648
  %v1919 = vmul.f32 %v1918, 1.442695
  %v1920 = vpow.pop %v1919
  %v1921 = vadd.f32 %v1920, 1.0
  %v1922 = vrcp.pop %v1921
  %v1923 = vmul.f32 1.0, %v1922
  %1925 = vrot.lane.b32.xlu0 %v1914, 64
  %v1926 = vpop.permute.xlu0 %1925
  %v1928 = vmul.f32 %v1923, %v1926
  %1930 = vrot.lane.b32.xlu0 %v1928, 64
  %v1931 = vpop.permute.xlu0 %1930
  %v1933 = vadd.f32 %v1844, %v1931
  %v1934 = vtanh.pop %v1933
  %v1935 = vsub.f32 1.0, %v1923
  %1937 = vrot.lane.b32.xlu0 %v1934, 96
  %v1938 = vpop.permute.xlu0 %1937
  %v1940 = vmul.f32 %v1935, %v1938
  %v1941 = vmul.f32 %v1923, %v1837
  %v1942 = vadd.f32 %v1940, %v1941
  %1944 = vrot.lane.b32.xlu0 %v1942, 96
  %v1945 = vpop.permute.xlu0 %1944
  %s1947 = scalar_lea.vmem [#allocation5], 14
  %1948 = vst.msk [vmem:[%s1947] sm:$0x3] %vm367, %v1945
  %v1949 = vld [vmem:[#allocation4] sm:$0x3]
  %v1950 = vld [vmem:[#allocation4 + $0x2] sm:$0x3]
  %v1951 = vld [vmem:[#allocation4 + $0x4] sm:$0x3]
  %v1952 = vld [vmem:[#allocation4 + $0x6] sm:$0x3]
  %v1953 = vld [vmem:[#allocation4 + $0x8] sm:$0x3]
  %v1954 = vld [vmem:[#allocation4 + $0xa] sm:$0x3]
  %v1955 = vld [vmem:[#allocation4 + $0xc] sm:$0x3]
  %v1956 = vld [vmem:[#allocation4 + $0xe] sm:$0x3]
  %v1957 = vld [vmem:[#allocation5] sm:$0x3]
  %v1958 = vld [vmem:[#allocation5 + $0x2] sm:$0x3]
  %v1959 = vld [vmem:[#allocation5 + $0x4] sm:$0x3]
  %v1960 = vld [vmem:[#allocation5 + $0x6] sm:$0x3]
  %v1961 = vld [vmem:[#allocation5 + $0x8] sm:$0x3]
  %v1962 = vld [vmem:[#allocation5 + $0xa] sm:$0x3]
  %v1963 = vld [vmem:[#allocation5 + $0xc] sm:$0x3]
  %v1964 = vld [vmem:[#allocation5 + $0xe] sm:$0x3]
  %v1965 = vld [vmem:[%s2] sm:$0x3]
  %v1966 = vld [vmem:[%s11] sm:$0xff]
  %v1967 = vld [vmem:[%s11 + $0x8] sm:$0xff]
  %v1968 = vld [vmem:[%s11 + $0x10] sm:$0xff]
  %v1969 = vld [vmem:[%s11 + $0x18] sm:$0xff]
  %v1978 = vrot.slane %v1950, 7
  %vm1979 = vcmask 1041409
  %v1980 = vsel %vm1979, %v1978, %v1949
  %v1981 = vrot.slane %v1951, 6
  %vm1982 = vcmask 1042434
  %v1983 = vsel %vm1982, %v1981, %v1980
  %v1984 = vrot.slane %v1952, 5
  %vm1985 = vcmask 1043459
  %v1986 = vsel %vm1985, %v1984, %v1983
  %v1987 = vrot.slane %v1953, 4
  %vm1988 = vcmask 1044484
  %v1989 = vsel %vm1988, %v1987, %v1986
  %v1990 = vrot.slane %v1954, 3
  %vm1991 = vcmask 1045509
  %v1992 = vsel %vm1991, %v1990, %v1989
  %v1993 = vrot.slane %v1955, 2
  %vm1994 = vcmask 1046534
  %v1995 = vsel %vm1994, %v1993, %v1992
  %v1996 = vrot.slane %v1956, 1
  %vm1997 = vcmask 1047559
  %v1998 = vsel %vm1997, %v1996, %v1995
  %v1999 = vsel %vm66, %v1998, 0
  %2001 = vmatprep.subr.mxu0 0.0
  %2002 = vmatpush1.msra.mxu0 %v1966
  %2003 = vmatprep.subr.mxu0 0.0
  %2004 = vmatpush1.msra.mxu0 %v1967
  %2005 = vmatprep.subr.mxu0 0.0
  %2006 = vmatpush1.msra.mxu0 %v1968
  %2007 = vmatprep.subr.mxu0 0.0
  %2008 = vmatpush1.msra.mxu0 %v1969
  %2009 = vmatprep.subr.mxu0 0.0
  %2010 = vmatpush1.msra.mxu0 0.0
  %2011 = vmatprep.subr.mxu0 0.0
  %2012 = vmatpush1.msra.mxu0 0.0
  %2013 = vmatprep.subr.mxu0 0.0
  %2014 = vmatpush1.msra.mxu0 0.0
  %2015 = vmatprep.subr.mxu0 0.0
  %2016 = vmatpush1.msra.mxu0 0.0
  %2017 = vmatprep.subr.mxu0 0.0
  %2018 = vmatpush1.msra.mxu0 0.0
  %2019 = vmatprep.subr.mxu0 0.0
  %2020 = vmatpush1.msra.mxu0 0.0
  %2021 = vmatprep.subr.mxu0 0.0
  %2022 = vmatpush1.msra.mxu0 0.0
  %2023 = vmatprep.subr.mxu0 0.0
  %2024 = vmatpush1.msra.mxu0 0.0
  %2025 = vmatprep.subr.mxu0 0.0
  %2026 = vmatpush1.msra.mxu0 0.0
  %2027 = vmatprep.subr.mxu0 0.0
  %2028 = vmatpush1.msra.mxu0 0.0
  %2029 = vmatprep.subr.mxu0 0.0
  %2030 = vmatpush1.msra.mxu0 0.0
  %2031 = vmatprep.subr.mxu0 0.0
  %2032 = vmatpush1.msra.mxu0 0.0
  %2033 = vmatprep.subr.mxu0 0.0
  %2034 = vmatpush1.msra.mxu0 0.0
  %2035 = vmatprep.subr.mxu0 0.0
  %2036 = vmatpush1.msra.mxu0 0.0
  %2037 = vmatprep.subr.mxu0 0.0
  %2038 = vmatpush1.msra.mxu0 0.0
  %2039 = vmatprep.subr.mxu0 0.0
  %2040 = vmatpush1.msra.mxu0 0.0
  %2041 = vmatprep.subr.mxu0 0.0
  %2042 = vmatpush1.msra.mxu0 0.0
  %2043 = vmatprep.subr.mxu0 0.0
  %2044 = vmatpush1.msra.mxu0 0.0
  %2045 = vmatprep.subr.mxu0 0.0
  %2046 = vmatpush1.msra.mxu0 0.0
  %2047 = vmatprep.subr.mxu0 0.0
  %2048 = vmatpush1.msra.mxu0 0.0
  %2049 = vmatprep.subr.mxu0 0.0
  %2050 = vmatpush1.msra.mxu0 0.0
  %2051 = vmatprep.subr.mxu0 0.0
  %2052 = vmatpush1.msra.mxu0 0.0
  %2053 = vmatprep.subr.mxu0 0.0
  %2054 = vmatpush1.msra.mxu0 0.0
  %2055 = vmatprep.subr.mxu0 0.0
  %2056 = vmatpush1.msra.mxu0 0.0
  %2057 = vmatprep.subr.mxu0 0.0
  %2058 = vmatpush1.msra.mxu0 0.0
  %2059 = vmatprep.subr.mxu0 0.0
  %2060 = vmatpush1.msra.mxu0 0.0
  %2061 = vmatprep.subr.mxu0 0.0
  %2062 = vmatpush1.msra.mxu0 0.0
  %2063 = vmatprep.subr.mxu0 0.0
  %2064 = vmatpush1.msra.mxu0 0.0
  %2065 = vmatprep.mubr.f32.mxu0 0.0
  %2066 = vmatmul.mubr.f32.gmra.mrb[0].mxu0 %v1999
  %v2067 = vpop.f32.mrb[0].mxu0
  %v2068 = vadd.f32 0.0, %v2067
  %v2069 = vpop.f32.mrb[0].mxu0
  %2070 = vdwg.mxu0
  %v2071 = vlaneseq
  %v2072 = vshrl.u32 %v2071, 7
  %v2073 = vsub.s32 0, %v2072
  %v2074 = vrot.slane %v1965, %v2073
  %v2083 = vrot.slane %v1958, 7
  %v2084 = vsel %vm1979, %v2083, %v1957
  %v2085 = vrot.slane %v1959, 6
  %v2086 = vsel %vm1982, %v2085, %v2084
  %v2087 = vrot.slane %v1960, 5
  %v2088 = vsel %vm1985, %v2087, %v2086
  %v2089 = vrot.slane %v1961, 4
  %v2090 = vsel %vm1988, %v2089, %v2088
  %v2091 = vrot.slane %v1962, 3
  %v2092 = vsel %vm1991, %v2091, %v2090
  %v2093 = vrot.slane %v1963, 2
  %v2094 = vsel %vm1994, %v2093, %v2092
  %v2095 = vrot.slane %v1964, 1
  %v2096 = vsel %vm1997, %v2095, %v2094
  %v2097 = vsel %vm66, %v2096, 0
  %v2100 = vsel %vm66, %v2068, 0
  %2102 = vmatprep.subr.mxu0 0.0
  %2103 = vmatpush1.xpose.msra.mxu0 %v2100
  %2104 = vmatprep.subr.mxu0 0.0
  %2105 = vmatpush1.xpose.msra.mxu0 0.0
  %2106 = vmatprep.subr.mxu0 0.0
  %2107 = vmatpush1.xpose.msra.mxu0 0.0
  %2108 = vmatprep.subr.mxu0 0.0
  %2109 = vmatpush1.xpose.msra.mxu0 0.0
  %2110 = vmatprep.subr.mxu0 0.0
  %2111 = vmatpush1.xpose.msra.mxu0 0.0
  %2112 = vmatprep.subr.mxu0 0.0
  %2113 = vmatpush1.xpose.msra.mxu0 0.0
  %2114 = vmatprep.subr.mxu0 0.0
  %2115 = vmatpush1.xpose.msra.mxu0 0.0
  %2116 = vmatprep.subr.mxu0 0.0
  %2117 = vmatpush1.xpose.msra.mxu0 0.0
  %2118 = vmatprep.subr.mxu0 0.0
  %2119 = vmatpush1.xpose.msra.mxu0 0.0
  %2120 = vmatprep.subr.mxu0 0.0
  %2121 = vmatpush1.xpose.msra.mxu0 0.0
  %2122 = vmatprep.subr.mxu0 0.0
  %2123 = vmatpush1.xpose.msra.mxu0 0.0
  %2124 = vmatprep.subr.mxu0 0.0
  %2125 = vmatpush1.xpose.msra.mxu0 0.0
  %2126 = vmatprep.subr.mxu0 0.0
  %2127 = vmatpush1.xpose.msra.mxu0 0.0
  %2128 = vmatprep.subr.mxu0 0.0
  %2129 = vmatpush1.xpose.msra.mxu0 0.0
  %2130 = vmatprep.subr.mxu0 0.0
  %2131 = vmatpush1.xpose.msra.mxu0 0.0
  %2132 = vmatprep.subr.mxu0 0.0
  %2133 = vmatpush1.xpose.msra.mxu0 0.0
  %2134 = vmatprep.subr.mxu0 0.0
  %2135 = vmatpush1.xpose.msra.mxu0 0.0
  %2136 = vmatprep.subr.mxu0 0.0
  %2137 = vmatpush1.xpose.msra.mxu0 0.0
  %2138 = vmatprep.subr.mxu0 0.0
  %2139 = vmatpush1.xpose.msra.mxu0 0.0
  %2140 = vmatprep.subr.mxu0 0.0
  %2141 = vmatpush1.xpose.msra.mxu0 0.0
  %2142 = vmatprep.subr.mxu0 0.0
  %2143 = vmatpush1.xpose.msra.mxu0 0.0
  %2144 = vmatprep.subr.mxu0 0.0
  %2145 = vmatpush1.xpose.msra.mxu0 0.0
  %2146 = vmatprep.subr.mxu0 0.0
  %2147 = vmatpush1.xpose.msra.mxu0 0.0
  %2148 = vmatprep.subr.mxu0 0.0
  %2149 = vmatpush1.xpose.msra.mxu0 0.0
  %2150 = vmatprep.subr.mxu0 0.0
  %2151 = vmatpush1.xpose.msra.mxu0 0.0
  %2152 = vmatprep.subr.mxu0 0.0
  %2153 = vmatpush1.xpose.msra.mxu0 0.0
  %2154 = vmatprep.subr.mxu0 0.0
  %2155 = vmatpush1.xpose.msra.mxu0 0.0
  %2156 = vmatprep.subr.mxu0 0.0
  %2157 = vmatpush1.xpose.msra.mxu0 0.0
  %2158 = vmatprep.subr.mxu0 0.0
  %2159 = vmatpush1.xpose.msra.mxu0 0.0
  %2160 = vmatprep.subr.mxu0 0.0
  %2161 = vmatpush1.xpose.msra.mxu0 0.0
  %2162 = vmatprep.subr.mxu0 0.0
  %2163 = vmatpush1.xpose.msra.mxu0 0.0
  %2164 = vmatprep.subr.mxu0 0.0
  %2165 = vmatpush1.xpose.msra.mxu0 0.0
  %2166 = vmatprep.mubr.f32.mxu0 0.0
  %2167 = vmatmul.mubr.f32.gmra.mrb[0].mxu0 %v2097
  %v2168 = vpop.f32.mrb[0].mxu0
  %v2169 = vadd.f32 %v2074, %v2168
  %v2170 = vpop.f32.mrb[0].mxu0
  %2171 = vdwg.mxu0
  %vm2172 = vcmask 64512
  %v2173 = vsel %vm2172, %v2169, -inf
  %2174 = vmax.xlane.f32.xlu0 %v2173
  %v2175 = vpop.xlane.xlu0 %2174
  %v2176 = vsub.f32 %v2169, %v2175
  %v2177 = vmul.f32 %v2176, 1.442695
  %v2178 = vpow.pop %v2177
  %v2179 = vsel %vm2172, %v2178, 0.0
  %2180 = vadd.xlane.f32.xlu0 %v2179
  %v2181 = vpop.xlane.xlu0 %2180
  %v2182 = vrcp.pop %v2181
  %v2183 = vmul.f32 %v2178, %v2182
  %v2186 = vsel %vm2172, %v2183, 0
  %2188 = vmatprep.subr.mxu0 0.0
  %2189 = vmatpush1.msra.mxu0 %v1998
  %2190 = vmatprep.subr.mxu0 0.0
  %2191 = vmatpush1.msra.mxu0 0.0
  %2192 = vmatprep.subr.mxu0 0.0
  %2193 = vmatpush1.msra.mxu0 0.0
  %2194 = vmatprep.subr.mxu0 0.0
  %2195 = vmatpush1.msra.mxu0 0.0
  %2196 = vmatprep.subr.mxu0 0.0
  %2197 = vmatpush1.msra.mxu0 0.0
  %2198 = vmatprep.subr.mxu0 0.0
  %2199 = vmatpush1.msra.mxu0 0.0
  %2200 = vmatprep.subr.mxu0 0.0
  %2201 = vmatpush1.msra.mxu0 0.0
  %2202 = vmatprep.subr.mxu0 0.0
  %2203 = vmatpush1.msra.mxu0 0.0
  %2204 = vmatprep.subr.mxu0 0.0
  %2205 = vmatpush1.msra.mxu0 0.0
  %2206 = vmatprep.subr.mxu0 0.0
  %2207 = vmatpush1.msra.mxu0 0.0
  %2208 = vmatprep.subr.mxu0 0.0
  %2209 = vmatpush1.msra.mxu0 0.0
  %2210 = vmatprep.subr.mxu0 0.0
  %2211 = vmatpush1.msra.mxu0 0.0
  %2212 = vmatprep.subr.mxu0 0.0
  %2213 = vmatpush1.msra.mxu0 0.0
  %2214 = vmatprep.subr.mxu0 0.0
  %2215 = vmatpush1.msra.mxu0 0.0
  %2216 = vmatprep.subr.mxu0 0.0
  %2217 = vmatpush1.msra.mxu0 0.0
  %2218 = vmatprep.subr.mxu0 0.0
  %2219 = vmatpush1.msra.mxu0 0.0
  %2220 = vmatprep.subr.mxu0 0.0
  %2221 = vmatpush1.msra.mxu0 0.0
  %2222 = vmatprep.subr.mxu0 0.0
  %2223 = vmatpush1.msra.mxu0 0.0
  %2224 = vmatprep.subr.mxu0 0.0
  %2225 = vmatpush1.msra.mxu0 0.0
  %2226 = vmatprep.subr.mxu0 0.0
  %2227 = vmatpush1.msra.mxu0 0.0
  %2228 = vmatprep.subr.mxu0 0.0
  %2229 = vmatpush1.msra.mxu0 0.0
  %2230 = vmatprep.subr.mxu0 0.0
  %2231 = vmatpush1.msra.mxu0 0.0
  %2232 = vmatprep.subr.mxu0 0.0
  %2233 = vmatpush1.msra.mxu0 0.0
  %2234 = vmatprep.subr.mxu0 0.0
  %2235 = vmatpush1.msra.mxu0 0.0
  %2236 = vmatprep.subr.mxu0 0.0
  %2237 = vmatpush1.msra.mxu0 0.0
  %2238 = vmatprep.subr.mxu0 0.0
  %2239 = vmatpush1.msra.mxu0 0.0
  %2240 = vmatprep.subr.mxu0 0.0
  %2241 = vmatpush1.msra.mxu0 0.0
  %2242 = vmatprep.subr.mxu0 0.0
  %2243 = vmatpush1.msra.mxu0 0.0
  %2244 = vmatprep.subr.mxu0 0.0
  %2245 = vmatpush1.msra.mxu0 0.0
  %2246 = vmatprep.subr.mxu0 0.0
  %2247 = vmatpush1.msra.mxu0 0.0
  %2248 = vmatprep.subr.mxu0 0.0
  %2249 = vmatpush1.msra.mxu0 0.0
  %2250 = vmatprep.subr.mxu0 0.0
  %2251 = vmatpush1.msra.mxu0 0.0
  %2252 = vmatprep.mubr.f32.mxu0 0.0
  %2253 = vmatmul.mubr.f32.gmra.mrb[0].mxu0 %v2186
  %v2254 = vpop.f32.mrb[0].mxu0
  %v2255 = vadd.f32 0.0, %v2254
  %v2256 = vpop.f32.mrb[0].mxu0
  %2257 = vdwg.mxu0
  %v2258 = vrot.slane %v1949, 1
  %v2259 = vsel %vm1979, %v1950, %v2258
  %v2260 = vrot.slane %v1951, 7
  %v2261 = vsel %vm1982, %v2260, %v2259
  %v2262 = vrot.slane %v1952, 6
  %v2263 = vsel %vm1985, %v2262, %v2261
  %v2264 = vrot.slane %v1953, 5
  %v2265 = vsel %vm1988, %v2264, %v2263
  %v2266 = vrot.slane %v1954, 4
  %v2267 = vsel %vm1991, %v2266, %v2265
  %v2268 = vrot.slane %v1955, 3
  %v2269 = vsel %vm1994, %v2268, %v2267
  %v2270 = vrot.slane %v1956, 2
  %v2271 = vsel %vm1997, %v2270, %v2269
  %v2272 = vsel %vm66, %v2271, 0
  %2274 = vmatprep.subr.mxu0 0.0
  %2275 = vmatpush1.msra.mxu0 %v1966
  %2276 = vmatprep.subr.mxu0 0.0
  %2277 = vmatpush1.msra.mxu0 %v1967
  %2278 = vmatprep.subr.mxu0 0.0
  %2279 = vmatpush1.msra.mxu0 %v1968
  %2280 = vmatprep.subr.mxu0 0.0
  %2281 = vmatpush1.msra.mxu0 %v1969
  %2282 = vmatprep.subr.mxu0 0.0
  %2283 = vmatpush1.msra.mxu0 0.0
  %2284 = vmatprep.subr.mxu0 0.0
  %2285 = vmatpush1.msra.mxu0 0.0
  %2286 = vmatprep.subr.mxu0 0.0
  %2287 = vmatpush1.msra.mxu0 0.0
  %2288 = vmatprep.subr.mxu0 0.0
  %2289 = vmatpush1.msra.mxu0 0.0
  %2290 = vmatprep.subr.mxu0 0.0
  %2291 = vmatpush1.msra.mxu0 0.0
  %2292 = vmatprep.subr.mxu0 0.0
  %2293 = vmatpush1.msra.mxu0 0.0
  %2294 = vmatprep.subr.mxu0 0.0
  %2295 = vmatpush1.msra.mxu0 0.0
  %2296 = vmatprep.subr.mxu0 0.0
  %2297 = vmatpush1.msra.mxu0 0.0
  %2298 = vmatprep.subr.mxu0 0.0
  %2299 = vmatpush1.msra.mxu0 0.0
  %2300 = vmatprep.subr.mxu0 0.0
  %2301 = vmatpush1.msra.mxu0 0.0
  %2302 = vmatprep.subr.mxu0 0.0
  %2303 = vmatpush1.msra.mxu0 0.0
  %2304 = vmatprep.subr.mxu0 0.0
  %2305 = vmatpush1.msra.mxu0 0.0
  %2306 = vmatprep.subr.mxu0 0.0
  %2307 = vmatpush1.msra.mxu0 0.0
  %2308 = vmatprep.subr.mxu0 0.0
  %2309 = vmatpush1.msra.mxu0 0.0
  %2310 = vmatprep.subr.mxu0 0.0
  %2311 = vmatpush1.msra.mxu0 0.0
  %2312 = vmatprep.subr.mxu0 0.0
  %2313 = vmatpush1.msra.mxu0 0.0
  %2314 = vmatprep.subr.mxu0 0.0
  %2315 = vmatpush1.msra.mxu0 0.0
  %2316 = vmatprep.subr.mxu0 0.0
  %2317 = vmatpush1.msra.mxu0 0.0
  %2318 = vmatprep.subr.mxu0 0.0
  %2319 = vmatpush1.msra.mxu0 0.0
  %2320 = vmatprep.subr.mxu0 0.0
  %2321 = vmatpush1.msra.mxu0 0.0
  %2322 = vmatprep.subr.mxu0 0.0
  %2323 = vmatpush1.msra.mxu0 0.0
  %2324 = vmatprep.subr.mxu0 0.0
  %2325 = vmatpush1.msra.mxu0 0.0
  %2326 = vmatprep.subr.mxu0 0.0
  %2327 = vmatpush1.msra.mxu0 0.0
  %2328 = vmatprep.subr.mxu0 0.0
  %2329 = vmatpush1.msra.mxu0 0.0
  %2330 = vmatprep.subr.mxu0 0.0
  %2331 = vmatpush1.msra.mxu0 0.0
  %2332 = vmatprep.subr.mxu0 0.0
  %2333 = vmatpush1.msra.mxu0 0.0
  %2334 = vmatprep.subr.mxu0 0.0
  %2335 = vmatpush1.msra.mxu0 0.0
  %2336 = vmatprep.subr.mxu0 0.0
  %2337 = vmatpush1.msra.mxu0 0.0
  %2338 = vmatprep.mubr.f32.mxu0 0.0
  %2339 = vmatmul.mubr.f32.gmra.mrb[0].mxu0 %v2272
  %v2340 = vpop.f32.mrb[0].mxu0
  %v2341 = vadd.f32 0.0, %v2340
  %v2342 = vpop.f32.mrb[0].mxu0
  %2343 = vdwg.mxu0
  %v2344 = vlaneseq
  %v2345 = vshrl.u32 %v2344, 7
  %v2346 = vsub.s32 1, %v2345
  %v2347 = vrot.slane %v1965, %v2346
  %v2348 = vrot.slane %v1957, 1
  %v2349 = vsel %vm1979, %v1958, %v2348
  %v2350 = vrot.slane %v1959, 7
  %v2351 = vsel %vm1982, %v2350, %v2349
  %v2352 = vrot.slane %v1960, 6
  %v2353 = vsel %vm1985, %v2352, %v2351
  %v2354 = vrot.slane %v1961, 5
  %v2355 = vsel %vm1988, %v2354, %v2353
  %v2356 = vrot.slane %v1962, 4
  %v2357 = vsel %vm1991, %v2356, %v2355
  %v2358 = vrot.slane %v1963, 3
  %v2359 = vsel %vm1994, %v2358, %v2357
  %v2360 = vrot.slane %v1964, 2
  %v2361 = vsel %vm1997, %v2360, %v2359
  %v2362 = vsel %vm66, %v2361, 0
  %v2365 = vsel %vm66, %v2341, 0
  %2367 = vmatprep.subr.mxu0 0.0
  %2368 = vmatpush1.xpose.msra.mxu0 %v2365
  %2369 = vmatprep.subr.mxu0 0.0
  %2370 = vmatpush1.xpose.msra.mxu0 0.0
  %2371 = vmatprep.subr.mxu0 0.0
  %2372 = vmatpush1.xpose.msra.mxu0 0.0
  %2373 = vmatprep.subr.mxu0 0.0
  %2374 = vmatpush1.xpose.msra.mxu0 0.0
  %2375 = vmatprep.subr.mxu0 0.0
  %2376 = vmatpush1.xpose.msra.mxu0 0.0
  %2377 = vmatprep.subr.mxu0 0.0
  %2378 = vmatpush1.xpose.msra.mxu0 0.0
  %2379 = vmatprep.subr.mxu0 0.0
  %2380 = vmatpush1.xpose.msra.mxu0 0.0
  %2381 = vmatprep.subr.mxu0 0.0
  %2382 = vmatpush1.xpose.msra.mxu0 0.0
  %2383 = vmatprep.subr.mxu0 0.0
  %2384 = vmatpush1.xpose.msra.mxu0 0.0
  %2385 = vmatprep.subr.mxu0 0.0
  %2386 = vmatpush1.xpose.msra.mxu0 0.0
  %2387 = vmatprep.subr.mxu0 0.0
  %2388 = vmatpush1.xpose.msra.mxu0 0.0
  %2389 = vmatprep.subr.mxu0 0.0
  %2390 = vmatpush1.xpose.msra.mxu0 0.0
  %2391 = vmatprep.subr.mxu0 0.0
  %2392 = vmatpush1.xpose.msra.mxu0 0.0
  %2393 = vmatprep.subr.mxu0 0.0
  %2394 = vmatpush1.xpose.msra.mxu0 0.0
  %2395 = vmatprep.subr.mxu0 0.0
  %2396 = vmatpush1.xpose.msra.mxu0 0.0
  %2397 = vmatprep.subr.mxu0 0.0
  %2398 = vmatpush1.xpose.msra.mxu0 0.0
  %2399 = vmatprep.subr.mxu0 0.0
  %2400 = vmatpush1.xpose.msra.mxu0 0.0
  %2401 = vmatprep.subr.mxu0 0.0
  %2402 = vmatpush1.xpose.msra.mxu0 0.0
  %2403 = vmatprep.subr.mxu0 0.0
  %2404 = vmatpush1.xpose.msra.mxu0 0.0
  %2405 = vmatprep.subr.mxu0 0.0
  %2406 = vmatpush1.xpose.msra.mxu0 0.0
  %2407 = vmatprep.subr.mxu0 0.0
  %2408 = vmatpush1.xpose.msra.mxu0 0.0
  %2409 = vmatprep.subr.mxu0 0.0
  %2410 = vmatpush1.xpose.msra.mxu0 0.0
  %2411 = vmatprep.subr.mxu0 0.0
  %2412 = vmatpush1.xpose.msra.mxu0 0.0
  %2413 = vmatprep.subr.mxu0 0.0
  %2414 = vmatpush1.xpose.msra.mxu0 0.0
  %2415 = vmatprep.subr.mxu0 0.0
  %2416 = vmatpush1.xpose.msra.mxu0 0.0
  %2417 = vmatprep.subr.mxu0 0.0
  %2418 = vmatpush1.xpose.msra.mxu0 0.0
  %2419 = vmatprep.subr.mxu0 0.0
  %2420 = vmatpush1.xpose.msra.mxu0 0.0
  %2421 = vmatprep.subr.mxu0 0.0
  %2422 = vmatpush1.xpose.msra.mxu0 0.0
  %2423 = vmatprep.subr.mxu0 0.0
  %2424 = vmatpush1.xpose.msra.mxu0 0.0
  %2425 = vmatprep.subr.mxu0 0.0
  %2426 = vmatpush1.xpose.msra.mxu0 0.0
  %2427 = vmatprep.subr.mxu0 0.0
  %2428 = vmatpush1.xpose.msra.mxu0 0.0
  %2429 = vmatprep.subr.mxu0 0.0
  %2430 = vmatpush1.xpose.msra.mxu0 0.0
  %2431 = vmatprep.mubr.f32.mxu0 0.0
  %2432 = vmatmul.mubr.f32.gmra.mrb[0].mxu0 %v2362
  %v2433 = vpop.f32.mrb[0].mxu0
  %v2434 = vadd.f32 %v2347, %v2433
  %v2435 = vpop.f32.mrb[0].mxu0
  %2436 = vdwg.mxu0
  %v2437 = vsel %vm2172, %v2434, -inf
  %2438 = vmax.xlane.f32.xlu0 %v2437
  %v2439 = vpop.xlane.xlu0 %2438
  %v2440 = vsub.f32 %v2434, %v2439
  %v2441 = vmul.f32 %v2440, 1.442695
  %v2442 = vpow.pop %v2441
  %v2443 = vsel %vm2172, %v2442, 0.0
  %2444 = vadd.xlane.f32.xlu0 %v2443
  %v2445 = vpop.xlane.xlu0 %2444
  %v2446 = vrcp.pop %v2445
  %v2447 = vmul.f32 %v2442, %v2446
  %v2450 = vsel %vm2172, %v2447, 0
  %2452 = vmatprep.subr.mxu0 0.0
  %2453 = vmatpush1.msra.mxu0 %v2271
  %2454 = vmatprep.subr.mxu0 0.0
  %2455 = vmatpush1.msra.mxu0 0.0
  %2456 = vmatprep.subr.mxu0 0.0
  %2457 = vmatpush1.msra.mxu0 0.0
  %2458 = vmatprep.subr.mxu0 0.0
  %2459 = vmatpush1.msra.mxu0 0.0
  %2460 = vmatprep.subr.mxu0 0.0
  %2461 = vmatpush1.msra.mxu0 0.0
  %2462 = vmatprep.subr.mxu0 0.0
  %2463 = vmatpush1.msra.mxu0 0.0
  %2464 = vmatprep.subr.mxu0 0.0
  %2465 = vmatpush1.msra.mxu0 0.0
  %2466 = vmatprep.subr.mxu0 0.0
  %2467 = vmatpush1.msra.mxu0 0.0
  %2468 = vmatprep.subr.mxu0 0.0
  %2469 = vmatpush1.msra.mxu0 0.0
  %2470 = vmatprep.subr.mxu0 0.0
  %2471 = vmatpush1.msra.mxu0 0.0
  %2472 = vmatprep.subr.mxu0 0.0
  %2473 = vmatpush1.msra.mxu0 0.0
  %2474 = vmatprep.subr.mxu0 0.0
  %2475 = vmatpush1.msra.mxu0 0.0
  %2476 = vmatprep.subr.mxu0 0.0
  %2477 = vmatpush1.msra.mxu0 0.0
  %2478 = vmatprep.subr.mxu0 0.0
  %2479 = vmatpush1.msra.mxu0 0.0
  %2480 = vmatprep.subr.mxu0 0.0
  %2481 = vmatpush1.msra.mxu0 0.0
  %2482 = vmatprep.subr.mxu0 0.0
  %2483 = vmatpush1.msra.mxu0 0.0
  %2484 = vmatprep.subr.mxu0 0.0
  %2485 = vmatpush1.msra.mxu0 0.0
  %2486 = vmatprep.subr.mxu0 0.0
  %2487 = vmatpush1.msra.mxu0 0.0
  %2488 = vmatprep.subr.mxu0 0.0
  %2489 = vmatpush1.msra.mxu0 0.0
  %2490 = vmatprep.subr.mxu0 0.0
  %2491 = vmatpush1.msra.mxu0 0.0
  %2492 = vmatprep.subr.mxu0 0.0
  %2493 = vmatpush1.msra.mxu0 0.0
  %2494 = vmatprep.subr.mxu0 0.0
  %2495 = vmatpush1.msra.mxu0 0.0
  %2496 = vmatprep.subr.mxu0 0.0
  %2497 = vmatpush1.msra.mxu0 0.0
  %2498 = vmatprep.subr.mxu0 0.0
  %2499 = vmatpush1.msra.mxu0 0.0
  %2500 = vmatprep.subr.mxu0 0.0
  %2501 = vmatpush1.msra.mxu0 0.0
  %2502 = vmatprep.subr.mxu0 0.0
  %2503 = vmatpush1.msra.mxu0 0.0
  %2504 = vmatprep.subr.mxu0 0.0
  %2505 = vmatpush1.msra.mxu0 0.0
  %2506 = vmatprep.subr.mxu0 0.0
  %2507 = vmatpush1.msra.mxu0 0.0
  %2508 = vmatprep.subr.mxu0 0.0
  %2509 = vmatpush1.msra.mxu0 0.0
  %2510 = vmatprep.subr.mxu0 0.0
  %2511 = vmatpush1.msra.mxu0 0.0
  %2512 = vmatprep.subr.mxu0 0.0
  %2513 = vmatpush1.msra.mxu0 0.0
  %2514 = vmatprep.subr.mxu0 0.0
  %2515 = vmatpush1.msra.mxu0 0.0
  %2516 = vmatprep.mubr.f32.mxu0 0.0
  %2517 = vmatmul.mubr.f32.gmra.mrb[0].mxu0 %v2450
  %v2518 = vpop.f32.mrb[0].mxu0
  %v2519 = vadd.f32 0.0, %v2518
  %v2520 = vpop.f32.mrb[0].mxu0
  %2521 = vdwg.mxu0
  %v2522 = vld [vmem:[%s12] sm:$0xff]
  %v2523 = vld [vmem:[%s12 + $0x8] sm:$0xff]
  %v2524 = vld [vmem:[%s12 + $0x10] sm:$0xff]
  %v2525 = vld [vmem:[%s12 + $0x18] sm:$0xff]
  %v2526 = vld [vmem:[%s13] sm:$0xff]
  %v2527 = vld [vmem:[%s13 + $0x8] sm:$0xff]
  %v2528 = vld [vmem:[%s13 + $0x10] sm:$0xff]
  %v2529 = vld [vmem:[%s13 + $0x18] sm:$0xff]
  %v2531 = vsel %vm66, %v2255, 0
  %v2534 = vsel %vm66, %v2519, 0
  %2536 = vmatprep.subr.mxu0 0.0
  %2537 = vmatpush1.msra.mxu0 %v2526
  %2538 = vmatprep.subr.mxu0 0.0
  %2539 = vmatpush1.msra.mxu0 %v2527
  %2540 = vmatprep.subr.mxu0 0.0
  %2541 = vmatpush1.msra.mxu0 %v2528
  %2542 = vmatprep.subr.mxu0 0.0
  %2543 = vmatpush1.msra.mxu0 %v2529
  %2544 = vmatprep.subr.mxu0 0.0
  %2545 = vmatpush1.msra.mxu0 0.0
  %2546 = vmatprep.subr.mxu0 0.0
  %2547 = vmatpush1.msra.mxu0 0.0
  %2548 = vmatprep.subr.mxu0 0.0
  %2549 = vmatpush1.msra.mxu0 0.0
  %2550 = vmatprep.subr.mxu0 0.0
  %2551 = vmatpush1.msra.mxu0 0.0
  %2552 = vmatprep.subr.mxu0 0.0
  %2553 = vmatpush1.msra.mxu0 0.0
  %2554 = vmatprep.subr.mxu0 0.0
  %2555 = vmatpush1.msra.mxu0 0.0
  %2556 = vmatprep.subr.mxu0 0.0
  %2557 = vmatpush1.msra.mxu0 0.0
  %2558 = vmatprep.subr.mxu0 0.0
  %2559 = vmatpush1.msra.mxu0 0.0
  %2560 = vmatprep.subr.mxu0 0.0
  %2561 = vmatpush1.msra.mxu0 0.0
  %2562 = vmatprep.subr.mxu0 0.0
  %2563 = vmatpush1.msra.mxu0 0.0
  %2564 = vmatprep.subr.mxu0 0.0
  %2565 = vmatpush1.msra.mxu0 0.0
  %2566 = vmatprep.subr.mxu0 0.0
  %2567 = vmatpush1.msra.mxu0 0.0
  %2568 = vmatprep.subr.mxu0 0.0
  %2569 = vmatpush1.msra.mxu0 0.0
  %2570 = vmatprep.subr.mxu0 0.0
  %2571 = vmatpush1.msra.mxu0 0.0
  %2572 = vmatprep.subr.mxu0 0.0
  %2573 = vmatpush1.msra.mxu0 0.0
  %2574 = vmatprep.subr.mxu0 0.0
  %2575 = vmatpush1.msra.mxu0 0.0
  %2576 = vmatprep.subr.mxu0 0.0
  %2577 = vmatpush1.msra.mxu0 0.0
  %2578 = vmatprep.subr.mxu0 0.0
  %2579 = vmatpush1.msra.mxu0 0.0
  %2580 = vmatprep.subr.mxu0 0.0
  %2581 = vmatpush1.msra.mxu0 0.0
  %2582 = vmatprep.subr.mxu0 0.0
  %2583 = vmatpush1.msra.mxu0 0.0
  %2584 = vmatprep.subr.mxu0 0.0
  %2585 = vmatpush1.msra.mxu0 0.0
  %2586 = vmatprep.subr.mxu0 0.0
  %2587 = vmatpush1.msra.mxu0 0.0
  %2588 = vmatprep.subr.mxu0 0.0
  %2589 = vmatpush1.msra.mxu0 0.0
  %2590 = vmatprep.subr.mxu0 0.0
  %2591 = vmatpush1.msra.mxu0 0.0
  %2592 = vmatprep.subr.mxu0 0.0
  %2593 = vmatpush1.msra.mxu0 0.0
  %2594 = vmatprep.subr.mxu0 0.0
  %2595 = vmatpush1.msra.mxu0 0.0
  %2596 = vmatprep.subr.mxu0 0.0
  %2597 = vmatpush1.msra.mxu0 0.0
  %2598 = vmatprep.subr.mxu0 0.0
  %2599 = vmatpush1.msra.mxu0 0.0
  %2600 = vmatprep.mubr.f32.mxu0 0.0
  %2601 = vmatmul.mubr.f32.gmra.mrb[0].mxu0 %v2531
  %v2602 = vpop.f32.mrb[0].mxu0
  %v2603 = vadd.f32 0.0, %v2602
  %v2604 = vpop.f32.mrb[0].mxu0
  %2605 = vmatprep.mubr.f32.mxu0 0.0
  %2606 = vmatmul.mubr.f32.gmra.mrb[0].mxu0 %v2534
  %v2607 = vpop.f32.mrb[0].mxu0
  %v2608 = vadd.f32 0.0, %v2607
  %v2609 = vpop.f32.mrb[0].mxu0
  %2610 = vdwg.mxu0
  %2611 = vmatprep.subr.mxu0 0.0
  %2612 = vmatpush1.msra.mxu0 %v2522
  %2613 = vmatprep.subr.mxu0 0.0
  %2614 = vmatpush1.msra.mxu0 %v2523
  %2615 = vmatprep.subr.mxu0 0.0
  %2616 = vmatpush1.msra.mxu0 %v2524
  %2617 = vmatprep.subr.mxu0 0.0
  %2618 = vmatpush1.msra.mxu0 %v2525
  %2619 = vmatprep.subr.mxu0 0.0
  %2620 = vmatpush1.msra.mxu0 0.0
  %2621 = vmatprep.subr.mxu0 0.0
  %2622 = vmatpush1.msra.mxu0 0.0
  %2623 = vmatprep.subr.mxu0 0.0
  %2624 = vmatpush1.msra.mxu0 0.0
  %2625 = vmatprep.subr.mxu0 0.0
  %2626 = vmatpush1.msra.mxu0 0.0
  %2627 = vmatprep.subr.mxu0 0.0
  %2628 = vmatpush1.msra.mxu0 0.0
  %2629 = vmatprep.subr.mxu0 0.0
  %2630 = vmatpush1.msra.mxu0 0.0
  %2631 = vmatprep.subr.mxu0 0.0
  %2632 = vmatpush1.msra.mxu0 0.0
  %2633 = vmatprep.subr.mxu0 0.0
  %2634 = vmatpush1.msra.mxu0 0.0
  %2635 = vmatprep.subr.mxu0 0.0
  %2636 = vmatpush1.msra.mxu0 0.0
  %2637 = vmatprep.subr.mxu0 0.0
  %2638 = vmatpush1.msra.mxu0 0.0
  %2639 = vmatprep.subr.mxu0 0.0
  %2640 = vmatpush1.msra.mxu0 0.0
  %2641 = vmatprep.subr.mxu0 0.0
  %2642 = vmatpush1.msra.mxu0 0.0
  %2643 = vmatprep.subr.mxu0 0.0
  %2644 = vmatpush1.msra.mxu0 0.0
  %2645 = vmatprep.subr.mxu0 0.0
  %2646 = vmatpush1.msra.mxu0 0.0
  %2647 = vmatprep.subr.mxu0 0.0
  %2648 = vmatpush1.msra.mxu0 0.0
  %2649 = vmatprep.subr.mxu0 0.0
  %2650 = vmatpush1.msra.mxu0 0.0
  %2651 = vmatprep.subr.mxu0 0.0
  %2652 = vmatpush1.msra.mxu0 0.0
  %2653 = vmatprep.subr.mxu0 0.0
  %2654 = vmatpush1.msra.mxu0 0.0
  %2655 = vmatprep.subr.mxu0 0.0
  %2656 = vmatpush1.msra.mxu0 0.0
  %2657 = vmatprep.subr.mxu0 0.0
  %2658 = vmatpush1.msra.mxu0 0.0
  %2659 = vmatprep.subr.mxu0 0.0
  %2660 = vmatpush1.msra.mxu0 0.0
  %2661 = vmatprep.subr.mxu0 0.0
  %2662 = vmatpush1.msra.mxu0 0.0
  %2663 = vmatprep.subr.mxu0 0.0
  %2664 = vmatpush1.msra.mxu0 0.0
  %2665 = vmatprep.subr.mxu0 0.0
  %2666 = vmatpush1.msra.mxu0 0.0
  %2667 = vmatprep.subr.mxu0 0.0
  %2668 = vmatpush1.msra.mxu0 0.0
  %2669 = vmatprep.subr.mxu0 0.0
  %2670 = vmatpush1.msra.mxu0 0.0
  %2671 = vmatprep.subr.mxu0 0.0
  %2672 = vmatpush1.msra.mxu0 0.0
  %2673 = vmatprep.subr.mxu0 0.0
  %2674 = vmatpush1.msra.mxu0 0.0
  %2675 = vmatprep.mubr.f32.mxu0 0.0
  %2676 = vmatmul.mubr.f32.gmra.mrb[0].mxu0 %v2097
  %v2677 = vpop.f32.mrb[0].mxu0
  %v2678 = vadd.f32 %v2603, %v2677
  %v2679 = vpop.f32.mrb[0].mxu0
  %2680 = vmatprep.mubr.f32.mxu0 0.0
  %2681 = vmatmul.mubr.f32.gmra.mrb[0].mxu0 %v2362
  %v2682 = vpop.f32.mrb[0].mxu0
  %v2683 = vadd.f32 %v2608, %v2682
  %v2684 = vpop.f32.mrb[0].mxu0
  %2685 = vdwg.mxu0
  %v2686 = vtanh.pop %v2678
  %v2687 = vtanh.pop %v2683
  %v2688 = vld [vmem:[%s14] sm:$0xff]
  %v2689 = vld [vmem:[%s14 + $0x8] sm:$0xff]
  %v2690 = vld [vmem:[%s14 + $0x10] sm:$0xff]
  %v2691 = vld [vmem:[%s14 + $0x18] sm:$0xff]
  %v2692 = vld [vmem:[%s15] sm:$0x1]
  %v2694 = vlaneseq
  %v2695 = vshrl.u32 %v2694, 7
  %v2696 = vsub.s32 0, %v2695
  %v2697 = vrot.slane %v2692, %v2696
  %v2700 = vsel %vm66, %v2686, 0
  %v2703 = vsel %vm66, %v2687, 0
  %2705 = vmatprep.subr.mxu0 0.0
  %2706 = vmatpush1.msra.mxu0 %v2688
  %2707 = vmatprep.subr.mxu0 0.0
  %2708 = vmatpush1.msra.mxu0 %v2689
  %2709 = vmatprep.subr.mxu0 0.0
  %2710 = vmatpush1.msra.mxu0 %v2690
  %2711 = vmatprep.subr.mxu0 0.0
  %2712 = vmatpush1.msra.mxu0 %v2691
  %2713 = vmatprep.subr.mxu0 0.0
  %2714 = vmatpush1.msra.mxu0 0.0
  %2715 = vmatprep.subr.mxu0 0.0
  %2716 = vmatpush1.msra.mxu0 0.0
  %2717 = vmatprep.subr.mxu0 0.0
  %2718 = vmatpush1.msra.mxu0 0.0
  %2719 = vmatprep.subr.mxu0 0.0
  %2720 = vmatpush1.msra.mxu0 0.0
  %2721 = vmatprep.subr.mxu0 0.0
  %2722 = vmatpush1.msra.mxu0 0.0
  %2723 = vmatprep.subr.mxu0 0.0
  %2724 = vmatpush1.msra.mxu0 0.0
  %2725 = vmatprep.subr.mxu0 0.0
  %2726 = vmatpush1.msra.mxu0 0.0
  %2727 = vmatprep.subr.mxu0 0.0
  %2728 = vmatpush1.msra.mxu0 0.0
  %2729 = vmatprep.subr.mxu0 0.0
  %2730 = vmatpush1.msra.mxu0 0.0
  %2731 = vmatprep.subr.mxu0 0.0
  %2732 = vmatpush1.msra.mxu0 0.0
  %2733 = vmatprep.subr.mxu0 0.0
  %2734 = vmatpush1.msra.mxu0 0.0
  %2735 = vmatprep.subr.mxu0 0.0
  %2736 = vmatpush1.msra.mxu0 0.0
  %2737 = vmatprep.subr.mxu0 0.0
  %2738 = vmatpush1.msra.mxu0 0.0
  %2739 = vmatprep.subr.mxu0 0.0
  %2740 = vmatpush1.msra.mxu0 0.0
  %2741 = vmatprep.subr.mxu0 0.0
  %2742 = vmatpush1.msra.mxu0 0.0
  %2743 = vmatprep.subr.mxu0 0.0
  %2744 = vmatpush1.msra.mxu0 0.0
  %2745 = vmatprep.subr.mxu0 0.0
  %2746 = vmatpush1.msra.mxu0 0.0
  %2747 = vmatprep.subr.mxu0 0.0
  %2748 = vmatpush1.msra.mxu0 0.0
  %2749 = vmatprep.subr.mxu0 0.0
  %2750 = vmatpush1.msra.mxu0 0.0
  %2751 = vmatprep.subr.mxu0 0.0
  %2752 = vmatpush1.msra.mxu0 0.0
  %2753 = vmatprep.subr.mxu0 0.0
  %2754 = vmatpush1.msra.mxu0 0.0
  %2755 = vmatprep.subr.mxu0 0.0
  %2756 = vmatpush1.msra.mxu0 0.0
  %2757 = vmatprep.subr.mxu0 0.0
  %2758 = vmatpush1.msra.mxu0 0.0
  %2759 = vmatprep.subr.mxu0 0.0
  %2760 = vmatpush1.msra.mxu0 0.0
  %2761 = vmatprep.subr.mxu0 0.0
  %2762 = vmatpush1.msra.mxu0 0.0
  %2763 = vmatprep.subr.mxu0 0.0
  %2764 = vmatpush1.msra.mxu0 0.0
  %2765 = vmatprep.subr.mxu0 0.0
  %2766 = vmatpush1.msra.mxu0 0.0
  %2767 = vmatprep.subr.mxu0 0.0
  %2768 = vmatpush1.msra.mxu0 0.0
  %2769 = vmatprep.mubr.f32.mxu0 0.0
  %2770 = vmatmul.mubr.f32.gmra.mrb[0].mxu0 %v2700
  %v2771 = vpop.f32.mrb[0].mxu0
  %v2772 = vadd.f32 %v2697, %v2771
  %v2773 = vpop.f32.mrb[0].mxu0
  %2774 = vmatprep.mubr.f32.mxu0 0.0
  %2775 = vmatmul.mubr.f32.gmra.mrb[0].mxu0 %v2703
  %v2776 = vpop.f32.mrb[0].mxu0
  %v2777 = vadd.f32 %v2697, %v2776
  %v2778 = vpop.f32.mrb[0].mxu0
  %2779 = vdwg.mxu0
  %2780 = vst [vmem:[%s16] sm:$0xff] %v2772
  %2781 = vst [vmem:[%s16 + $0x8] sm:$0xff] %v2777
  // Predicated region
  $region66: #{model_forward.1} parent=0 // pred_check
    _
  $region67: #{model_forward.1} parent=0 // pred_check_branch
    %2783 = sbr.rel (0) target = $region69
  $region68: #{model_forward.1} parent=0 // pred_region
    _
  $region69: #{model_forward.1} parent=0 // pred_fallthru
    _
  // Predicated region
  $region70: #{model_forward.1} parent=0 // pred_check
    _
  $region71: #{model_forward.1} parent=0 // pred_check_branch
    %2785 = sbr.rel (0) target = $region73
  $region72: #{model_forward.1} parent=0 // pred_region
    _
  $region73: #{model_forward.1} parent=0 // pred_fallthru
    _

</llo_original>
